<compile_context>
chip_gen: v5e
topology: v5e:2x2
jax: 0.10.0
libtpu: 0.0.40
codegen_flags: <defaults>
</compile_context>

<pallas_src>
import functools
import math

import jax
import jax.numpy as jnp
from jax.experimental import pallas as pl
from jax.experimental.pallas import tpu as pltpu

_BF16 = jnp.bfloat16


# ----------------------------- in-kernel helpers -----------------------------

def _gelu_tanh(x):
    # TODO(synk): HF BERT default is erf-GELU; using tanh approximation
    # (erf has no direct Mosaic lowering).  ~1e-3 relative divergence.
    return 0.5 * x * (1.0 + jnp.tanh(0.7978845608028654 * (x + 0.044715 * x * x * x)))


def _layernorm(h, g, b, eps):
    mu = jnp.mean(h, axis=-1, keepdims=True)
    d = h - mu
    var = jnp.mean(d * d, axis=-1, keepdims=True)
    inv = jax.lax.rsqrt(var + eps)
    return d * inv * g + b


# ----------------------- fully fused forward-pass kernel ---------------------

def _cloud_fwd_kernel(x_ref, mask_ref, emb_g_ref, emb_b_ref,
                      wqkv_ref, bqkv_ref, wo_ref, bo_ref, ln1g_ref, ln1b_ref,
                      wi_ref, bi_ref, wo2_ref, bo2_ref, ln2g_ref, ln2b_ref,
                      regw_ref, regb_ref, outw_ref, outb_ref,
                      o_ref, attn_scratch,
                      *, B, S, nH, dh, L, n_reg, scale, eps):
    H = nH * dh

    # ---- embedding LayerNorm (prologue, fused) ----
    x = _layernorm(x_ref[...], emb_g_ref[...], emb_b_ref[...], eps)

    # ---- per-batch additive mask, broadcast to (S,S) once and reused for all
    #      layers and heads (JAX does not CSE broadcast_in_dim) ----
    masks = [jnp.broadcast_to(mask_ref[b:b + 1, :], (S, S)) for b in range(B)]

    # ---- encoder layers (statically unrolled, L is tiny) ----
    for l in range(L):
        x_bf = x.astype(_BF16)

        # Fused QKV projection: one (M,H) x (H,3H) bf16 matmul, fp32 accumulation.
        qkv = jnp.dot(x_bf, wqkv_ref[l], preferred_element_type=jnp.float32) + bqkv_ref[l]
        q = qkv[:, 0 * H:1 * H]
        k = qkv[:, 1 * H:2 * H]
        v = qkv[:, 2 * H:3 * H]
        wo = wo_ref[l]                                   # (H, H) bf16

        # Attention: per (batch, head), fold the head context directly into the
        # output projection (no lane-axis concat), accumulate over heads, and
        # write the per-batch (S,H) result straight into a VMEM scratch.
        for b in range(B):
            m_b = masks[b]
            r0, r1 = b * S, (b + 1) * S
            acc_b = None
            for h in range(nH):
                lo, hi = h * dh, (h + 1) * dh
                qb = q[r0:r1, lo:hi]                     # (S, dh)
                kb = k[r0:r1, lo:hi]
                vb = v[r0:r1, lo:hi]
                s = jax.lax.dot_general(
                    qb.astype(_BF16), kb.astype(_BF16),
                    (((1,), (1,)), ((), ())),
                    preferred_element_type=jnp.float32) * scale + m_b    # (S, S)
                s = s - jnp.max(s, axis=-1, keepdims=True)
                p = jnp.exp(s)                                           # fp32 softmax
                p = p / jnp.sum(p, axis=-1, keepdims=True)               # exact divide
                ctx_bh = jnp.dot(p.astype(_BF16), vb.astype(_BF16),
                                 preferred_element_type=jnp.float32)     # (S, dh)
                contrib = jnp.dot(ctx_bh.astype(_BF16), wo[lo:hi, :],
                                  preferred_element_type=jnp.float32)    # (S, H)
                acc_b = contrib if acc_b is None else acc_b + contrib
            attn_scratch[r0:r1, :] = acc_b

        # Output-projection bias + residual + LayerNorm epilogue.
        attn = attn_scratch[...] + bo_ref[l]
        h1 = _layernorm(attn + x, ln1g_ref[l], ln1b_ref[l], eps)

        # FFN: gelu(h1 @ wi + bi) @ wo2 + bo2, fused residual + LayerNorm.
        ff = jnp.dot(h1.astype(_BF16), wi_ref[l],
                     preferred_element_type=jnp.float32) + bi_ref[l]
        ff = _gelu_tanh(ff)
        ff2 = jnp.dot(ff.astype(_BF16), wo2_ref[l],
                      preferred_element_type=jnp.float32) + bo2_ref[l]
        x = _layernorm(ff2 + h1, ln2g_ref[l], ln2b_ref[l], eps)

    # ---- CLS rows -> regressor (fused epilogue) ----
    cls = jnp.concatenate([x[b * S:b * S + 1, :] for b in range(B)], axis=0)  # (B, H)
    h = cls
    for r in range(n_reg):
        h = jnp.dot(h.astype(_BF16), regw_ref[r],
                    preferred_element_type=jnp.float32) + regb_ref[r]
        h = h * jax.nn.sigmoid(h)                        # SiLU in fp32
    # Final (H -> 1) projection as a lane reduction (avoids an N=1 MXU matmul).
    y = jnp.sum(h * outw_ref[...], axis=-1, keepdims=True) + outb_ref[...]
    o_ref[...] = y


def cloud_forward(fp, input_ids, attention_mask, *, num_heads):
    B, S = input_ids.shape
    H = fp["word_emb"].shape[1]
    dh = H // num_heads
    M = B * S
    L = fp["wqkv"].shape[0]
    n_reg = fp["reg_w"].shape[0]

    # ---- BERT embeddings (gather stays in JAX glue) ----
    x = (fp["word_emb"][input_ids]
         + fp["pos_emb"][:S][None, :, :]
         + fp["tok_type_emb"][0][None, None, :])
    x = x.reshape(M, H).astype(jnp.float32)

    # extended additive attention mask, HF-style
    addmask = (1.0 - attention_mask.astype(jnp.float32)) * -10000.0      # (B, S)

    kernel = functools.partial(
        _cloud_fwd_kernel, B=B, S=S, nH=num_heads, dh=dh, L=L, n_reg=n_reg,
        scale=1.0 / math.sqrt(dh), eps=1e-12)

    # One grid-less pallas_call for the whole forward pass: all weights (<1 MB bf16)
    # and all activations live in VMEM as whole-array blocks.
    return pl.pallas_call(
        kernel,
        out_shape=jax.ShapeDtypeStruct((B, 1), jnp.float32),
        scratch_shapes=[pltpu.VMEM((M, H), jnp.float32)],
    )(x, addmask, fp["emb_ln_g"], fp["emb_ln_b"],
      fp["wqkv"], fp["bqkv"], fp["wo"], fp["bo"], fp["ln1_g"], fp["ln1_b"],
      fp["wi"], fp["bi"], fp["wo2"], fp["bo2"], fp["ln2_g"], fp["ln2_b"],
      fp["reg_w"], fp["reg_b"], fp["reg_out_w"], fp["reg_out_b"])


# ----------------------------- Model / params --------------------------------

CONFIG = dict(
    num_attention_heads=2,          # hidden = 2*64 = 128
    num_hidden_layers=2,
    max_position_embeddings=32,
    hidden_dropout_prob=0.1,        # identity in eval
    attention_probs_dropout_prob=0.1,
    dropout=0.1,                    # regressor dropout, identity in eval
    num_layers=2,                   # regressor hidden Linear+SiLU layers
    vocab_size=64,
)


def init_params(key, cfg):
    """Separate-weight parameterisation mirroring the PyTorch module."""
    H = cfg["num_attention_heads"] * 64
    I = H * 4
    V = cfg["vocab_size"]
    keys = iter(jax.random.split(key, 256))

    def nrm(shape):
        return 0.02 * jax.random.normal(next(keys), shape, jnp.float32)

    params = dict(
        word_emb=nrm((V, H)),
        pos_emb=nrm((cfg["max_position_embeddings"], H)),
        tok_type_emb=nrm((1, H)),
        emb_ln_g=jnp.ones((1, H), jnp.float32),
        emb_ln_b=jnp.zeros((1, H), jnp.float32),
        layers=[],
    )
    for _ in range(cfg["num_hidden_layers"]):
        params["layers"].append(dict(
            wq=nrm((H, H)), bq=jnp.zeros((H,), jnp.float32),
            wk=nrm((H, H)), bk=jnp.zeros((H,), jnp.float32),
            wv=nrm((H, H)), bv=jnp.zeros((H,), jnp.float32),
            wo=nrm((H, H)), bo=jnp.zeros((H,), jnp.float32),
            ln1_g=jnp.ones((1, H), jnp.float32), ln1_b=jnp.zeros((1, H), jnp.float32),
            wi=nrm((H, I)), bi=jnp.zeros((I,), jnp.float32),
            wo2=nrm((I, H)), bo2=jnp.zeros((H,), jnp.float32),
            ln2_g=jnp.ones((1, H), jnp.float32), ln2_b=jnp.zeros((1, H), jnp.float32),
        ))
    params["reg_hidden"] = [
        (nrm((H, H)), jnp.zeros((H,), jnp.float32)) for _ in range(cfg["num_layers"])
    ]
    params["reg_out_w"] = nrm((H, 1))
    params["reg_out_b"] = jnp.zeros((1,), jnp.float32)
    return params


def prepare_fused_params(params):
    """One-time prep: merge QKV, stack per-layer params, cast matmul weights to bf16."""
    H = params["word_emb"].shape[1]
    layers = params["layers"]

    def stack(fn):
        return jnp.stack([fn(lp) for lp in layers], axis=0)

    fp = dict(
        word_emb=params["word_emb"],
        pos_emb=params["pos_emb"],
        tok_type_emb=params["tok_type_emb"],
        emb_ln_g=params["emb_ln_g"],
        emb_ln_b=params["emb_ln_b"],
        # stacked across layers: (L, H, 3H) bf16, (L, 1, 3H) f32, ...
        wqkv=stack(lambda lp: jnp.concatenate([lp["wq"], lp["wk"], lp["wv"]],
                                              axis=1)).astype(_BF16),
        bqkv=stack(lambda lp: jnp.concatenate([lp["bq"], lp["bk"], lp["bv"]]
                                              ).reshape(1, 3 * H)),
        wo=stack(lambda lp: lp["wo"]).astype(_BF16),
        bo=stack(lambda lp: lp["bo"].reshape(1, H)),
        ln1_g=stack(lambda lp: lp["ln1_g"]),
        ln1_b=stack(lambda lp: lp["ln1_b"]),
        wi=stack(lambda lp: lp["wi"]).astype(_BF16),
        bi=stack(lambda lp: lp["bi"].reshape(1, -1)),
        wo2=stack(lambda lp: lp["wo2"]).astype(_BF16),
        bo2=stack(lambda lp: lp["bo2"].reshape(1, H)),
        ln2_g=stack(lambda lp: lp["ln2_g"]),
        ln2_b=stack(lambda lp: lp["ln2_b"]),
        reg_w=jnp.stack([w for w, _ in params["reg_hidden"]], axis=0).astype(_BF16),
        reg_b=jnp.stack([b.reshape(1, H) for _, b in params["reg_hidden"]], axis=0),
        reg_out_w=params["reg_out_w"].reshape(1, H),      # row for lane reduction
        reg_out_b=params["reg_out_b"].reshape(1, 1),
    )
    return fp


# ----------------------------- Main -------------------------------------------

if __name__ == "__main__":
    cfg = CONFIG
    key = jax.random.PRNGKey(0)
    k_param, k_ids = jax.random.split(key)

    params = init_params(k_param, cfg)
    fused = prepare_fused_params(params)

    B, S = 2, 8
    input_ids = jax.random.randint(k_ids, (B, S), 0, cfg["vocab_size"], jnp.int32)
    attention_mask = jnp.ones((B, S), jnp.int32).at[1, S - 2:].set(0)  # pad tail of batch 1

    fwd = jax.jit(functools.partial(cloud_forward, num_heads=cfg["num_attention_heads"]))
    out = fwd(fused, input_ids, attention_mask)
    out = jax.block_until_ready(out)

    assert out.shape == (B, 1), out.shape
    assert out.dtype == jnp.float32
    assert bool(jnp.all(jnp.isfinite(out)))
    print("KERNEL_OK")
</pallas_src>

<mosaic_0001>
module attributes {stable_mosaic.version = 11 : i64} {
  func.func @_cloud_fwd_kernel(%arg0: memref<16x128xf32, #tpu.memory_space<vmem>>, %arg1: memref<2x8xf32, #tpu.memory_space<vmem>>, %arg2: memref<1x128xf32, #tpu.memory_space<vmem>>, %arg3: memref<1x128xf32, #tpu.memory_space<vmem>>, %arg4: memref<2x128x384xbf16, #tpu.memory_space<vmem>>, %arg5: memref<2x1x384xf32, #tpu.memory_space<vmem>>, %arg6: memref<2x128x128xbf16, #tpu.memory_space<vmem>>, %arg7: memref<2x1x128xf32, #tpu.memory_space<vmem>>, %arg8: memref<2x1x128xf32, #tpu.memory_space<vmem>>, %arg9: memref<2x1x128xf32, #tpu.memory_space<vmem>>, %arg10: memref<2x128x512xbf16, #tpu.memory_space<vmem>>, %arg11: memref<2x1x512xf32, #tpu.memory_space<vmem>>, %arg12: memref<2x512x128xbf16, #tpu.memory_space<vmem>>, %arg13: memref<2x1x128xf32, #tpu.memory_space<vmem>>, %arg14: memref<2x1x128xf32, #tpu.memory_space<vmem>>, %arg15: memref<2x1x128xf32, #tpu.memory_space<vmem>>, %arg16: memref<2x128x128xbf16, #tpu.memory_space<vmem>>, %arg17: memref<2x1x128xf32, #tpu.memory_space<vmem>>, %arg18: memref<1x128xf32, #tpu.memory_space<vmem>>, %arg19: memref<1x1xf32, #tpu.memory_space<vmem>>, %arg20: memref<2x1xf32, #tpu.memory_space<vmem>>, %arg21: memref<16x128xf32, #tpu.memory_space<vmem>>) attributes {dimension_semantics = [], scalar_prefetch = 0 : i64, scratch_operands = 1 : i64, tpu.core_type = #tpu.core_type<tc>} {
    %c0 = arith.constant 0 : index
    %c0_0 = arith.constant 0 : index
    %0 = vector.load %arg0[%c0, %c0_0] : memref<16x128xf32, #tpu.memory_space<vmem>>, vector<16x128xf32>
    %c0_1 = arith.constant 0 : index
    %c0_2 = arith.constant 0 : index
    %1 = vector.load %arg2[%c0_1, %c0_2] : memref<1x128xf32, #tpu.memory_space<vmem>>, vector<1x128xf32>
    %c0_3 = arith.constant 0 : index
    %c0_4 = arith.constant 0 : index
    %2 = vector.load %arg3[%c0_3, %c0_4] : memref<1x128xf32, #tpu.memory_space<vmem>>, vector<1x128xf32>
    %cst = arith.constant dense<0.000000e+00> : vector<16xf32>
    %3 = vector.multi_reduction <add>, %0, %cst [1] : vector<16x128xf32> to vector<16xf32>
    %4 = vector.shape_cast %3 : vector<16xf32> to vector<16x1xf32>
    %cst_5 = arith.constant 1.280000e+02 : f32
    %5 = vector.broadcast %cst_5 : f32 to vector<16x1xf32>
    %6 = arith.divf %4, %5 : vector<16x1xf32>
    %7 = vector.broadcast %6 : vector<16x1xf32> to vector<16x128xf32>
    %8 = arith.subf %0, %7 : vector<16x128xf32>
    %9 = arith.mulf %8, %8 : vector<16x128xf32>
    %cst_6 = arith.constant dense<0.000000e+00> : vector<16xf32>
    %10 = vector.multi_reduction <add>, %9, %cst_6 [1] : vector<16x128xf32> to vector<16xf32>
    %11 = vector.shape_cast %10 : vector<16xf32> to vector<16x1xf32>
    %cst_7 = arith.constant 1.280000e+02 : f32
    %12 = vector.broadcast %cst_7 : f32 to vector<16x1xf32>
    %13 = arith.divf %11, %12 : vector<16x1xf32>
    %cst_8 = arith.constant 9.99999996E-13 : f32
    %14 = vector.broadcast %cst_8 : f32 to vector<16x1xf32>
    %15 = arith.addf %13, %14 : vector<16x1xf32>
    %16 = math.rsqrt %15 : vector<16x1xf32>
    %17 = vector.broadcast %16 : vector<16x1xf32> to vector<16x128xf32>
    %18 = arith.mulf %8, %17 : vector<16x128xf32>
    %19 = vector.broadcast %1 : vector<1x128xf32> to vector<16x128xf32>
    %20 = arith.mulf %18, %19 : vector<16x128xf32>
    %21 = vector.broadcast %2 : vector<1x128xf32> to vector<16x128xf32>
    %22 = arith.addf %20, %21 : vector<16x128xf32>
    %c0_9 = arith.constant 0 : index
    %c0_10 = arith.constant 0 : index
    %23 = vector.load %arg1[%c0_9, %c0_10] : memref<2x8xf32, #tpu.memory_space<vmem>>, vector<1x8xf32>
    %24 = vector.shape_cast %23 : vector<1x8xf32> to vector<1x8xf32>
    %25 = vector.broadcast %24 : vector<1x8xf32> to vector<8x8xf32>
    %c1 = arith.constant 1 : index
    %c0_11 = arith.constant 0 : index
    %26 = vector.load %arg1[%c1, %c0_11] : memref<2x8xf32, #tpu.memory_space<vmem>>, vector<1x8xf32>
    %27 = vector.shape_cast %26 : vector<1x8xf32> to vector<1x8xf32>
    %28 = vector.broadcast %27 : vector<1x8xf32> to vector<8x8xf32>
    %29 = arith.truncf %22 : vector<16x128xf32> to vector<16x128xbf16>
    %c0_12 = arith.constant 0 : index
    %c0_13 = arith.constant 0 : index
    %c0_14 = arith.constant 0 : index
    %30 = vector.load %arg4[%c0_12, %c0_13, %c0_14] : memref<2x128x384xbf16, #tpu.memory_space<vmem>>, vector<1x128x384xbf16>
    %31 = vector.shape_cast %30 : vector<1x128x384xbf16> to vector<128x384xbf16>
    %cst_15 = arith.constant dense<0.000000e+00> : vector<16x384xf32>
    %32 = tpu.matmul %29, %31, %cst_15 {dimension_numbers = #tpu.dot_dimension_numbers<[1], [0], [0], [1], [0, 0, 1, 1], [], []>} : vector<16x128xbf16>, vector<128x384xbf16>, vector<16x384xf32> -> vector<16x384xf32>
    %c0_16 = arith.constant 0 : index
    %c0_17 = arith.constant 0 : index
    %c0_18 = arith.constant 0 : index
    %33 = vector.load %arg5[%c0_16, %c0_17, %c0_18] : memref<2x1x384xf32, #tpu.memory_space<vmem>>, vector<1x1x384xf32>
    %34 = vector.shape_cast %33 : vector<1x1x384xf32> to vector<1x384xf32>
    %35 = vector.broadcast %34 : vector<1x384xf32> to vector<16x384xf32>
    %36 = arith.addf %32, %35 : vector<16x384xf32>
    %37 = vector.extract_strided_slice %36 {offsets = [0, 0], sizes = [16, 128], strides = [1, 1]} : vector<16x384xf32> to vector<16x128xf32>
    %38 = vector.extract_strided_slice %36 {offsets = [0, 128], sizes = [16, 128], strides = [1, 1]} : vector<16x384xf32> to vector<16x128xf32>
    %39 = vector.extract_strided_slice %36 {offsets = [0, 256], sizes = [16, 128], strides = [1, 1]} : vector<16x384xf32> to vector<16x128xf32>
    %c0_19 = arith.constant 0 : index
    %c0_20 = arith.constant 0 : index
    %c0_21 = arith.constant 0 : index
    %40 = vector.load %arg6[%c0_19, %c0_20, %c0_21] : memref<2x128x128xbf16, #tpu.memory_space<vmem>>, vector<1x128x128xbf16>
    %41 = vector.shape_cast %40 : vector<1x128x128xbf16> to vector<128x128xbf16>
    %42 = vector.extract_strided_slice %37 {offsets = [0, 0], sizes = [8, 64], strides = [1, 1]} : vector<16x128xf32> to vector<8x64xf32>
    %43 = vector.extract_strided_slice %38 {offsets = [0, 0], sizes = [8, 64], strides = [1, 1]} : vector<16x128xf32> to vector<8x64xf32>
    %44 = vector.extract_strided_slice %39 {offsets = [0, 0], sizes = [8, 64], strides = [1, 1]} : vector<16x128xf32> to vector<8x64xf32>
    %45 = arith.truncf %42 : vector<8x64xf32> to vector<8x64xbf16>
    %46 = arith.truncf %43 : vector<8x64xf32> to vector<8x64xbf16>
    %cst_22 = arith.constant dense<0.000000e+00> : vector<8x8xf32>
    %47 = tpu.matmul %45, %46, %cst_22 {dimension_numbers = #tpu.dot_dimension_numbers<[1], [1], [0], [0], [0, 0, 1, 0], [], []>} : vector<8x64xbf16>, vector<8x64xbf16>, vector<8x8xf32> -> vector<8x8xf32>
    %cst_23 = arith.constant 1.250000e-01 : f32
    %48 = vector.broadcast %cst_23 : f32 to vector<8x8xf32>
    %49 = arith.mulf %47, %48 : vector<8x8xf32>
    %50 = arith.addf %49, %25 : vector<8x8xf32>
    %cst_24 = arith.constant dense<0xFF800000> : vector<8xf32>
    %51 = vector.multi_reduction <maximumf>, %50, %cst_24 [1] : vector<8x8xf32> to vector<8xf32>
    %52 = vector.shape_cast %51 : vector<8xf32> to vector<8x1xf32>
    %53 = vector.broadcast %52 : vector<8x1xf32> to vector<8x8xf32>
    %54 = arith.subf %50, %53 : vector<8x8xf32>
    %55 = math.exp %54 : vector<8x8xf32>
    %cst_25 = arith.constant dense<0.000000e+00> : vector<8xf32>
    %56 = vector.multi_reduction <add>, %55, %cst_25 [1] : vector<8x8xf32> to vector<8xf32>
    %57 = vector.shape_cast %56 : vector<8xf32> to vector<8x1xf32>
    %58 = vector.broadcast %57 : vector<8x1xf32> to vector<8x8xf32>
    %59 = arith.divf %55, %58 : vector<8x8xf32>
    %60 = arith.truncf %59 : vector<8x8xf32> to vector<8x8xbf16>
    %61 = arith.truncf %44 : vector<8x64xf32> to vector<8x64xbf16>
    %cst_26 = arith.constant dense<0.000000e+00> : vector<8x64xf32>
    %62 = tpu.matmul %60, %61, %cst_26 {dimension_numbers = #tpu.dot_dimension_numbers<[1], [0], [0], [1], [0, 0, 1, 1], [], []>} : vector<8x8xbf16>, vector<8x64xbf16>, vector<8x64xf32> -> vector<8x64xf32>
    %63 = arith.truncf %62 : vector<8x64xf32> to vector<8x64xbf16>
    %64 = vector.extract_strided_slice %41 {offsets = [0, 0], sizes = [64, 128], strides = [1, 1]} : vector<128x128xbf16> to vector<64x128xbf16>
    %cst_27 = arith.constant dense<0.000000e+00> : vector<8x128xf32>
    %65 = tpu.matmul %63, %64, %cst_27 {dimension_numbers = #tpu.dot_dimension_numbers<[1], [0], [0], [1], [0, 0, 1, 1], [], []>} : vector<8x64xbf16>, vector<64x128xbf16>, vector<8x128xf32> -> vector<8x128xf32>
    %66 = vector.extract_strided_slice %37 {offsets = [0, 64], sizes = [8, 64], strides = [1, 1]} : vector<16x128xf32> to vector<8x64xf32>
    %67 = vector.extract_strided_slice %38 {offsets = [0, 64], sizes = [8, 64], strides = [1, 1]} : vector<16x128xf32> to vector<8x64xf32>
    %68 = vector.extract_strided_slice %39 {offsets = [0, 64], sizes = [8, 64], strides = [1, 1]} : vector<16x128xf32> to vector<8x64xf32>
    %69 = arith.truncf %66 : vector<8x64xf32> to vector<8x64xbf16>
    %70 = arith.truncf %67 : vector<8x64xf32> to vector<8x64xbf16>
    %cst_28 = arith.constant dense<0.000000e+00> : vector<8x8xf32>
    %71 = tpu.matmul %69, %70, %cst_28 {dimension_numbers = #tpu.dot_dimension_numbers<[1], [1], [0], [0], [0, 0, 1, 0], [], []>} : vector<8x64xbf16>, vector<8x64xbf16>, vector<8x8xf32> -> vector<8x8xf32>
    %cst_29 = arith.constant 1.250000e-01 : f32
    %72 = vector.broadcast %cst_29 : f32 to vector<8x8xf32>
    %73 = arith.mulf %71, %72 : vector<8x8xf32>
    %74 = arith.addf %73, %25 : vector<8x8xf32>
    %cst_30 = arith.constant dense<0xFF800000> : vector<8xf32>
    %75 = vector.multi_reduction <maximumf>, %74, %cst_30 [1] : vector<8x8xf32> to vector<8xf32>
    %76 = vector.shape_cast %75 : vector<8xf32> to vector<8x1xf32>
    %77 = vector.broadcast %76 : vector<8x1xf32> to vector<8x8xf32>
    %78 = arith.subf %74, %77 : vector<8x8xf32>
    %79 = math.exp %78 : vector<8x8xf32>
    %cst_31 = arith.constant dense<0.000000e+00> : vector<8xf32>
    %80 = vector.multi_reduction <add>, %79, %cst_31 [1] : vector<8x8xf32> to vector<8xf32>
    %81 = vector.shape_cast %80 : vector<8xf32> to vector<8x1xf32>
    %82 = vector.broadcast %81 : vector<8x1xf32> to vector<8x8xf32>
    %83 = arith.divf %79, %82 : vector<8x8xf32>
    %84 = arith.truncf %83 : vector<8x8xf32> to vector<8x8xbf16>
    %85 = arith.truncf %68 : vector<8x64xf32> to vector<8x64xbf16>
    %cst_32 = arith.constant dense<0.000000e+00> : vector<8x64xf32>
    %86 = tpu.matmul %84, %85, %cst_32 {dimension_numbers = #tpu.dot_dimension_numbers<[1], [0], [0], [1], [0, 0, 1, 1], [], []>} : vector<8x8xbf16>, vector<8x64xbf16>, vector<8x64xf32> -> vector<8x64xf32>
    %87 = arith.truncf %86 : vector<8x64xf32> to vector<8x64xbf16>
    %88 = vector.extract_strided_slice %41 {offsets = [64, 0], sizes = [64, 128], strides = [1, 1]} : vector<128x128xbf16> to vector<64x128xbf16>
    %cst_33 = arith.constant dense<0.000000e+00> : vector<8x128xf32>
    %89 = tpu.matmul %87, %88, %cst_33 {dimension_numbers = #tpu.dot_dimension_numbers<[1], [0], [0], [1], [0, 0, 1, 1], [], []>} : vector<8x64xbf16>, vector<64x128xbf16>, vector<8x128xf32> -> vector<8x128xf32>
    %90 = arith.addf %65, %89 : vector<8x128xf32>
    %c0_34 = arith.constant 0 : index
    %c0_35 = arith.constant 0 : index
    %91 = vector.load %arg21[%c0_34, %c0_35] : memref<16x128xf32, #tpu.memory_space<vmem>>, vector<8x128xf32>
    tpu.vector_store %arg21[%c0_34, %c0_35], %90 {strides = array<i32>} : memref<16x128xf32, #tpu.memory_space<vmem>>, vector<8x128xf32>,
    %92 = vector.extract_strided_slice %37 {offsets = [8, 0], sizes = [8, 64], strides = [1, 1]} : vector<16x128xf32> to vector<8x64xf32>
    %93 = vector.extract_strided_slice %38 {offsets = [8, 0], sizes = [8, 64], strides = [1, 1]} : vector<16x128xf32> to vector<8x64xf32>
    %94 = vector.extract_strided_slice %39 {offsets = [8, 0], sizes = [8, 64], strides = [1, 1]} : vector<16x128xf32> to vector<8x64xf32>
    %95 = arith.truncf %92 : vector<8x64xf32> to vector<8x64xbf16>
    %96 = arith.truncf %93 : vector<8x64xf32> to vector<8x64xbf16>
    %cst_36 = arith.constant dense<0.000000e+00> : vector<8x8xf32>
    %97 = tpu.matmul %95, %96, %cst_36 {dimension_numbers = #tpu.dot_dimension_numbers<[1], [1], [0], [0], [0, 0, 1, 0], [], []>} : vector<8x64xbf16>, vector<8x64xbf16>, vector<8x8xf32> -> vector<8x8xf32>
    %cst_37 = arith.constant 1.250000e-01 : f32
    %98 = vector.broadcast %cst_37 : f32 to vector<8x8xf32>
    %99 = arith.mulf %97, %98 : vector<8x8xf32>
    %100 = arith.addf %99, %28 : vector<8x8xf32>
    %cst_38 = arith.constant dense<0xFF800000> : vector<8xf32>
    %101 = vector.multi_reduction <maximumf>, %100, %cst_38 [1] : vector<8x8xf32> to vector<8xf32>
    %102 = vector.shape_cast %101 : vector<8xf32> to vector<8x1xf32>
    %103 = vector.broadcast %102 : vector<8x1xf32> to vector<8x8xf32>
    %104 = arith.subf %100, %103 : vector<8x8xf32>
    %105 = math.exp %104 : vector<8x8xf32>
    %cst_39 = arith.constant dense<0.000000e+00> : vector<8xf32>
    %106 = vector.multi_reduction <add>, %105, %cst_39 [1] : vector<8x8xf32> to vector<8xf32>
    %107 = vector.shape_cast %106 : vector<8xf32> to vector<8x1xf32>
    %108 = vector.broadcast %107 : vector<8x1xf32> to vector<8x8xf32>
    %109 = arith.divf %105, %108 : vector<8x8xf32>
    %110 = arith.truncf %109 : vector<8x8xf32> to vector<8x8xbf16>
    %111 = arith.truncf %94 : vector<8x64xf32> to vector<8x64xbf16>
    %cst_40 = arith.constant dense<0.000000e+00> : vector<8x64xf32>
    %112 = tpu.matmul %110, %111, %cst_40 {dimension_numbers = #tpu.dot_dimension_numbers<[1], [0], [0], [1], [0, 0, 1, 1], [], []>} : vector<8x8xbf16>, vector<8x64xbf16>, vector<8x64xf32> -> vector<8x64xf32>
    %113 = arith.truncf %112 : vector<8x64xf32> to vector<8x64xbf16>
    %114 = vector.extract_strided_slice %41 {offsets = [0, 0], sizes = [64, 128], strides = [1, 1]} : vector<128x128xbf16> to vector<64x128xbf16>
    %cst_41 = arith.constant dense<0.000000e+00> : vector<8x128xf32>
    %115 = tpu.matmul %113, %114, %cst_41 {dimension_numbers = #tpu.dot_dimension_numbers<[1], [0], [0], [1], [0, 0, 1, 1], [], []>} : vector<8x64xbf16>, vector<64x128xbf16>, vector<8x128xf32> -> vector<8x128xf32>
    %116 = vector.extract_strided_slice %37 {offsets = [8, 64], sizes = [8, 64], strides = [1, 1]} : vector<16x128xf32> to vector<8x64xf32>
    %117 = vector.extract_strided_slice %38 {offsets = [8, 64], sizes = [8, 64], strides = [1, 1]} : vector<16x128xf32> to vector<8x64xf32>
    %118 = vector.extract_strided_slice %39 {offsets = [8, 64], sizes = [8, 64], strides = [1, 1]} : vector<16x128xf32> to vector<8x64xf32>
    %119 = arith.truncf %116 : vector<8x64xf32> to vector<8x64xbf16>
    %120 = arith.truncf %117 : vector<8x64xf32> to vector<8x64xbf16>
    %cst_42 = arith.constant dense<0.000000e+00> : vector<8x8xf32>
    %121 = tpu.matmul %119, %120, %cst_42 {dimension_numbers = #tpu.dot_dimension_numbers<[1], [1], [0], [0], [0, 0, 1, 0], [], []>} : vector<8x64xbf16>, vector<8x64xbf16>, vector<8x8xf32> -> vector<8x8xf32>
    %cst_43 = arith.constant 1.250000e-01 : f32
    %122 = vector.broadcast %cst_43 : f32 to vector<8x8xf32>
    %123 = arith.mulf %121, %122 : vector<8x8xf32>
    %124 = arith.addf %123, %28 : vector<8x8xf32>
    %cst_44 = arith.constant dense<0xFF800000> : vector<8xf32>
    %125 = vector.multi_reduction <maximumf>, %124, %cst_44 [1] : vector<8x8xf32> to vector<8xf32>
    %126 = vector.shape_cast %125 : vector<8xf32> to vector<8x1xf32>
    %127 = vector.broadcast %126 : vector<8x1xf32> to vector<8x8xf32>
    %128 = arith.subf %124, %127 : vector<8x8xf32>
    %129 = math.exp %128 : vector<8x8xf32>
    %cst_45 = arith.constant dense<0.000000e+00> : vector<8xf32>
    %130 = vector.multi_reduction <add>, %129, %cst_45 [1] : vector<8x8xf32> to vector<8xf32>
    %131 = vector.shape_cast %130 : vector<8xf32> to vector<8x1xf32>
    %132 = vector.broadcast %131 : vector<8x1xf32> to vector<8x8xf32>
    %133 = arith.divf %129, %132 : vector<8x8xf32>
    %134 = arith.truncf %133 : vector<8x8xf32> to vector<8x8xbf16>
    %135 = arith.truncf %118 : vector<8x64xf32> to vector<8x64xbf16>
    %cst_46 = arith.constant dense<0.000000e+00> : vector<8x64xf32>
    %136 = tpu.matmul %134, %135, %cst_46 {dimension_numbers = #tpu.dot_dimension_numbers<[1], [0], [0], [1], [0, 0, 1, 1], [], []>} : vector<8x8xbf16>, vector<8x64xbf16>, vector<8x64xf32> -> vector<8x64xf32>
    %137 = arith.truncf %136 : vector<8x64xf32> to vector<8x64xbf16>
    %138 = vector.extract_strided_slice %41 {offsets = [64, 0], sizes = [64, 128], strides = [1, 1]} : vector<128x128xbf16> to vector<64x128xbf16>
    %cst_47 = arith.constant dense<0.000000e+00> : vector<8x128xf32>
    %139 = tpu.matmul %137, %138, %cst_47 {dimension_numbers = #tpu.dot_dimension_numbers<[1], [0], [0], [1], [0, 0, 1, 1], [], []>} : vector<8x64xbf16>, vector<64x128xbf16>, vector<8x128xf32> -> vector<8x128xf32>
    %140 = arith.addf %115, %139 : vector<8x128xf32>
    %c8 = arith.constant 8 : index
    %c0_48 = arith.constant 0 : index
    %141 = vector.load %arg21[%c8, %c0_48] : memref<16x128xf32, #tpu.memory_space<vmem>>, vector<8x128xf32>
    tpu.vector_store %arg21[%c8, %c0_48], %140 {strides = array<i32>} : memref<16x128xf32, #tpu.memory_space<vmem>>, vector<8x128xf32>,
    %c0_49 = arith.constant 0 : index
    %c0_50 = arith.constant 0 : index
    %142 = vector.load %arg21[%c0_49, %c0_50] : memref<16x128xf32, #tpu.memory_space<vmem>>, vector<16x128xf32>
    %c0_51 = arith.constant 0 : index
    %c0_52 = arith.constant 0 : index
    %c0_53 = arith.constant 0 : index
    %143 = vector.load %arg7[%c0_51, %c0_52, %c0_53] : memref<2x1x128xf32, #tpu.memory_space<vmem>>, vector<1x1x128xf32>
    %144 = vector.shape_cast %143 : vector<1x1x128xf32> to vector<1x128xf32>
    %145 = vector.broadcast %144 : vector<1x128xf32> to vector<16x128xf32>
    %146 = arith.addf %142, %145 : vector<16x128xf32>
    %147 = arith.addf %146, %22 : vector<16x128xf32>
    %c0_54 = arith.constant 0 : index
    %c0_55 = arith.constant 0 : index
    %c0_56 = arith.constant 0 : index
    %148 = vector.load %arg8[%c0_54, %c0_55, %c0_56] : memref<2x1x128xf32, #tpu.memory_space<vmem>>, vector<1x1x128xf32>
    %149 = vector.shape_cast %148 : vector<1x1x128xf32> to vector<1x128xf32>
    %c0_57 = arith.constant 0 : index
    %c0_58 = arith.constant 0 : index
    %c0_59 = arith.constant 0 : index
    %150 = vector.load %arg9[%c0_57, %c0_58, %c0_59] : memref<2x1x128xf32, #tpu.memory_space<vmem>>, vector<1x1x128xf32>
    %151 = vector.shape_cast %150 : vector<1x1x128xf32> to vector<1x128xf32>
    %cst_60 = arith.constant dense<0.000000e+00> : vector<16xf32>
    %152 = vector.multi_reduction <add>, %147, %cst_60 [1] : vector<16x128xf32> to vector<16xf32>
    %153 = vector.shape_cast %152 : vector<16xf32> to vector<16x1xf32>
    %cst_61 = arith.constant 1.280000e+02 : f32
    %154 = vector.broadcast %cst_61 : f32 to vector<16x1xf32>
    %155 = arith.divf %153, %154 : vector<16x1xf32>
    %156 = vector.broadcast %155 : vector<16x1xf32> to vector<16x128xf32>
    %157 = arith.subf %147, %156 : vector<16x128xf32>
    %158 = arith.mulf %157, %157 : vector<16x128xf32>
    %cst_62 = arith.constant dense<0.000000e+00> : vector<16xf32>
    %159 = vector.multi_reduction <add>, %158, %cst_62 [1] : vector<16x128xf32> to vector<16xf32>
    %160 = vector.shape_cast %159 : vector<16xf32> to vector<16x1xf32>
    %cst_63 = arith.constant 1.280000e+02 : f32
    %161 = vector.broadcast %cst_63 : f32 to vector<16x1xf32>
    %162 = arith.divf %160, %161 : vector<16x1xf32>
    %cst_64 = arith.constant 9.99999996E-13 : f32
    %163 = vector.broadcast %cst_64 : f32 to vector<16x1xf32>
    %164 = arith.addf %162, %163 : vector<16x1xf32>
    %165 = math.rsqrt %164 : vector<16x1xf32>
    %166 = vector.broadcast %165 : vector<16x1xf32> to vector<16x128xf32>
    %167 = arith.mulf %157, %166 : vector<16x128xf32>
    %168 = vector.broadcast %149 : vector<1x128xf32> to vector<16x128xf32>
    %169 = arith.mulf %167, %168 : vector<16x128xf32>
    %170 = vector.broadcast %151 : vector<1x128xf32> to vector<16x128xf32>
    %171 = arith.addf %169, %170 : vector<16x128xf32>
    %172 = arith.truncf %171 : vector<16x128xf32> to vector<16x128xbf16>
    %c0_65 = arith.constant 0 : index
    %c0_66 = arith.constant 0 : index
    %c0_67 = arith.constant 0 : index
    %173 = vector.load %arg10[%c0_65, %c0_66, %c0_67] : memref<2x128x512xbf16, #tpu.memory_space<vmem>>, vector<1x128x512xbf16>
    %174 = vector.shape_cast %173 : vector<1x128x512xbf16> to vector<128x512xbf16>
    %cst_68 = arith.constant dense<0.000000e+00> : vector<16x512xf32>
    %175 = tpu.matmul %172, %174, %cst_68 {dimension_numbers = #tpu.dot_dimension_numbers<[1], [0], [0], [1], [0, 0, 1, 1], [], []>} : vector<16x128xbf16>, vector<128x512xbf16>, vector<16x512xf32> -> vector<16x512xf32>
    %c0_69 = arith.constant 0 : index
    %c0_70 = arith.constant 0 : index
    %c0_71 = arith.constant 0 : index
    %176 = vector.load %arg11[%c0_69, %c0_70, %c0_71] : memref<2x1x512xf32, #tpu.memory_space<vmem>>, vector<1x1x512xf32>
    %177 = vector.shape_cast %176 : vector<1x1x512xf32> to vector<1x512xf32>
    %178 = vector.broadcast %177 : vector<1x512xf32> to vector<16x512xf32>
    %179 = arith.addf %175, %178 : vector<16x512xf32>
    %cst_72 = arith.constant 5.000000e-01 : f32
    %180 = vector.broadcast %cst_72 : f32 to vector<16x512xf32>
    %181 = arith.mulf %180, %179 : vector<16x512xf32>
    %cst_73 = arith.constant 4.471500e-02 : f32
    %182 = vector.broadcast %cst_73 : f32 to vector<16x512xf32>
    %183 = arith.mulf %182, %179 : vector<16x512xf32>
    %184 = arith.mulf %183, %179 : vector<16x512xf32>
    %185 = arith.mulf %184, %179 : vector<16x512xf32>
    %186 = arith.addf %179, %185 : vector<16x512xf32>
    %cst_74 = arith.constant 0.797884583 : f32
    %187 = vector.broadcast %cst_74 : f32 to vector<16x512xf32>
    %188 = arith.mulf %187, %186 : vector<16x512xf32>
    %189 = math.tanh %188 : vector<16x512xf32>
    %cst_75 = arith.constant 1.000000e+00 : f32
    %190 = vector.broadcast %cst_75 : f32 to vector<16x512xf32>
    %191 = arith.addf %190, %189 : vector<16x512xf32>
    %192 = arith.mulf %181, %191 : vector<16x512xf32>
    %193 = arith.truncf %192 : vector<16x512xf32> to vector<16x512xbf16>
    %c0_76 = arith.constant 0 : index
    %c0_77 = arith.constant 0 : index
    %c0_78 = arith.constant 0 : index
    %194 = vector.load %arg12[%c0_76, %c0_77, %c0_78] : memref<2x512x128xbf16, #tpu.memory_space<vmem>>, vector<1x512x128xbf16>
    %195 = vector.shape_cast %194 : vector<1x512x128xbf16> to vector<512x128xbf16>
    %cst_79 = arith.constant dense<0.000000e+00> : vector<16x128xf32>
    %196 = tpu.matmul %193, %195, %cst_79 {dimension_numbers = #tpu.dot_dimension_numbers<[1], [0], [0], [1], [0, 0, 1, 1], [], []>} : vector<16x512xbf16>, vector<512x128xbf16>, vector<16x128xf32> -> vector<16x128xf32>
    %c0_80 = arith.constant 0 : index
    %c0_81 = arith.constant 0 : index
    %c0_82 = arith.constant 0 : index
    %197 = vector.load %arg13[%c0_80, %c0_81, %c0_82] : memref<2x1x128xf32, #tpu.memory_space<vmem>>, vector<1x1x128xf32>
    %198 = vector.shape_cast %197 : vector<1x1x128xf32> to vector<1x128xf32>
    %199 = vector.broadcast %198 : vector<1x128xf32> to vector<16x128xf32>
    %200 = arith.addf %196, %199 : vector<16x128xf32>
    %201 = arith.addf %200, %171 : vector<16x128xf32>
    %c0_83 = arith.constant 0 : index
    %c0_84 = arith.constant 0 : index
    %c0_85 = arith.constant 0 : index
    %202 = vector.load %arg14[%c0_83, %c0_84, %c0_85] : memref<2x1x128xf32, #tpu.memory_space<vmem>>, vector<1x1x128xf32>
    %203 = vector.shape_cast %202 : vector<1x1x128xf32> to vector<1x128xf32>
    %c0_86 = arith.constant 0 : index
    %c0_87 = arith.constant 0 : index
    %c0_88 = arith.constant 0 : index
    %204 = vector.load %arg15[%c0_86, %c0_87, %c0_88] : memref<2x1x128xf32, #tpu.memory_space<vmem>>, vector<1x1x128xf32>
    %205 = vector.shape_cast %204 : vector<1x1x128xf32> to vector<1x128xf32>
    %cst_89 = arith.constant dense<0.000000e+00> : vector<16xf32>
    %206 = vector.multi_reduction <add>, %201, %cst_89 [1] : vector<16x128xf32> to vector<16xf32>
    %207 = vector.shape_cast %206 : vector<16xf32> to vector<16x1xf32>
    %cst_90 = arith.constant 1.280000e+02 : f32
    %208 = vector.broadcast %cst_90 : f32 to vector<16x1xf32>
    %209 = arith.divf %207, %208 : vector<16x1xf32>
    %210 = vector.broadcast %209 : vector<16x1xf32> to vector<16x128xf32>
    %211 = arith.subf %201, %210 : vector<16x128xf32>
    %212 = arith.mulf %211, %211 : vector<16x128xf32>
    %cst_91 = arith.constant dense<0.000000e+00> : vector<16xf32>
    %213 = vector.multi_reduction <add>, %212, %cst_91 [1] : vector<16x128xf32> to vector<16xf32>
    %214 = vector.shape_cast %213 : vector<16xf32> to vector<16x1xf32>
    %cst_92 = arith.constant 1.280000e+02 : f32
    %215 = vector.broadcast %cst_92 : f32 to vector<16x1xf32>
    %216 = arith.divf %214, %215 : vector<16x1xf32>
    %cst_93 = arith.constant 9.99999996E-13 : f32
    %217 = vector.broadcast %cst_93 : f32 to vector<16x1xf32>
    %218 = arith.addf %216, %217 : vector<16x1xf32>
    %219 = math.rsqrt %218 : vector<16x1xf32>
    %220 = vector.broadcast %219 : vector<16x1xf32> to vector<16x128xf32>
    %221 = arith.mulf %211, %220 : vector<16x128xf32>
    %222 = vector.broadcast %203 : vector<1x128xf32> to vector<16x128xf32>
    %223 = arith.mulf %221, %222 : vector<16x128xf32>
    %224 = vector.broadcast %205 : vector<1x128xf32> to vector<16x128xf32>
    %225 = arith.addf %223, %224 : vector<16x128xf32>
    %226 = arith.truncf %225 : vector<16x128xf32> to vector<16x128xbf16>
    %c1_94 = arith.constant 1 : index
    %c0_95 = arith.constant 0 : index
    %c0_96 = arith.constant 0 : index
    %227 = vector.load %arg4[%c1_94, %c0_95, %c0_96] : memref<2x128x384xbf16, #tpu.memory_space<vmem>>, vector<1x128x384xbf16>
    %228 = vector.shape_cast %227 : vector<1x128x384xbf16> to vector<128x384xbf16>
    %cst_97 = arith.constant dense<0.000000e+00> : vector<16x384xf32>
    %229 = tpu.matmul %226, %228, %cst_97 {dimension_numbers = #tpu.dot_dimension_numbers<[1], [0], [0], [1], [0, 0, 1, 1], [], []>} : vector<16x128xbf16>, vector<128x384xbf16>, vector<16x384xf32> -> vector<16x384xf32>
    %c1_98 = arith.constant 1 : index
    %c0_99 = arith.constant 0 : index
    %c0_100 = arith.constant 0 : index
    %230 = vector.load %arg5[%c1_98, %c0_99, %c0_100] : memref<2x1x384xf32, #tpu.memory_space<vmem>>, vector<1x1x384xf32>
    %231 = vector.shape_cast %230 : vector<1x1x384xf32> to vector<1x384xf32>
    %232 = vector.broadcast %231 : vector<1x384xf32> to vector<16x384xf32>
    %233 = arith.addf %229, %232 : vector<16x384xf32>
    %234 = vector.extract_strided_slice %233 {offsets = [0, 0], sizes = [16, 128], strides = [1, 1]} : vector<16x384xf32> to vector<16x128xf32>
    %235 = vector.extract_strided_slice %233 {offsets = [0, 128], sizes = [16, 128], strides = [1, 1]} : vector<16x384xf32> to vector<16x128xf32>
    %236 = vector.extract_strided_slice %233 {offsets = [0, 256], sizes = [16, 128], strides = [1, 1]} : vector<16x384xf32> to vector<16x128xf32>
    %c1_101 = arith.constant 1 : index
    %c0_102 = arith.constant 0 : index
    %c0_103 = arith.constant 0 : index
    %237 = vector.load %arg6[%c1_101, %c0_102, %c0_103] : memref<2x128x128xbf16, #tpu.memory_space<vmem>>, vector<1x128x128xbf16>
    %238 = vector.shape_cast %237 : vector<1x128x128xbf16> to vector<128x128xbf16>
    %239 = vector.extract_strided_slice %234 {offsets = [0, 0], sizes = [8, 64], strides = [1, 1]} : vector<16x128xf32> to vector<8x64xf32>
    %240 = vector.extract_strided_slice %235 {offsets = [0, 0], sizes = [8, 64], strides = [1, 1]} : vector<16x128xf32> to vector<8x64xf32>
    %241 = vector.extract_strided_slice %236 {offsets = [0, 0], sizes = [8, 64], strides = [1, 1]} : vector<16x128xf32> to vector<8x64xf32>
    %242 = arith.truncf %239 : vector<8x64xf32> to vector<8x64xbf16>
    %243 = arith.truncf %240 : vector<8x64xf32> to vector<8x64xbf16>
    %cst_104 = arith.constant dense<0.000000e+00> : vector<8x8xf32>
    %244 = tpu.matmul %242, %243, %cst_104 {dimension_numbers = #tpu.dot_dimension_numbers<[1], [1], [0], [0], [0, 0, 1, 0], [], []>} : vector<8x64xbf16>, vector<8x64xbf16>, vector<8x8xf32> -> vector<8x8xf32>
    %cst_105 = arith.constant 1.250000e-01 : f32
    %245 = vector.broadcast %cst_105 : f32 to vector<8x8xf32>
    %246 = arith.mulf %244, %245 : vector<8x8xf32>
    %247 = arith.addf %246, %25 : vector<8x8xf32>
    %cst_106 = arith.constant dense<0xFF800000> : vector<8xf32>
    %248 = vector.multi_reduction <maximumf>, %247, %cst_106 [1] : vector<8x8xf32> to vector<8xf32>
    %249 = vector.shape_cast %248 : vector<8xf32> to vector<8x1xf32>
    %250 = vector.broadcast %249 : vector<8x1xf32> to vector<8x8xf32>
    %251 = arith.subf %247, %250 : vector<8x8xf32>
    %252 = math.exp %251 : vector<8x8xf32>
    %cst_107 = arith.constant dense<0.000000e+00> : vector<8xf32>
    %253 = vector.multi_reduction <add>, %252, %cst_107 [1] : vector<8x8xf32> to vector<8xf32>
    %254 = vector.shape_cast %253 : vector<8xf32> to vector<8x1xf32>
    %255 = vector.broadcast %254 : vector<8x1xf32> to vector<8x8xf32>
    %256 = arith.divf %252, %255 : vector<8x8xf32>
    %257 = arith.truncf %256 : vector<8x8xf32> to vector<8x8xbf16>
    %258 = arith.truncf %241 : vector<8x64xf32> to vector<8x64xbf16>
    %cst_108 = arith.constant dense<0.000000e+00> : vector<8x64xf32>
    %259 = tpu.matmul %257, %258, %cst_108 {dimension_numbers = #tpu.dot_dimension_numbers<[1], [0], [0], [1], [0, 0, 1, 1], [], []>} : vector<8x8xbf16>, vector<8x64xbf16>, vector<8x64xf32> -> vector<8x64xf32>
    %260 = arith.truncf %259 : vector<8x64xf32> to vector<8x64xbf16>
    %261 = vector.extract_strided_slice %238 {offsets = [0, 0], sizes = [64, 128], strides = [1, 1]} : vector<128x128xbf16> to vector<64x128xbf16>
    %cst_109 = arith.constant dense<0.000000e+00> : vector<8x128xf32>
    %262 = tpu.matmul %260, %261, %cst_109 {dimension_numbers = #tpu.dot_dimension_numbers<[1], [0], [0], [1], [0, 0, 1, 1], [], []>} : vector<8x64xbf16>, vector<64x128xbf16>, vector<8x128xf32> -> vector<8x128xf32>
    %263 = vector.extract_strided_slice %234 {offsets = [0, 64], sizes = [8, 64], strides = [1, 1]} : vector<16x128xf32> to vector<8x64xf32>
    %264 = vector.extract_strided_slice %235 {offsets = [0, 64], sizes = [8, 64], strides = [1, 1]} : vector<16x128xf32> to vector<8x64xf32>
    %265 = vector.extract_strided_slice %236 {offsets = [0, 64], sizes = [8, 64], strides = [1, 1]} : vector<16x128xf32> to vector<8x64xf32>
    %266 = arith.truncf %263 : vector<8x64xf32> to vector<8x64xbf16>
    %267 = arith.truncf %264 : vector<8x64xf32> to vector<8x64xbf16>
    %cst_110 = arith.constant dense<0.000000e+00> : vector<8x8xf32>
    %268 = tpu.matmul %266, %267, %cst_110 {dimension_numbers = #tpu.dot_dimension_numbers<[1], [1], [0], [0], [0, 0, 1, 0], [], []>} : vector<8x64xbf16>, vector<8x64xbf16>, vector<8x8xf32> -> vector<8x8xf32>
    %cst_111 = arith.constant 1.250000e-01 : f32
    %269 = vector.broadcast %cst_111 : f32 to vector<8x8xf32>
    %270 = arith.mulf %268, %269 : vector<8x8xf32>
    %271 = arith.addf %270, %25 : vector<8x8xf32>
    %cst_112 = arith.constant dense<0xFF800000> : vector<8xf32>
    %272 = vector.multi_reduction <maximumf>, %271, %cst_112 [1] : vector<8x8xf32> to vector<8xf32>
    %273 = vector.shape_cast %272 : vector<8xf32> to vector<8x1xf32>
    %274 = vector.broadcast %273 : vector<8x1xf32> to vector<8x8xf32>
    %275 = arith.subf %271, %274 : vector<8x8xf32>
    %276 = math.exp %275 : vector<8x8xf32>
    %cst_113 = arith.constant dense<0.000000e+00> : vector<8xf32>
    %277 = vector.multi_reduction <add>, %276, %cst_113 [1] : vector<8x8xf32> to vector<8xf32>
    %278 = vector.shape_cast %277 : vector<8xf32> to vector<8x1xf32>
    %279 = vector.broadcast %278 : vector<8x1xf32> to vector<8x8xf32>
    %280 = arith.divf %276, %279 : vector<8x8xf32>
    %281 = arith.truncf %280 : vector<8x8xf32> to vector<8x8xbf16>
    %282 = arith.truncf %265 : vector<8x64xf32> to vector<8x64xbf16>
    %cst_114 = arith.constant dense<0.000000e+00> : vector<8x64xf32>
    %283 = tpu.matmul %281, %282, %cst_114 {dimension_numbers = #tpu.dot_dimension_numbers<[1], [0], [0], [1], [0, 0, 1, 1], [], []>} : vector<8x8xbf16>, vector<8x64xbf16>, vector<8x64xf32> -> vector<8x64xf32>
    %284 = arith.truncf %283 : vector<8x64xf32> to vector<8x64xbf16>
    %285 = vector.extract_strided_slice %238 {offsets = [64, 0], sizes = [64, 128], strides = [1, 1]} : vector<128x128xbf16> to vector<64x128xbf16>
    %cst_115 = arith.constant dense<0.000000e+00> : vector<8x128xf32>
    %286 = tpu.matmul %284, %285, %cst_115 {dimension_numbers = #tpu.dot_dimension_numbers<[1], [0], [0], [1], [0, 0, 1, 1], [], []>} : vector<8x64xbf16>, vector<64x128xbf16>, vector<8x128xf32> -> vector<8x128xf32>
    %287 = arith.addf %262, %286 : vector<8x128xf32>
    %c0_116 = arith.constant 0 : index
    %c0_117 = arith.constant 0 : index
    %288 = vector.load %arg21[%c0_116, %c0_117] : memref<16x128xf32, #tpu.memory_space<vmem>>, vector<8x128xf32>
    tpu.vector_store %arg21[%c0_116, %c0_117], %287 {strides = array<i32>} : memref<16x128xf32, #tpu.memory_space<vmem>>, vector<8x128xf32>,
    %289 = vector.extract_strided_slice %234 {offsets = [8, 0], sizes = [8, 64], strides = [1, 1]} : vector<16x128xf32> to vector<8x64xf32>
    %290 = vector.extract_strided_slice %235 {offsets = [8, 0], sizes = [8, 64], strides = [1, 1]} : vector<16x128xf32> to vector<8x64xf32>
    %291 = vector.extract_strided_slice %236 {offsets = [8, 0], sizes = [8, 64], strides = [1, 1]} : vector<16x128xf32> to vector<8x64xf32>
    %292 = arith.truncf %289 : vector<8x64xf32> to vector<8x64xbf16>
    %293 = arith.truncf %290 : vector<8x64xf32> to vector<8x64xbf16>
    %cst_118 = arith.constant dense<0.000000e+00> : vector<8x8xf32>
    %294 = tpu.matmul %292, %293, %cst_118 {dimension_numbers = #tpu.dot_dimension_numbers<[1], [1], [0], [0], [0, 0, 1, 0], [], []>} : vector<8x64xbf16>, vector<8x64xbf16>, vector<8x8xf32> -> vector<8x8xf32>
    %cst_119 = arith.constant 1.250000e-01 : f32
    %295 = vector.broadcast %cst_119 : f32 to vector<8x8xf32>
    %296 = arith.mulf %294, %295 : vector<8x8xf32>
    %297 = arith.addf %296, %28 : vector<8x8xf32>
    %cst_120 = arith.constant dense<0xFF800000> : vector<8xf32>
    %298 = vector.multi_reduction <maximumf>, %297, %cst_120 [1] : vector<8x8xf32> to vector<8xf32>
    %299 = vector.shape_cast %298 : vector<8xf32> to vector<8x1xf32>
    %300 = vector.broadcast %299 : vector<8x1xf32> to vector<8x8xf32>
    %301 = arith.subf %297, %300 : vector<8x8xf32>
    %302 = math.exp %301 : vector<8x8xf32>
    %cst_121 = arith.constant dense<0.000000e+00> : vector<8xf32>
    %303 = vector.multi_reduction <add>, %302, %cst_121 [1] : vector<8x8xf32> to vector<8xf32>
    %304 = vector.shape_cast %303 : vector<8xf32> to vector<8x1xf32>
    %305 = vector.broadcast %304 : vector<8x1xf32> to vector<8x8xf32>
    %306 = arith.divf %302, %305 : vector<8x8xf32>
    %307 = arith.truncf %306 : vector<8x8xf32> to vector<8x8xbf16>
    %308 = arith.truncf %291 : vector<8x64xf32> to vector<8x64xbf16>
    %cst_122 = arith.constant dense<0.000000e+00> : vector<8x64xf32>
    %309 = tpu.matmul %307, %308, %cst_122 {dimension_numbers = #tpu.dot_dimension_numbers<[1], [0], [0], [1], [0, 0, 1, 1], [], []>} : vector<8x8xbf16>, vector<8x64xbf16>, vector<8x64xf32> -> vector<8x64xf32>
    %310 = arith.truncf %309 : vector<8x64xf32> to vector<8x64xbf16>
    %311 = vector.extract_strided_slice %238 {offsets = [0, 0], sizes = [64, 128], strides = [1, 1]} : vector<128x128xbf16> to vector<64x128xbf16>
    %cst_123 = arith.constant dense<0.000000e+00> : vector<8x128xf32>
    %312 = tpu.matmul %310, %311, %cst_123 {dimension_numbers = #tpu.dot_dimension_numbers<[1], [0], [0], [1], [0, 0, 1, 1], [], []>} : vector<8x64xbf16>, vector<64x128xbf16>, vector<8x128xf32> -> vector<8x128xf32>
    %313 = vector.extract_strided_slice %234 {offsets = [8, 64], sizes = [8, 64], strides = [1, 1]} : vector<16x128xf32> to vector<8x64xf32>
    %314 = vector.extract_strided_slice %235 {offsets = [8, 64], sizes = [8, 64], strides = [1, 1]} : vector<16x128xf32> to vector<8x64xf32>
    %315 = vector.extract_strided_slice %236 {offsets = [8, 64], sizes = [8, 64], strides = [1, 1]} : vector<16x128xf32> to vector<8x64xf32>
    %316 = arith.truncf %313 : vector<8x64xf32> to vector<8x64xbf16>
    %317 = arith.truncf %314 : vector<8x64xf32> to vector<8x64xbf16>
    %cst_124 = arith.constant dense<0.000000e+00> : vector<8x8xf32>
    %318 = tpu.matmul %316, %317, %cst_124 {dimension_numbers = #tpu.dot_dimension_numbers<[1], [1], [0], [0], [0, 0, 1, 0], [], []>} : vector<8x64xbf16>, vector<8x64xbf16>, vector<8x8xf32> -> vector<8x8xf32>
    %cst_125 = arith.constant 1.250000e-01 : f32
    %319 = vector.broadcast %cst_125 : f32 to vector<8x8xf32>
    %320 = arith.mulf %318, %319 : vector<8x8xf32>
    %321 = arith.addf %320, %28 : vector<8x8xf32>
    %cst_126 = arith.constant dense<0xFF800000> : vector<8xf32>
    %322 = vector.multi_reduction <maximumf>, %321, %cst_126 [1] : vector<8x8xf32> to vector<8xf32>
    %323 = vector.shape_cast %322 : vector<8xf32> to vector<8x1xf32>
    %324 = vector.broadcast %323 : vector<8x1xf32> to vector<8x8xf32>
    %325 = arith.subf %321, %324 : vector<8x8xf32>
    %326 = math.exp %325 : vector<8x8xf32>
    %cst_127 = arith.constant dense<0.000000e+00> : vector<8xf32>
    %327 = vector.multi_reduction <add>, %326, %cst_127 [1] : vector<8x8xf32> to vector<8xf32>
    %328 = vector.shape_cast %327 : vector<8xf32> to vector<8x1xf32>
    %329 = vector.broadcast %328 : vector<8x1xf32> to vector<8x8xf32>
    %330 = arith.divf %326, %329 : vector<8x8xf32>
    %331 = arith.truncf %330 : vector<8x8xf32> to vector<8x8xbf16>
    %332 = arith.truncf %315 : vector<8x64xf32> to vector<8x64xbf16>
    %cst_128 = arith.constant dense<0.000000e+00> : vector<8x64xf32>
    %333 = tpu.matmul %331, %332, %cst_128 {dimension_numbers = #tpu.dot_dimension_numbers<[1], [0], [0], [1], [0, 0, 1, 1], [], []>} : vector<8x8xbf16>, vector<8x64xbf16>, vector<8x64xf32> -> vector<8x64xf32>
    %334 = arith.truncf %333 : vector<8x64xf32> to vector<8x64xbf16>
    %335 = vector.extract_strided_slice %238 {offsets = [64, 0], sizes = [64, 128], strides = [1, 1]} : vector<128x128xbf16> to vector<64x128xbf16>
    %cst_129 = arith.constant dense<0.000000e+00> : vector<8x128xf32>
    %336 = tpu.matmul %334, %335, %cst_129 {dimension_numbers = #tpu.dot_dimension_numbers<[1], [0], [0], [1], [0, 0, 1, 1], [], []>} : vector<8x64xbf16>, vector<64x128xbf16>, vector<8x128xf32> -> vector<8x128xf32>
    %337 = arith.addf %312, %336 : vector<8x128xf32>
    %c8_130 = arith.constant 8 : index
    %c0_131 = arith.constant 0 : index
    %338 = vector.load %arg21[%c8_130, %c0_131] : memref<16x128xf32, #tpu.memory_space<vmem>>, vector<8x128xf32>
    tpu.vector_store %arg21[%c8_130, %c0_131], %337 {strides = array<i32>} : memref<16x128xf32, #tpu.memory_space<vmem>>, vector<8x128xf32>,
    %c0_132 = arith.constant 0 : index
    %c0_133 = arith.constant 0 : index
    %339 = vector.load %arg21[%c0_132, %c0_133] : memref<16x128xf32, #tpu.memory_space<vmem>>, vector<16x128xf32>
    %c1_134 = arith.constant 1 : index
    %c0_135 = arith.constant 0 : index
    %c0_136 = arith.constant 0 : index
    %340 = vector.load %arg7[%c1_134, %c0_135, %c0_136] : memref<2x1x128xf32, #tpu.memory_space<vmem>>, vector<1x1x128xf32>
    %341 = vector.shape_cast %340 : vector<1x1x128xf32> to vector<1x128xf32>
    %342 = vector.broadcast %341 : vector<1x128xf32> to vector<16x128xf32>
    %343 = arith.addf %339, %342 : vector<16x128xf32>
    %344 = arith.addf %343, %225 : vector<16x128xf32>
    %c1_137 = arith.constant 1 : index
    %c0_138 = arith.constant 0 : index
    %c0_139 = arith.constant 0 : index
    %345 = vector.load %arg8[%c1_137, %c0_138, %c0_139] : memref<2x1x128xf32, #tpu.memory_space<vmem>>, vector<1x1x128xf32>
    %346 = vector.shape_cast %345 : vector<1x1x128xf32> to vector<1x128xf32>
    %c1_140 = arith.constant 1 : index
    %c0_141 = arith.constant 0 : index
    %c0_142 = arith.constant 0 : index
    %347 = vector.load %arg9[%c1_140, %c0_141, %c0_142] : memref<2x1x128xf32, #tpu.memory_space<vmem>>, vector<1x1x128xf32>
    %348 = vector.shape_cast %347 : vector<1x1x128xf32> to vector<1x128xf32>
    %cst_143 = arith.constant dense<0.000000e+00> : vector<16xf32>
    %349 = vector.multi_reduction <add>, %344, %cst_143 [1] : vector<16x128xf32> to vector<16xf32>
    %350 = vector.shape_cast %349 : vector<16xf32> to vector<16x1xf32>
    %cst_144 = arith.constant 1.280000e+02 : f32
    %351 = vector.broadcast %cst_144 : f32 to vector<16x1xf32>
    %352 = arith.divf %350, %351 : vector<16x1xf32>
    %353 = vector.broadcast %352 : vector<16x1xf32> to vector<16x128xf32>
    %354 = arith.subf %344, %353 : vector<16x128xf32>
    %355 = arith.mulf %354, %354 : vector<16x128xf32>
    %cst_145 = arith.constant dense<0.000000e+00> : vector<16xf32>
    %356 = vector.multi_reduction <add>, %355, %cst_145 [1] : vector<16x128xf32> to vector<16xf32>
    %357 = vector.shape_cast %356 : vector<16xf32> to vector<16x1xf32>
    %cst_146 = arith.constant 1.280000e+02 : f32
    %358 = vector.broadcast %cst_146 : f32 to vector<16x1xf32>
    %359 = arith.divf %357, %358 : vector<16x1xf32>
    %cst_147 = arith.constant 9.99999996E-13 : f32
    %360 = vector.broadcast %cst_147 : f32 to vector<16x1xf32>
    %361 = arith.addf %359, %360 : vector<16x1xf32>
    %362 = math.rsqrt %361 : vector<16x1xf32>
    %363 = vector.broadcast %362 : vector<16x1xf32> to vector<16x128xf32>
    %364 = arith.mulf %354, %363 : vector<16x128xf32>
    %365 = vector.broadcast %346 : vector<1x128xf32> to vector<16x128xf32>
    %366 = arith.mulf %364, %365 : vector<16x128xf32>
    %367 = vector.broadcast %348 : vector<1x128xf32> to vector<16x128xf32>
    %368 = arith.addf %366, %367 : vector<16x128xf32>
    %369 = arith.truncf %368 : vector<16x128xf32> to vector<16x128xbf16>
    %c1_148 = arith.constant 1 : index
    %c0_149 = arith.constant 0 : index
    %c0_150 = arith.constant 0 : index
    %370 = vector.load %arg10[%c1_148, %c0_149, %c0_150] : memref<2x128x512xbf16, #tpu.memory_space<vmem>>, vector<1x128x512xbf16>
    %371 = vector.shape_cast %370 : vector<1x128x512xbf16> to vector<128x512xbf16>
    %cst_151 = arith.constant dense<0.000000e+00> : vector<16x512xf32>
    %372 = tpu.matmul %369, %371, %cst_151 {dimension_numbers = #tpu.dot_dimension_numbers<[1], [0], [0], [1], [0, 0, 1, 1], [], []>} : vector<16x128xbf16>, vector<128x512xbf16>, vector<16x512xf32> -> vector<16x512xf32>
    %c1_152 = arith.constant 1 : index
    %c0_153 = arith.constant 0 : index
    %c0_154 = arith.constant 0 : index
    %373 = vector.load %arg11[%c1_152, %c0_153, %c0_154] : memref<2x1x512xf32, #tpu.memory_space<vmem>>, vector<1x1x512xf32>
    %374 = vector.shape_cast %373 : vector<1x1x512xf32> to vector<1x512xf32>
    %375 = vector.broadcast %374 : vector<1x512xf32> to vector<16x512xf32>
    %376 = arith.addf %372, %375 : vector<16x512xf32>
    %cst_155 = arith.constant 5.000000e-01 : f32
    %377 = vector.broadcast %cst_155 : f32 to vector<16x512xf32>
    %378 = arith.mulf %377, %376 : vector<16x512xf32>
    %cst_156 = arith.constant 4.471500e-02 : f32
    %379 = vector.broadcast %cst_156 : f32 to vector<16x512xf32>
    %380 = arith.mulf %379, %376 : vector<16x512xf32>
    %381 = arith.mulf %380, %376 : vector<16x512xf32>
    %382 = arith.mulf %381, %376 : vector<16x512xf32>
    %383 = arith.addf %376, %382 : vector<16x512xf32>
    %cst_157 = arith.constant 0.797884583 : f32
    %384 = vector.broadcast %cst_157 : f32 to vector<16x512xf32>
    %385 = arith.mulf %384, %383 : vector<16x512xf32>
    %386 = math.tanh %385 : vector<16x512xf32>
    %cst_158 = arith.constant 1.000000e+00 : f32
    %387 = vector.broadcast %cst_158 : f32 to vector<16x512xf32>
    %388 = arith.addf %387, %386 : vector<16x512xf32>
    %389 = arith.mulf %378, %388 : vector<16x512xf32>
    %390 = arith.truncf %389 : vector<16x512xf32> to vector<16x512xbf16>
    %c1_159 = arith.constant 1 : index
    %c0_160 = arith.constant 0 : index
    %c0_161 = arith.constant 0 : index
    %391 = vector.load %arg12[%c1_159, %c0_160, %c0_161] : memref<2x512x128xbf16, #tpu.memory_space<vmem>>, vector<1x512x128xbf16>
    %392 = vector.shape_cast %391 : vector<1x512x128xbf16> to vector<512x128xbf16>
    %cst_162 = arith.constant dense<0.000000e+00> : vector<16x128xf32>
    %393 = tpu.matmul %390, %392, %cst_162 {dimension_numbers = #tpu.dot_dimension_numbers<[1], [0], [0], [1], [0, 0, 1, 1], [], []>} : vector<16x512xbf16>, vector<512x128xbf16>, vector<16x128xf32> -> vector<16x128xf32>
    %c1_163 = arith.constant 1 : index
    %c0_164 = arith.constant 0 : index
    %c0_165 = arith.constant 0 : index
    %394 = vector.load %arg13[%c1_163, %c0_164, %c0_165] : memref<2x1x128xf32, #tpu.memory_space<vmem>>, vector<1x1x128xf32>
    %395 = vector.shape_cast %394 : vector<1x1x128xf32> to vector<1x128xf32>
    %396 = vector.broadcast %395 : vector<1x128xf32> to vector<16x128xf32>
    %397 = arith.addf %393, %396 : vector<16x128xf32>
    %398 = arith.addf %397, %368 : vector<16x128xf32>
    %c1_166 = arith.constant 1 : index
    %c0_167 = arith.constant 0 : index
    %c0_168 = arith.constant 0 : index
    %399 = vector.load %arg14[%c1_166, %c0_167, %c0_168] : memref<2x1x128xf32, #tpu.memory_space<vmem>>, vector<1x1x128xf32>
    %400 = vector.shape_cast %399 : vector<1x1x128xf32> to vector<1x128xf32>
    %c1_169 = arith.constant 1 : index
    %c0_170 = arith.constant 0 : index
    %c0_171 = arith.constant 0 : index
    %401 = vector.load %arg15[%c1_169, %c0_170, %c0_171] : memref<2x1x128xf32, #tpu.memory_space<vmem>>, vector<1x1x128xf32>
    %402 = vector.shape_cast %401 : vector<1x1x128xf32> to vector<1x128xf32>
    %cst_172 = arith.constant dense<0.000000e+00> : vector<16xf32>
    %403 = vector.multi_reduction <add>, %398, %cst_172 [1] : vector<16x128xf32> to vector<16xf32>
    %404 = vector.shape_cast %403 : vector<16xf32> to vector<16x1xf32>
    %cst_173 = arith.constant 1.280000e+02 : f32
    %405 = vector.broadcast %cst_173 : f32 to vector<16x1xf32>
    %406 = arith.divf %404, %405 : vector<16x1xf32>
    %407 = vector.broadcast %406 : vector<16x1xf32> to vector<16x128xf32>
    %408 = arith.subf %398, %407 : vector<16x128xf32>
    %409 = arith.mulf %408, %408 : vector<16x128xf32>
    %cst_174 = arith.constant dense<0.000000e+00> : vector<16xf32>
    %410 = vector.multi_reduction <add>, %409, %cst_174 [1] : vector<16x128xf32> to vector<16xf32>
    %411 = vector.shape_cast %410 : vector<16xf32> to vector<16x1xf32>
    %cst_175 = arith.constant 1.280000e+02 : f32
    %412 = vector.broadcast %cst_175 : f32 to vector<16x1xf32>
    %413 = arith.divf %411, %412 : vector<16x1xf32>
    %cst_176 = arith.constant 9.99999996E-13 : f32
    %414 = vector.broadcast %cst_176 : f32 to vector<16x1xf32>
    %415 = arith.addf %413, %414 : vector<16x1xf32>
    %416 = math.rsqrt %415 : vector<16x1xf32>
    %417 = vector.broadcast %416 : vector<16x1xf32> to vector<16x128xf32>
    %418 = arith.mulf %408, %417 : vector<16x128xf32>
    %419 = vector.broadcast %400 : vector<1x128xf32> to vector<16x128xf32>
    %420 = arith.mulf %418, %419 : vector<16x128xf32>
    %421 = vector.broadcast %402 : vector<1x128xf32> to vector<16x128xf32>
    %422 = arith.addf %420, %421 : vector<16x128xf32>
    %423 = vector.extract_strided_slice %422 {offsets = [0, 0], sizes = [1, 128], strides = [1, 1]} : vector<16x128xf32> to vector<1x128xf32>
    %424 = vector.extract_strided_slice %422 {offsets = [8, 0], sizes = [1, 128], strides = [1, 1]} : vector<16x128xf32> to vector<1x128xf32>
    %425 = tpu.concatenate %423, %424 in 0 : vector<1x128xf32>, vector<1x128xf32> -> vector<2x128xf32>
    %426 = arith.truncf %425 : vector<2x128xf32> to vector<2x128xbf16>
    %c0_177 = arith.constant 0 : index
    %c0_178 = arith.constant 0 : index
    %c0_179 = arith.constant 0 : index
    %427 = vector.load %arg16[%c0_177, %c0_178, %c0_179] : memref<2x128x128xbf16, #tpu.memory_space<vmem>>, vector<1x128x128xbf16>
    %428 = vector.shape_cast %427 : vector<1x128x128xbf16> to vector<128x128xbf16>
    %cst_180 = arith.constant dense<0.000000e+00> : vector<2x128xf32>
    %429 = tpu.matmul %426, %428, %cst_180 {dimension_numbers = #tpu.dot_dimension_numbers<[1], [0], [0], [1], [0, 0, 1, 1], [], []>} : vector<2x128xbf16>, vector<128x128xbf16>, vector<2x128xf32> -> vector<2x128xf32>
    %c0_181 = arith.constant 0 : index
    %c0_182 = arith.constant 0 : index
    %c0_183 = arith.constant 0 : index
    %430 = vector.load %arg17[%c0_181, %c0_182, %c0_183] : memref<2x1x128xf32, #tpu.memory_space<vmem>>, vector<1x1x128xf32>
    %431 = vector.shape_cast %430 : vector<1x1x128xf32> to vector<1x128xf32>
    %432 = vector.broadcast %431 : vector<1x128xf32> to vector<2x128xf32>
    %433 = arith.addf %429, %432 : vector<2x128xf32>
    %434 = arith.negf %433 : vector<2x128xf32>
    %435 = math.exp %434 : vector<2x128xf32>
    %cst_184 = arith.constant 1.000000e+00 : f32
    %436 = vector.broadcast %cst_184 : f32 to vector<2x128xf32>
    %437 = arith.addf %436, %435 : vector<2x128xf32>
    %438 = arith.divf %436, %437 : vector<2x128xf32>
    %439 = arith.mulf %433, %438 : vector<2x128xf32>
    %440 = arith.truncf %439 : vector<2x128xf32> to vector<2x128xbf16>
    %c1_185 = arith.constant 1 : index
    %c0_186 = arith.constant 0 : index
    %c0_187 = arith.constant 0 : index
    %441 = vector.load %arg16[%c1_185, %c0_186, %c0_187] : memref<2x128x128xbf16, #tpu.memory_space<vmem>>, vector<1x128x128xbf16>
    %442 = vector.shape_cast %441 : vector<1x128x128xbf16> to vector<128x128xbf16>
    %cst_188 = arith.constant dense<0.000000e+00> : vector<2x128xf32>
    %443 = tpu.matmul %440, %442, %cst_188 {dimension_numbers = #tpu.dot_dimension_numbers<[1], [0], [0], [1], [0, 0, 1, 1], [], []>} : vector<2x128xbf16>, vector<128x128xbf16>, vector<2x128xf32> -> vector<2x128xf32>
    %c1_189 = arith.constant 1 : index
    %c0_190 = arith.constant 0 : index
    %c0_191 = arith.constant 0 : index
    %444 = vector.load %arg17[%c1_189, %c0_190, %c0_191] : memref<2x1x128xf32, #tpu.memory_space<vmem>>, vector<1x1x128xf32>
    %445 = vector.shape_cast %444 : vector<1x1x128xf32> to vector<1x128xf32>
    %446 = vector.broadcast %445 : vector<1x128xf32> to vector<2x128xf32>
    %447 = arith.addf %443, %446 : vector<2x128xf32>
    %448 = arith.negf %447 : vector<2x128xf32>
    %449 = math.exp %448 : vector<2x128xf32>
    %cst_192 = arith.constant 1.000000e+00 : f32
    %450 = vector.broadcast %cst_192 : f32 to vector<2x128xf32>
    %451 = arith.addf %450, %449 : vector<2x128xf32>
    %452 = arith.divf %450, %451 : vector<2x128xf32>
    %453 = arith.mulf %447, %452 : vector<2x128xf32>
    %c0_193 = arith.constant 0 : index
    %c0_194 = arith.constant 0 : index
    %454 = vector.load %arg18[%c0_193, %c0_194] : memref<1x128xf32, #tpu.memory_space<vmem>>, vector<1x128xf32>
    %455 = vector.broadcast %454 : vector<1x128xf32> to vector<2x128xf32>
    %456 = arith.mulf %453, %455 : vector<2x128xf32>
    %cst_195 = arith.constant dense<0.000000e+00> : vector<2xf32>
    %457 = vector.multi_reduction <add>, %456, %cst_195 [1] : vector<2x128xf32> to vector<2xf32>
    %458 = vector.shape_cast %457 : vector<2xf32> to vector<2x1xf32>
    %c0_196 = arith.constant 0 : index
    %c0_197 = arith.constant 0 : index
    %459 = vector.load %arg19[%c0_196, %c0_197] : memref<1x1xf32, #tpu.memory_space<vmem>>, vector<1x1xf32>
    %460 = vector.broadcast %459 : vector<1x1xf32> to vector<2x1xf32>
    %461 = arith.addf %458, %460 : vector<2x1xf32>
    %c0_198 = arith.constant 0 : index
    %c0_199 = arith.constant 0 : index
    %462 = vector.load %arg20[%c0_198, %c0_199] : memref<2x1xf32, #tpu.memory_space<vmem>>, vector<2x1xf32>
    tpu.vector_store %arg20[%c0_198, %c0_199], %461 {strides = array<i32>} : memref<2x1xf32, #tpu.memory_space<vmem>>, vector<2x1xf32>,
    return
  }
}

</mosaic_0001>

<llo_original>
// kernel: cloud_forward.1
$region0: #{cloud_forward.1}
  #allocation0 [shape = 'u32[]', space=smem, size = 0x4, offset = 0x4, fixed_abs, tag = 'smem constant byte address 0x4 - core index']
  #allocation1 [shape = 'u32[72,128]{1,0:T(1,128)}', space=vmem, size = 0x9000, scoped, tag = 'internal scratch']
  #allocation2 [shape = 'f32[16,128]{1,0:T(8,128)}', space=vmem, size = 0x2000, scoped, tag = 'scratch operand']
  #allocation3 [shape = 'f32[1,1]{1,0:T(1,128)S(1)}', space=vmem, size = 0x200, scoped, tag = 'scoped memory for cloud_forward.1']
  %s0 = inlined_call_operand.vmem [shape: f32[16,128], index: 0, kind: input, shape index: {}]
  %s1 = inlined_call_operand.vmem [shape: f32[2,8], index: 1, kind: input, shape index: {}]
  %s2 = inlined_call_operand.vmem [shape: f32[1,128], index: 2, kind: input, shape index: {}]
  %s3 = inlined_call_operand.vmem [shape: f32[1,128], index: 3, kind: input, shape index: {}]
  %s4 = inlined_call_operand.hbm [shape: bf16[2,128,384], index: 4, kind: input, shape index: {}]
  %s5 = inlined_call_operand.vmem [shape: f32[2,1,384], index: 5, kind: input, shape index: {}]
  %s6 = inlined_call_operand.vmem [shape: bf16[2,128,128], index: 6, kind: input, shape index: {}]
  %s7 = inlined_call_operand.vmem [shape: f32[2,1,128], index: 7, kind: input, shape index: {}]
  %s8 = inlined_call_operand.vmem [shape: f32[2,1,128], index: 8, kind: input, shape index: {}]
  %s9 = inlined_call_operand.vmem [shape: f32[2,1,128], index: 9, kind: input, shape index: {}]
  %s10 = inlined_call_operand.hbm [shape: bf16[2,128,512], index: 10, kind: input, shape index: {}]
  %s11 = inlined_call_operand.vmem [shape: f32[2,1,512], index: 11, kind: input, shape index: {}]
  %s12 = inlined_call_operand.hbm [shape: bf16[2,512,128], index: 12, kind: input, shape index: {}]
  %s13 = inlined_call_operand.vmem [shape: f32[2,1,128], index: 13, kind: input, shape index: {}]
  %s14 = inlined_call_operand.vmem [shape: f32[2,1,128], index: 14, kind: input, shape index: {}]
  %s15 = inlined_call_operand.vmem [shape: f32[2,1,128], index: 15, kind: input, shape index: {}]
  %s16 = inlined_call_operand.hbm [shape: bf16[2,128,128], index: 16, kind: input, shape index: {}]
  %s17 = inlined_call_operand.vmem [shape: f32[2,1,128], index: 17, kind: input, shape index: {}]
  %s18 = inlined_call_operand.vmem [shape: f32[1,128], index: 18, kind: input, shape index: {}]
  %s19 = inlined_call_operand.<no memory space> [shape: f32[1,1], index: 19, kind: input, shape index: {}]
  %s20 = inlined_call_operand.vmem [shape: f32[2,1], index: 20, kind: output, shape index: {}]
  %s21 = sld [smem:[#allocation0]]
  $region106: #{cloud_forward.1} parent=0
    _
  %s23 = ssub.s32 1, %s21
  %s24 = scalar_select 0, %s23, %s21
  %v25 = vstv %s19
  %26 = vst [vmem:[#allocation3] sm:$0x1] %v25
  $region1: #{cloud_forward.1} parent=0
    #allocation4 [shape = 'u8[196608]{0}', space=vmem, size = 0x30000, scoped, tag = 'input window, operand 4, single buffered']
    #allocation5 [shape = 's32[1]{0}', space=sflag, size = 0x4, scoped, tag = 'scoped memory for cloud_forward.1']
    #allocation6 [shape = 'u8[262144]{0}', space=vmem, size = 0x40000, scoped, tag = 'input window, operand 10, single buffered']
    #allocation7 [shape = 's32[1]{0}', space=sflag, size = 0x4, scoped, tag = 'scoped memory for cloud_forward.1']
    #allocation8 [shape = 'u8[262144]{0}', space=vmem, size = 0x40000, scoped, tag = 'input window, operand 12, single buffered']
    #allocation9 [shape = 'u8[65536]{0}', space=vmem, size = 0x10000, scoped, tag = 'input window, operand 16, single buffered']
    #allocation10 [shape = 's32[1]{0}', space=sflag, size = 0x4, scoped, tag = 'scoped memory for cloud_forward.1']
    %27 = vsyncpa [#allocation5], 0
    %28 = vsyncpa [#allocation7], 0
    %29 = vsyncpa [#allocation10], 0
    // Predicated region
    $region2: #{cloud_forward.1} parent=1 // pred_check
      _
    $region3: #{cloud_forward.1} parent=1 // pred_check_branch
      %31 = sbr.rel (0) target = $region5
    $region4: #{cloud_forward.1} parent=1 // pred_region
      _
    $region5: #{cloud_forward.1} parent=1 // pred_fallthru
      _
    // Predicated region
    $region6: #{cloud_forward.1} parent=1 // pred_check
      _
    $region7: #{cloud_forward.1} parent=1 // pred_check_branch
      %33 = sbr.rel (0) target = $region9
    $region8: #{cloud_forward.1} parent=1 // pred_region
      _
    $region9: #{cloud_forward.1} parent=1 // pred_fallthru
      _
    // Predicated region
    $region10: #{cloud_forward.1} parent=1 // pred_check
      _
    $region11: #{cloud_forward.1} parent=1 // pred_check_branch
      %35 = sbr.rel (0) target = $region13
    $region12: #{cloud_forward.1} parent=1 // pred_region
      _
    $region13: #{cloud_forward.1} parent=1 // pred_fallthru
      _
    // Predicated region
    $region14: #{cloud_forward.1} parent=1 // pred_check
      _
    $region15: #{cloud_forward.1} parent=1 // pred_check_branch
      %37 = sbr.rel (0) target = $region17
    $region16: #{cloud_forward.1} parent=1 // pred_region
      _
    $region17: #{cloud_forward.1} parent=1 // pred_fallthru
      _
    // Predicated region
    $region18: #{cloud_forward.1} parent=1 // pred_check
      _
    $region19: #{cloud_forward.1} parent=1 // pred_check_branch
      %39 = sbr.rel (0) target = $region21
    $region20: #{cloud_forward.1} parent=1 // pred_region
      %41 = vsyncadd [#allocation5], 0
      %s42 = sshll.u32 %s4, 4
      %s43 = int_to_ptr.hbm [resolvable:$true] %s42
      %s44 = sshll.u32 [#allocation4], 4
      %s45 = int_to_ptr.vmem [resolvable:$true] %s44
      %50 = dma.hbm_to_vmem [thread:$0]  %s43, 6144, %s45, [#allocation5], 192, 192, 12
    $region21: #{cloud_forward.1} parent=1 // pred_fallthru
      _
    // Predicated region
    $region22: #{cloud_forward.1} parent=1 // pred_check
      _
    $region23: #{cloud_forward.1} parent=1 // pred_check_branch
      %52 = sbr.rel (0) target = $region25
    $region24: #{cloud_forward.1} parent=1 // pred_region
      _
    $region25: #{cloud_forward.1} parent=1 // pred_fallthru
      _
    // Predicated region
    $region26: #{cloud_forward.1} parent=1 // pred_check
      _
    $region27: #{cloud_forward.1} parent=1 // pred_check_branch
      %54 = sbr.rel (0) target = $region29
    $region28: #{cloud_forward.1} parent=1 // pred_region
      _
    $region29: #{cloud_forward.1} parent=1 // pred_fallthru
      _
    // Predicated region
    $region30: #{cloud_forward.1} parent=1 // pred_check
      _
    $region31: #{cloud_forward.1} parent=1 // pred_check_branch
      %56 = sbr.rel (0) target = $region33
    $region32: #{cloud_forward.1} parent=1 // pred_region
      _
    $region33: #{cloud_forward.1} parent=1 // pred_fallthru
      _
    // Predicated region
    $region34: #{cloud_forward.1} parent=1 // pred_check
      _
    $region35: #{cloud_forward.1} parent=1 // pred_check_branch
      %58 = sbr.rel (0) target = $region37
    $region36: #{cloud_forward.1} parent=1 // pred_region
      _
    $region37: #{cloud_forward.1} parent=1 // pred_fallthru
      _
    // Predicated region
    $region38: #{cloud_forward.1} parent=1 // pred_check
      _
    $region39: #{cloud_forward.1} parent=1 // pred_check_branch
      %60 = sbr.rel (0) target = $region41
    $region40: #{cloud_forward.1} parent=1 // pred_region
      _
    $region41: #{cloud_forward.1} parent=1 // pred_fallthru
      _
    // Predicated region
    $region42: #{cloud_forward.1} parent=1 // pred_check
      _
    $region43: #{cloud_forward.1} parent=1 // pred_check_branch
      %62 = sbr.rel (0) target = $region45
    $region44: #{cloud_forward.1} parent=1 // pred_region
      %64 = vsyncadd [#allocation7], 0
      %s65 = sshll.u32 %s10, 4
      %s66 = int_to_ptr.hbm [resolvable:$true] %s65
      %s67 = sshll.u32 [#allocation6], 4
      %s68 = int_to_ptr.vmem [resolvable:$true] %s67
      %73 = dma.hbm_to_vmem [thread:$0]  %s66, 8192, %s68, [#allocation7], 256, 256, 16
    $region45: #{cloud_forward.1} parent=1 // pred_fallthru
      _
    // Predicated region
    $region46: #{cloud_forward.1} parent=1 // pred_check
      _
    $region47: #{cloud_forward.1} parent=1 // pred_check_branch
      %75 = sbr.rel (0) target = $region49
    $region48: #{cloud_forward.1} parent=1 // pred_region
      _
    $region49: #{cloud_forward.1} parent=1 // pred_fallthru
      _
    // Predicated region
    $region50: #{cloud_forward.1} parent=1 // pred_check
      _
    $region51: #{cloud_forward.1} parent=1 // pred_check_branch
      %77 = sbr.rel (0) target = $region53
    $region52: #{cloud_forward.1} parent=1 // pred_region
      %79 = vsyncadd [#allocation7], 0
      %s80 = sshll.u32 %s12, 4
      %s81 = int_to_ptr.hbm [resolvable:$true] %s80
      %s82 = sshll.u32 [#allocation8], 4
      %s83 = int_to_ptr.vmem [resolvable:$true] %s82
      %88 = dma.hbm_to_vmem [thread:$0]  %s81, 8192, %s83, [#allocation7], 64, 64, 4
    $region53: #{cloud_forward.1} parent=1 // pred_fallthru
      _
    // Predicated region
    $region54: #{cloud_forward.1} parent=1 // pred_check
      _
    $region55: #{cloud_forward.1} parent=1 // pred_check_branch
      %90 = sbr.rel (0) target = $region57
    $region56: #{cloud_forward.1} parent=1 // pred_region
      _
    $region57: #{cloud_forward.1} parent=1 // pred_fallthru
      _
    // Predicated region
    $region58: #{cloud_forward.1} parent=1 // pred_check
      _
    $region59: #{cloud_forward.1} parent=1 // pred_check_branch
      %92 = sbr.rel (0) target = $region61
    $region60: #{cloud_forward.1} parent=1 // pred_region
      _
    $region61: #{cloud_forward.1} parent=1 // pred_fallthru
      _
    // Predicated region
    $region62: #{cloud_forward.1} parent=1 // pred_check
      _
    $region63: #{cloud_forward.1} parent=1 // pred_check_branch
      %94 = sbr.rel (0) target = $region65
    $region64: #{cloud_forward.1} parent=1 // pred_region
      _
    $region65: #{cloud_forward.1} parent=1 // pred_fallthru
      _
    // Predicated region
    $region66: #{cloud_forward.1} parent=1 // pred_check
      _
    $region67: #{cloud_forward.1} parent=1 // pred_check_branch
      %96 = sbr.rel (0) target = $region69
    $region68: #{cloud_forward.1} parent=1 // pred_region
      %98 = vsyncadd [#allocation10], 0
      %s99 = sshll.u32 %s16, 4
      %s100 = int_to_ptr.hbm [resolvable:$true] %s99
      %s101 = sshll.u32 [#allocation9], 4
      %s102 = int_to_ptr.vmem [resolvable:$true] %s101
      %107 = dma.hbm_to_vmem [thread:$0]  %s100, 2048, %s102, [#allocation10], 64, 64, 4
    $region69: #{cloud_forward.1} parent=1 // pred_fallthru
      _
    // Predicated region
    $region70: #{cloud_forward.1} parent=1 // pred_check
      _
    $region71: #{cloud_forward.1} parent=1 // pred_check_branch
      %109 = sbr.rel (0) target = $region73
    $region72: #{cloud_forward.1} parent=1 // pred_region
      _
    $region73: #{cloud_forward.1} parent=1 // pred_fallthru
      _
    // Predicated region
    $region74: #{cloud_forward.1} parent=1 // pred_check
      _
    $region75: #{cloud_forward.1} parent=1 // pred_check_branch
      %111 = sbr.rel (0) target = $region77
    $region76: #{cloud_forward.1} parent=1 // pred_region
      _
    $region77: #{cloud_forward.1} parent=1 // pred_fallthru
      _
    // Predicated region
    $region78: #{cloud_forward.1} parent=1 // pred_check
      _
    $region79: #{cloud_forward.1} parent=1 // pred_check_branch
      %113 = sbr.rel (0) target = $region81
    $region80: #{cloud_forward.1} parent=1 // pred_region
      _
    $region81: #{cloud_forward.1} parent=1 // pred_fallthru
      _
    // Predicated region
    $region82: #{cloud_forward.1} parent=1 // pred_check
      _
    $region83: #{cloud_forward.1} parent=1 // pred_check_branch
      %115 = sbr.rel (0) target = $region85
    $region84: #{cloud_forward.1} parent=1 // pred_region
      %117 = dma.done [#allocation5], 6144
    $region85: #{cloud_forward.1} parent=1 // pred_fallthru
      _
    // Predicated region
    $region86: #{cloud_forward.1} parent=1 // pred_check
      _
    $region87: #{cloud_forward.1} parent=1 // pred_check_branch
      %119 = sbr.rel (0) target = $region89
    $region88: #{cloud_forward.1} parent=1 // pred_region
      %121 = dma.done [#allocation7], 8192
    $region89: #{cloud_forward.1} parent=1 // pred_fallthru
      _
    // Predicated region
    $region90: #{cloud_forward.1} parent=1 // pred_check
      _
    $region91: #{cloud_forward.1} parent=1 // pred_check_branch
      %123 = sbr.rel (0) target = $region93
    $region92: #{cloud_forward.1} parent=1 // pred_region
      %125 = dma.done [#allocation7], 8192
    $region93: #{cloud_forward.1} parent=1 // pred_fallthru
      _
    // Predicated region
    $region94: #{cloud_forward.1} parent=1 // pred_check
      _
    $region95: #{cloud_forward.1} parent=1 // pred_check_branch
      %127 = sbr.rel (0) target = $region97
    $region96: #{cloud_forward.1} parent=1 // pred_region
      %129 = dma.done [#allocation10], 2048
    $region97: #{cloud_forward.1} parent=1 // pred_fallthru
      _
    %v131 = vld [vmem:[%s0] sm:$0xff]
    %v132 = vld [vmem:[%s0 + $0x8] sm:$0xff]
    %v133 = vld [vmem:[%s2] sm:$0x1]
    %v134 = vld [vmem:[%s3] sm:$0x1]
    %135 = vadd.xlane.f32.xlu0 %v131
    %v136 = vpop.xlane.xlu0 %135
    %137 = vadd.xlane.f32.xlu0 %v132
    %v138 = vpop.xlane.xlu0 %137
    %v139 = vrcp.pop 128.0
    %v140 = vmul.f32 128.0, %v139
    %v141 = vsub.f32 1.0, %v140
    %v142 = vmul.f32 %v139, %v141
    %v143 = vadd.f32 %v139, %v142
    %vm144 = vweird.f32 %v139
    %v145 = vsel %vm144, %v139, %v143
    %v146 = vmul.f32 %v136, %v145
    %v147 = vmul.f32 %v138, %v145
    %v148 = vsub.f32 %v131, %v146
    %v149 = vsub.f32 %v132, %v147
    %v150 = vmul.f32 %v148, %v148
    %v151 = vmul.f32 %v149, %v149
    %152 = vadd.xlane.f32.xlu0 %v150
    %v153 = vpop.xlane.xlu0 %152
    %154 = vadd.xlane.f32.xlu0 %v151
    %v155 = vpop.xlane.xlu0 %154
    %v156 = vmul.f32 %v153, %v145
    %v157 = vmul.f32 %v155, %v145
    %v158 = vadd.f32 %v156, 1e-12
    %v159 = vadd.f32 %v157, 1e-12
    %v160 = vrsqrt.pop %v158
    %v161 = vmul.f32 %v160, %v158
    %v162 = vmul.f32 %v161, %v160
    %v163 = vmul.f32 0.5, %v162
    %v164 = vsub.f32 1.5, %v163
    %v165 = vmul.f32 %v160, %v164
    %vm166 = vweird.f32 %v158
    %vm167 = vweird.f32 %v160
    %vm168 = vmor %vm166, %vm167
    %v169 = vsel %vm168, %v160, %v165
    %v170 = vrsqrt.pop %v159
    %v171 = vmul.f32 %v170, %v159
    %v172 = vmul.f32 %v171, %v170
    %v173 = vmul.f32 0.5, %v172
    %v174 = vsub.f32 1.5, %v173
    %v175 = vmul.f32 %v170, %v174
    %vm176 = vweird.f32 %v159
    %vm177 = vweird.f32 %v170
    %vm178 = vmor %vm176, %vm177
    %v179 = vsel %vm178, %v170, %v175
    %v180 = vmul.f32 %v148, %v169
    %v181 = vmul.f32 %v149, %v179
    %v183 = vperm.slane %v133, 0
    %v185 = vmul.f32 %v180, %v183
    %v186 = vmul.f32 %v181, %v183
    %v188 = vperm.slane %v134, 0
    %v190 = vadd.f32 %v185, %v188
    %v191 = vadd.f32 %v186, %v188
    %v192 = vld [vmem:[%s1] sm:$0x1]
    %v193 = vperm.slane %v192, 0
    %v194 = vld [vmem:[%s1 + $0x1] sm:$0x1]
    %v195 = vperm.slane %v194, 0
    %v196 = vpack.c.bf16 %v191, %v190
    %v197 = vld [vmem:[#allocation4] sm:$0xff]
    %v198 = vld [vmem:[#allocation4 + $0x8] sm:$0xf]
    %v199 = vld [vmem:[#allocation4 + $0xc] sm:$0xff]
    %v200 = vld [vmem:[#allocation4 + $0x14] sm:$0xf]
    %v201 = vld [vmem:[#allocation4 + $0x18] sm:$0xff]
    %v202 = vld [vmem:[#allocation4 + $0x20] sm:$0xf]
    %v203 = vld [vmem:[#allocation4 + $0x24] sm:$0xff]
    %v204 = vld [vmem:[#allocation4 + $0x2c] sm:$0xf]
    %v205 = vld [vmem:[#allocation4 + $0x30] sm:$0xff]
    %v206 = vld [vmem:[#allocation4 + $0x38] sm:$0xf]
    %v207 = vld [vmem:[#allocation4 + $0x3c] sm:$0xff]
    %v208 = vld [vmem:[#allocation4 + $0x44] sm:$0xf]
    %v209 = vld [vmem:[#allocation4 + $0x48] sm:$0xff]
    %v210 = vld [vmem:[#allocation4 + $0x50] sm:$0xf]
    %v211 = vld [vmem:[#allocation4 + $0x54] sm:$0xff]
    %v212 = vld [vmem:[#allocation4 + $0x5c] sm:$0xf]
    %v213 = vld [vmem:[#allocation4 + $0x60] sm:$0xff]
    %v214 = vld [vmem:[#allocation4 + $0x68] sm:$0xf]
    %v215 = vld [vmem:[#allocation4 + $0x6c] sm:$0xff]
    %v216 = vld [vmem:[#allocation4 + $0x74] sm:$0xf]
    %v217 = vld [vmem:[#allocation4 + $0x78] sm:$0xff]
    %v218 = vld [vmem:[#allocation4 + $0x80] sm:$0xf]
    %v219 = vld [vmem:[#allocation4 + $0x84] sm:$0xff]
    %v220 = vld [vmem:[#allocation4 + $0x8c] sm:$0xf]
    %v221 = vld [vmem:[#allocation4 + $0x90] sm:$0xff]
    %v222 = vld [vmem:[#allocation4 + $0x98] sm:$0xf]
    %v223 = vld [vmem:[#allocation4 + $0x9c] sm:$0xff]
    %v224 = vld [vmem:[#allocation4 + $0xa4] sm:$0xf]
    %v225 = vld [vmem:[#allocation4 + $0xa8] sm:$0xff]
    %v226 = vld [vmem:[#allocation4 + $0xb0] sm:$0xf]
    %v227 = vld [vmem:[#allocation4 + $0xb4] sm:$0xff]
    %v228 = vld [vmem:[#allocation4 + $0xbc] sm:$0xf]
    %v229 = vld [vmem:[%s5] sm:$0x7]
    %v231 = vperm.slane %v229, 0
    %v232 = vperm.slane %v229, 1
    %v233 = vperm.slane %v229, 2
    %v269 = vunpack.c.l.b16 %v197
    %v270 = vunpack.c.h.b16 %v197
    %v271 = vunpack.c.l.b16 %v198
    %v272 = vunpack.c.l.b16 %v199
    %v273 = vunpack.c.h.b16 %v199
    %v274 = vunpack.c.l.b16 %v200
    %v275 = vunpack.c.l.b16 %v201
    %v276 = vunpack.c.h.b16 %v201
    %v277 = vunpack.c.l.b16 %v202
    %v278 = vunpack.c.l.b16 %v203
    %v279 = vunpack.c.h.b16 %v203
    %v280 = vunpack.c.l.b16 %v204
    %v281 = vunpack.c.l.b16 %v205
    %v282 = vunpack.c.h.b16 %v205
    %v283 = vunpack.c.l.b16 %v206
    %v284 = vunpack.c.l.b16 %v207
    %v285 = vunpack.c.h.b16 %v207
    %v286 = vunpack.c.l.b16 %v208
    %v287 = vunpack.c.l.b16 %v209
    %v288 = vunpack.c.h.b16 %v209
    %v289 = vunpack.c.l.b16 %v210
    %v290 = vunpack.c.l.b16 %v211
    %v291 = vunpack.c.h.b16 %v211
    %v292 = vunpack.c.l.b16 %v212
    %v293 = vunpack.c.l.b16 %v213
    %v294 = vunpack.c.h.b16 %v213
    %v295 = vunpack.c.l.b16 %v214
    %v296 = vunpack.c.l.b16 %v215
    %v297 = vunpack.c.h.b16 %v215
    %v298 = vunpack.c.l.b16 %v216
    %v299 = vunpack.c.l.b16 %v217
    %v300 = vunpack.c.h.b16 %v217
    %v301 = vunpack.c.l.b16 %v218
    %v302 = vunpack.c.l.b16 %v219
    %v303 = vunpack.c.h.b16 %v219
    %v304 = vunpack.c.l.b16 %v220
    %v305 = vunpack.c.l.b16 %v221
    %v306 = vunpack.c.h.b16 %v221
    %v307 = vunpack.c.l.b16 %v222
    %v308 = vunpack.c.l.b16 %v223
    %v309 = vunpack.c.h.b16 %v223
    %v310 = vunpack.c.l.b16 %v224
    %v311 = vunpack.c.l.b16 %v225
    %v312 = vunpack.c.h.b16 %v225
    %v313 = vunpack.c.l.b16 %v226
    %v314 = vunpack.c.l.b16 %v227
    %v315 = vunpack.c.h.b16 %v227
    %v316 = vunpack.c.l.b16 %v228
    %v317 = vpack.c.b16 %v272, %v269
    %v318 = vpack.c.b16 %v273, %v270
    %v319 = vpack.c.b16 %v274, %v271
    %v320 = vpack.c.b16 %v278, %v275
    %v321 = vpack.c.b16 %v279, %v276
    %v322 = vpack.c.b16 %v280, %v277
    %v323 = vpack.c.b16 %v284, %v281
    %v324 = vpack.c.b16 %v285, %v282
    %v325 = vpack.c.b16 %v286, %v283
    %v326 = vpack.c.b16 %v290, %v287
    %v327 = vpack.c.b16 %v291, %v288
    %v328 = vpack.c.b16 %v292, %v289
    %v329 = vpack.c.b16 %v296, %v293
    %v330 = vpack.c.b16 %v297, %v294
    %v331 = vpack.c.b16 %v298, %v295
    %v332 = vpack.c.b16 %v302, %v299
    %v333 = vpack.c.b16 %v303, %v300
    %v334 = vpack.c.b16 %v304, %v301
    %v335 = vpack.c.b16 %v308, %v305
    %v336 = vpack.c.b16 %v309, %v306
    %v337 = vpack.c.b16 %v310, %v307
    %v338 = vpack.c.b16 %v314, %v311
    %v339 = vpack.c.b16 %v315, %v312
    %v340 = vpack.c.b16 %v316, %v313
    %365 = vmatpush.bf16.msra.mxu0 %v338
    %366 = vmatpush.bf16.msra.mxu0 %v335
    %367 = vmatpush.bf16.msra.mxu0 %v332
    %368 = vmatpush.bf16.msra.mxu0 %v329
    %369 = vmatpush.bf16.msra.mxu0 %v326
    %370 = vmatpush.bf16.msra.mxu0 %v323
    %371 = vmatpush.bf16.msra.mxu0 %v320
    %372 = vmatpush.bf16.msra.mxu0 %v317
    %373 = vmatmul.bf16.gmra.mxu0 %v196
    %v374 = vpop.f32.mrf.mxu0
    %v375 = vadd.f32 %v231, %v374
    %v376 = vpop.f32.mrf.mxu0
    %v377 = vadd.f32 %v231, %v376
    %378 = vdwg.mxu0
    %379 = vmatpush.bf16.msra.mxu0 %v339
    %380 = vmatpush.bf16.msra.mxu0 %v336
    %381 = vmatpush.bf16.msra.mxu0 %v333
    %382 = vmatpush.bf16.msra.mxu0 %v330
    %383 = vmatpush.bf16.msra.mxu0 %v327
    %384 = vmatpush.bf16.msra.mxu0 %v324
    %385 = vmatpush.bf16.msra.mxu0 %v321
    %386 = vmatpush.bf16.msra.mxu0 %v318
    %387 = vmatmul.bf16.gmra.mxu0 %v196
    %v388 = vpop.f32.mrf.mxu0
    %v389 = vadd.f32 %v232, %v388
    %v390 = vpop.f32.mrf.mxu0
    %v391 = vadd.f32 %v232, %v390
    %392 = vdwg.mxu0
    %393 = vmatpush.bf16.msra.mxu0 %v340
    %394 = vmatpush.bf16.msra.mxu0 %v337
    %395 = vmatpush.bf16.msra.mxu0 %v334
    %396 = vmatpush.bf16.msra.mxu0 %v331
    %397 = vmatpush.bf16.msra.mxu0 %v328
    %398 = vmatpush.bf16.msra.mxu0 %v325
    %399 = vmatpush.bf16.msra.mxu0 %v322
    %400 = vmatpush.bf16.msra.mxu0 %v319
    %401 = vmatmul.bf16.gmra.mxu0 %v196
    %v402 = vpop.f32.mrf.mxu0
    %v403 = vadd.f32 %v233, %v402
    %v404 = vpop.f32.mrf.mxu0
    %v405 = vadd.f32 %v233, %v404
    %406 = vdwg.mxu0
    %v407 = vld [vmem:[%s6] sm:$0xf]
    %v408 = vld [vmem:[%s6 + $0x4] sm:$0xf]
    %v409 = vld [vmem:[%s6 + $0x8] sm:$0xf]
    %v410 = vld [vmem:[%s6 + $0xc] sm:$0xf]
    %v411 = vld [vmem:[%s6 + $0x10] sm:$0xf]
    %v412 = vld [vmem:[%s6 + $0x14] sm:$0xf]
    %v413 = vld [vmem:[%s6 + $0x18] sm:$0xf]
    %v414 = vld [vmem:[%s6 + $0x1c] sm:$0xf]
    %v415 = vld [vmem:[%s6 + $0x20] sm:$0xf]
    %v416 = vld [vmem:[%s6 + $0x24] sm:$0xf]
    %v417 = vld [vmem:[%s6 + $0x28] sm:$0xf]
    %v418 = vld [vmem:[%s6 + $0x2c] sm:$0xf]
    %v419 = vld [vmem:[%s6 + $0x30] sm:$0xf]
    %v420 = vld [vmem:[%s6 + $0x34] sm:$0xf]
    %v421 = vld [vmem:[%s6 + $0x38] sm:$0xf]
    %v422 = vld [vmem:[%s6 + $0x3c] sm:$0xf]
    %v423 = vpack.c.bf16 %v375, %v375
    %v424 = vpack.c.bf16 %v389, %v389
    %vm425 = vcmask 523264
    %v427 = vsel %vm425, %v423, 0
    %v430 = vsel %vm425, %v424, 0
    %432 = vmatpush.bf16.xpose.msra.mxu0 0
    %433 = vmatpush.bf16.xpose.msra.mxu0 0
    %434 = vmatpush.bf16.xpose.msra.mxu0 0
    %435 = vmatpush.bf16.xpose.msra.mxu0 0
    %436 = vmatpush.bf16.xpose.msra.mxu0 0
    %437 = vmatpush.bf16.xpose.msra.mxu0 0
    %438 = vmatpush.bf16.xpose.msra.mxu0 0
    %439 = vmatpush.bf16.xpose.msra.mxu0 %v430
    %440 = vmatmul.bf16.gmra.mxu0 %v427
    %v441 = vpop.f32.mrf.mxu0
    %v442 = vadd.f32 0.0, %v441
    %v443 = vpop.f32.mrf.mxu0
    %444 = vdwg.mxu0
    %v445 = vmul.f32 %v442, 0.125
    %v446 = vadd.f32 %v445, %v193
    %vm447 = vcmask 64512
    %v448 = vsel %vm447, %v446, -inf
    %449 = vmax.xlane.f32.xlu0 %v448
    %v450 = vpop.xlane.xlu0 %449
    %v451 = vsub.f32 %v446, %v450
    %v452 = vmul.f32 %v451, 1.442695
    %v453 = vpow.pop %v452
    %v454 = vsel %vm447, %v453, 0.0
    %455 = vadd.xlane.f32.xlu0 %v454
    %v456 = vpop.xlane.xlu0 %455
    %v457 = vrcp.pop %v456
    %v458 = vmul.f32 %v456, %v457
    %v459 = vsub.f32 1.0, %v458
    %v460 = vmul.f32 %v457, %v459
    %v461 = vadd.f32 %v457, %v460
    %vm462 = vweird.f32 %v456
    %vm463 = vweird.f32 %v457
    %vm464 = vmor %vm462, %vm463
    %v465 = vsel %vm464, %v457, %v461
    %v466 = vand.u32 2147483647, %v456
    %vm467 = vcmp.eq.f32.partialorder %v466, 8.507059e+37
    %v468 = vand.u32 %v456, 2147483648
    %v469 = vor.u32 1.1754944e-38, %v468
    %v470 = vsel %vm467, %v469, %v465
    %v471 = vmul.f32 %v453, %v470
    %v472 = vpack.c.bf16 %v471, %v471
    %v473 = vpack.c.bf16 %v403, %v403
    %v475 = vsel %vm447, %v472, 0
    %vm477 = vcmask 1043456
    %v479 = vsel %vm477, %v473, 0
    %481 = vmatpush.bf16.msra.mxu0 0
    %482 = vmatpush.bf16.msra.mxu0 0
    %483 = vmatpush.bf16.msra.mxu0 0
    %484 = vmatpush.bf16.msra.mxu0 0
    %485 = vmatpush.bf16.msra.mxu0 0
    %486 = vmatpush.bf16.msra.mxu0 0
    %487 = vmatpush.bf16.msra.mxu0 0
    %488 = vmatpush.bf16.msra.mxu0 %v479
    %489 = vmatmul.bf16.gmra.mxu0 %v475
    %v490 = vpop.f32.mrf.mxu0
    %v491 = vadd.f32 0.0, %v490
    %v492 = vpop.f32.mrf.mxu0
    %493 = vdwg.mxu0
    %v494 = vpack.c.bf16 %v491, %v491
    %496 = vrot.lane.b32.xlu0 %v423, 64
    %v497 = vpop.permute.xlu0 %496
    %499 = vrot.lane.b32.xlu0 %v424, 64
    %v500 = vpop.permute.xlu0 %499
    %v502 = vsel %vm425, %v497, 0
    %v505 = vsel %vm425, %v500, 0
    %507 = vmatpush.bf16.xpose.msra.mxu0 0
    %508 = vmatpush.bf16.xpose.msra.mxu0 0
    %509 = vmatpush.bf16.xpose.msra.mxu0 0
    %510 = vmatpush.bf16.xpose.msra.mxu0 0
    %511 = vmatpush.bf16.xpose.msra.mxu0 0
    %512 = vmatpush.bf16.xpose.msra.mxu0 0
    %513 = vmatpush.bf16.xpose.msra.mxu0 0
    %514 = vmatpush.bf16.xpose.msra.mxu0 %v505
    %515 = vmatmul.bf16.gmra.mxu0 %v502
    %v516 = vpop.f32.mrf.mxu0
    %v517 = vadd.f32 0.0, %v516
    %v518 = vpop.f32.mrf.mxu0
    %519 = vdwg.mxu0
    %v520 = vmul.f32 %v517, 0.125
    %v521 = vadd.f32 %v520, %v193
    %v522 = vsel %vm447, %v521, -inf
    %523 = vmax.xlane.f32.xlu0 %v522
    %v524 = vpop.xlane.xlu0 %523
    %v525 = vsub.f32 %v521, %v524
    %v526 = vmul.f32 %v525, 1.442695
    %v527 = vpow.pop %v526
    %v528 = vsel %vm447, %v527, 0.0
    %529 = vadd.xlane.f32.xlu0 %v528
    %v530 = vpop.xlane.xlu0 %529
    %v531 = vrcp.pop %v530
    %v532 = vmul.f32 %v530, %v531
    %v533 = vsub.f32 1.0, %v532
    %v534 = vmul.f32 %v531, %v533
    %v535 = vadd.f32 %v531, %v534
    %vm536 = vweird.f32 %v530
    %vm537 = vweird.f32 %v531
    %vm538 = vmor %vm536, %vm537
    %v539 = vsel %vm538, %v531, %v535
    %v540 = vand.u32 2147483647, %v530
    %vm541 = vcmp.eq.f32.partialorder %v540, 8.507059e+37
    %v542 = vand.u32 %v530, 2147483648
    %v543 = vor.u32 1.1754944e-38, %v542
    %v544 = vsel %vm541, %v543, %v539
    %v545 = vmul.f32 %v527, %v544
    %v546 = vpack.c.bf16 %v545, %v545
    %548 = vrot.lane.b32.xlu0 %v473, 64
    %v549 = vpop.permute.xlu0 %548
    %v551 = vsel %vm447, %v546, 0
    %v554 = vsel %vm477, %v549, 0
    %556 = vmatpush.bf16.msra.mxu0 0
    %557 = vmatpush.bf16.msra.mxu0 0
    %558 = vmatpush.bf16.msra.mxu0 0
    %559 = vmatpush.bf16.msra.mxu0 0
    %560 = vmatpush.bf16.msra.mxu0 0
    %561 = vmatpush.bf16.msra.mxu0 0
    %562 = vmatpush.bf16.msra.mxu0 0
    %563 = vmatpush.bf16.msra.mxu0 %v554
    %564 = vmatmul.bf16.gmra.mxu0 %v551
    %v565 = vpop.f32.mrf.mxu0
    %v566 = vadd.f32 0.0, %v565
    %v567 = vpop.f32.mrf.mxu0
    %568 = vdwg.mxu0
    %v569 = vpack.c.bf16 %v566, %v566
    %v578 = vunpack.c.l.b16 %v415
    %v579 = vunpack.c.l.b16 %v416
    %v580 = vunpack.c.l.b16 %v417
    %v581 = vunpack.c.l.b16 %v418
    %v582 = vunpack.c.l.b16 %v419
    %v583 = vunpack.c.l.b16 %v420
    %v584 = vunpack.c.l.b16 %v421
    %v585 = vunpack.c.l.b16 %v422
    %v586 = vpack.c.b16 %v579, %v578
    %v587 = vpack.c.b16 %v581, %v580
    %v588 = vpack.c.b16 %v583, %v582
    %v589 = vpack.c.b16 %v585, %v584
    %v595 = vsel %vm425, %v569, 0
    %597 = vmatpush.bf16.msra.mxu0 0
    %598 = vmatpush.bf16.msra.mxu0 0
    %599 = vmatpush.bf16.msra.mxu0 0
    %600 = vmatpush.bf16.msra.mxu0 0
    %601 = vmatpush.bf16.msra.mxu0 %v589
    %602 = vmatpush.bf16.msra.mxu0 %v588
    %603 = vmatpush.bf16.msra.mxu0 %v587
    %604 = vmatpush.bf16.msra.mxu0 %v586
    %605 = vmatmul.bf16.gmra.mxu0 %v595
    %v606 = vpop.f32.mrf.mxu0
    %v607 = vadd.f32 0.0, %v606
    %v608 = vpop.f32.mrf.mxu0
    %609 = vdwg.mxu0
    %v618 = vunpack.c.l.b16 %v407
    %v619 = vunpack.c.l.b16 %v408
    %v620 = vunpack.c.l.b16 %v409
    %v621 = vunpack.c.l.b16 %v410
    %v622 = vunpack.c.l.b16 %v411
    %v623 = vunpack.c.l.b16 %v412
    %v624 = vunpack.c.l.b16 %v413
    %v625 = vunpack.c.l.b16 %v414
    %v626 = vpack.c.b16 %v619, %v618
    %v627 = vpack.c.b16 %v621, %v620
    %v628 = vpack.c.b16 %v623, %v622
    %v629 = vpack.c.b16 %v625, %v624
    %v635 = vsel %vm425, %v494, 0
    %637 = vmatpush.bf16.msra.mxu0 0
    %638 = vmatpush.bf16.msra.mxu0 0
    %639 = vmatpush.bf16.msra.mxu0 0
    %640 = vmatpush.bf16.msra.mxu0 0
    %641 = vmatpush.bf16.msra.mxu0 %v629
    %642 = vmatpush.bf16.msra.mxu0 %v628
    %643 = vmatpush.bf16.msra.mxu0 %v627
    %644 = vmatpush.bf16.msra.mxu0 %v626
    %645 = vmatmul.bf16.gmra.mxu0 %v635
    %v646 = vpop.f32.mrf.mxu0
    %v647 = vadd.f32 %v607, %v646
    %v648 = vpop.f32.mrf.mxu0
    %649 = vdwg.mxu0
    %650 = vst [vmem:[#allocation2] sm:$0xff] %v647
    %v651 = vpack.c.bf16 %v377, %v377
    %v652 = vpack.c.bf16 %v391, %v391
    %v654 = vsel %vm425, %v651, 0
    %v657 = vsel %vm425, %v652, 0
    %659 = vmatpush.bf16.xpose.msra.mxu0 0
    %660 = vmatpush.bf16.xpose.msra.mxu0 0
    %661 = vmatpush.bf16.xpose.msra.mxu0 0
    %662 = vmatpush.bf16.xpose.msra.mxu0 0
    %663 = vmatpush.bf16.xpose.msra.mxu0 0
    %664 = vmatpush.bf16.xpose.msra.mxu0 0
    %665 = vmatpush.bf16.xpose.msra.mxu0 0
    %666 = vmatpush.bf16.xpose.msra.mxu0 %v657
    %667 = vmatmul.bf16.gmra.mxu0 %v654
    %v668 = vpop.f32.mrf.mxu0
    %v669 = vadd.f32 0.0, %v668
    %v670 = vpop.f32.mrf.mxu0
    %671 = vdwg.mxu0
    %v672 = vmul.f32 %v669, 0.125
    %v673 = vadd.f32 %v672, %v195
    %v674 = vsel %vm447, %v673, -inf
    %675 = vmax.xlane.f32.xlu0 %v674
    %v676 = vpop.xlane.xlu0 %675
    %v677 = vsub.f32 %v673, %v676
    %v678 = vmul.f32 %v677, 1.442695
    %v679 = vpow.pop %v678
    %v680 = vsel %vm447, %v679, 0.0
    %681 = vadd.xlane.f32.xlu0 %v680
    %v682 = vpop.xlane.xlu0 %681
    %v683 = vrcp.pop %v682
    %v684 = vmul.f32 %v682, %v683
    %v685 = vsub.f32 1.0, %v684
    %v686 = vmul.f32 %v683, %v685
    %v687 = vadd.f32 %v683, %v686
    %vm688 = vweird.f32 %v682
    %vm689 = vweird.f32 %v683
    %vm690 = vmor %vm688, %vm689
    %v691 = vsel %vm690, %v683, %v687
    %v692 = vand.u32 2147483647, %v682
    %vm693 = vcmp.eq.f32.partialorder %v692, 8.507059e+37
    %v694 = vand.u32 %v682, 2147483648
    %v695 = vor.u32 1.1754944e-38, %v694
    %v696 = vsel %vm693, %v695, %v691
    %v697 = vmul.f32 %v679, %v696
    %v698 = vpack.c.bf16 %v697, %v697
    %v699 = vpack.c.bf16 %v405, %v405
    %v701 = vsel %vm447, %v698, 0
    %v704 = vsel %vm477, %v699, 0
    %706 = vmatpush.bf16.msra.mxu0 0
    %707 = vmatpush.bf16.msra.mxu0 0
    %708 = vmatpush.bf16.msra.mxu0 0
    %709 = vmatpush.bf16.msra.mxu0 0
    %710 = vmatpush.bf16.msra.mxu0 0
    %711 = vmatpush.bf16.msra.mxu0 0
    %712 = vmatpush.bf16.msra.mxu0 0
    %713 = vmatpush.bf16.msra.mxu0 %v704
    %714 = vmatmul.bf16.gmra.mxu0 %v701
    %v715 = vpop.f32.mrf.mxu0
    %v716 = vadd.f32 0.0, %v715
    %v717 = vpop.f32.mrf.mxu0
    %718 = vdwg.mxu0
    %v719 = vpack.c.bf16 %v716, %v716
    %721 = vrot.lane.b32.xlu0 %v651, 64
    %v722 = vpop.permute.xlu0 %721
    %724 = vrot.lane.b32.xlu0 %v652, 64
    %v725 = vpop.permute.xlu0 %724
    %v727 = vsel %vm425, %v722, 0
    %v730 = vsel %vm425, %v725, 0
    %732 = vmatpush.bf16.xpose.msra.mxu0 0
    %733 = vmatpush.bf16.xpose.msra.mxu0 0
    %734 = vmatpush.bf16.xpose.msra.mxu0 0
    %735 = vmatpush.bf16.xpose.msra.mxu0 0
    %736 = vmatpush.bf16.xpose.msra.mxu0 0
    %737 = vmatpush.bf16.xpose.msra.mxu0 0
    %738 = vmatpush.bf16.xpose.msra.mxu0 0
    %739 = vmatpush.bf16.xpose.msra.mxu0 %v730
    %740 = vmatmul.bf16.gmra.mxu0 %v727
    %v741 = vpop.f32.mrf.mxu0
    %v742 = vadd.f32 0.0, %v741
    %v743 = vpop.f32.mrf.mxu0
    %744 = vdwg.mxu0
    %v745 = vmul.f32 %v742, 0.125
    %v746 = vadd.f32 %v745, %v195
    %v747 = vsel %vm447, %v746, -inf
    %748 = vmax.xlane.f32.xlu0 %v747
    %v749 = vpop.xlane.xlu0 %748
    %v750 = vsub.f32 %v746, %v749
    %v751 = vmul.f32 %v750, 1.442695
    %v752 = vpow.pop %v751
    %v753 = vsel %vm447, %v752, 0.0
    %754 = vadd.xlane.f32.xlu0 %v753
    %v755 = vpop.xlane.xlu0 %754
    %v756 = vrcp.pop %v755
    %v757 = vmul.f32 %v755, %v756
    %v758 = vsub.f32 1.0, %v757
    %v759 = vmul.f32 %v756, %v758
    %v760 = vadd.f32 %v756, %v759
    %vm761 = vweird.f32 %v755
    %vm762 = vweird.f32 %v756
    %vm763 = vmor %vm761, %vm762
    %v764 = vsel %vm763, %v756, %v760
    %v765 = vand.u32 2147483647, %v755
    %vm766 = vcmp.eq.f32.partialorder %v765, 8.507059e+37
    %v767 = vand.u32 %v755, 2147483648
    %v768 = vor.u32 1.1754944e-38, %v767
    %v769 = vsel %vm766, %v768, %v764
    %v770 = vmul.f32 %v752, %v769
    %v771 = vpack.c.bf16 %v770, %v770
    %773 = vrot.lane.b32.xlu0 %v699, 64
    %v774 = vpop.permute.xlu0 %773
    %v776 = vsel %vm447, %v771, 0
    %v779 = vsel %vm477, %v774, 0
    %781 = vmatpush.bf16.msra.mxu0 0
    %782 = vmatpush.bf16.msra.mxu0 0
    %783 = vmatpush.bf16.msra.mxu0 0
    %784 = vmatpush.bf16.msra.mxu0 0
    %785 = vmatpush.bf16.msra.mxu0 0
    %786 = vmatpush.bf16.msra.mxu0 0
    %787 = vmatpush.bf16.msra.mxu0 0
    %788 = vmatpush.bf16.msra.mxu0 %v779
    %789 = vmatmul.bf16.gmra.mxu0 %v776
    %v790 = vpop.f32.mrf.mxu0
    %v791 = vadd.f32 0.0, %v790
    %v792 = vpop.f32.mrf.mxu0
    %793 = vdwg.mxu0
    %v794 = vpack.c.bf16 %v791, %v791
    %v796 = vsel %vm425, %v794, 0
    %798 = vmatpush.bf16.msra.mxu0 0
    %799 = vmatpush.bf16.msra.mxu0 0
    %800 = vmatpush.bf16.msra.mxu0 0
    %801 = vmatpush.bf16.msra.mxu0 0
    %802 = vmatpush.bf16.msra.mxu0 %v589
    %803 = vmatpush.bf16.msra.mxu0 %v588
    %804 = vmatpush.bf16.msra.mxu0 %v587
    %805 = vmatpush.bf16.msra.mxu0 %v586
    %806 = vmatmul.bf16.gmra.mxu0 %v796
    %v807 = vpop.f32.mrf.mxu0
    %v808 = vadd.f32 0.0, %v807
    %v809 = vpop.f32.mrf.mxu0
    %810 = vdwg.mxu0
    %v812 = vsel %vm425, %v719, 0
    %814 = vmatpush.bf16.msra.mxu0 0
    %815 = vmatpush.bf16.msra.mxu0 0
    %816 = vmatpush.bf16.msra.mxu0 0
    %817 = vmatpush.bf16.msra.mxu0 0
    %818 = vmatpush.bf16.msra.mxu0 %v629
    %819 = vmatpush.bf16.msra.mxu0 %v628
    %820 = vmatpush.bf16.msra.mxu0 %v627
    %821 = vmatpush.bf16.msra.mxu0 %v626
    %822 = vmatmul.bf16.gmra.mxu0 %v812
    %v823 = vpop.f32.mrf.mxu0
    %v824 = vadd.f32 %v808, %v823
    %v825 = vpop.f32.mrf.mxu0
    %826 = vdwg.mxu0
    %827 = vst [vmem:[#allocation2 + $0x8] sm:$0xff] %v824
    %v828 = vld [vmem:[#allocation2] sm:$0xff]
    %v829 = vld [vmem:[#allocation2 + $0x8] sm:$0xff]
    %v830 = vld [vmem:[%s7] sm:$0x1]
    %v832 = vperm.slane %v830, 0
    %v834 = vadd.f32 %v828, %v832
    %v835 = vadd.f32 %v829, %v832
    %v836 = vadd.f32 %v834, %v190
    %v837 = vadd.f32 %v835, %v191
    %v838 = vld [vmem:[%s8] sm:$0x1]
    %v839 = vld [vmem:[%s9] sm:$0x1]
    %840 = vadd.xlane.f32.xlu0 %v836
    %v841 = vpop.xlane.xlu0 %840
    %842 = vadd.xlane.f32.xlu0 %v837
    %v843 = vpop.xlane.xlu0 %842
    %v844 = vmul.f32 %v841, %v145
    %v845 = vmul.f32 %v843, %v145
    %v846 = vsub.f32 %v836, %v844
    %v847 = vsub.f32 %v837, %v845
    %v848 = vmul.f32 %v846, %v846
    %v849 = vmul.f32 %v847, %v847
    %850 = vadd.xlane.f32.xlu0 %v848
    %v851 = vpop.xlane.xlu0 %850
    %852 = vadd.xlane.f32.xlu0 %v849
    %v853 = vpop.xlane.xlu0 %852
    %v854 = vmul.f32 %v851, %v145
    %v855 = vmul.f32 %v853, %v145
    %v856 = vadd.f32 %v854, 1e-12
    %v857 = vadd.f32 %v855, 1e-12
    %v858 = vrsqrt.pop %v856
    %v859 = vmul.f32 %v858, %v856
    %v860 = vmul.f32 %v859, %v858
    %v861 = vmul.f32 0.5, %v860
    %v862 = vsub.f32 1.5, %v861
    %v863 = vmul.f32 %v858, %v862
    %vm864 = vweird.f32 %v856
    %vm865 = vweird.f32 %v858
    %vm866 = vmor %vm864, %vm865
    %v867 = vsel %vm866, %v858, %v863
    %v868 = vrsqrt.pop %v857
    %v869 = vmul.f32 %v868, %v857
    %v870 = vmul.f32 %v869, %v868
    %v871 = vmul.f32 0.5, %v870
    %v872 = vsub.f32 1.5, %v871
    %v873 = vmul.f32 %v868, %v872
    %vm874 = vweird.f32 %v857
    %vm875 = vweird.f32 %v868
    %vm876 = vmor %vm874, %vm875
    %v877 = vsel %vm876, %v868, %v873
    %v878 = vmul.f32 %v846, %v867
    %v879 = vmul.f32 %v847, %v877
    %v881 = vperm.slane %v838, 0
    %v883 = vmul.f32 %v878, %v881
    %v884 = vmul.f32 %v879, %v881
    %v886 = vperm.slane %v839, 0
    %v888 = vadd.f32 %v883, %v886
    %v889 = vadd.f32 %v884, %v886
    %v890 = vpack.c.bf16 %v889, %v888
    %v891 = vld [vmem:[#allocation6] sm:$0xff]
    %v892 = vld [vmem:[#allocation6 + $0x8] sm:$0xff]
    %v893 = vld [vmem:[#allocation6 + $0x10] sm:$0xff]
    %v894 = vld [vmem:[#allocation6 + $0x18] sm:$0xff]
    %v895 = vld [vmem:[#allocation6 + $0x20] sm:$0xff]
    %v896 = vld [vmem:[#allocation6 + $0x28] sm:$0xff]
    %v897 = vld [vmem:[#allocation6 + $0x30] sm:$0xff]
    %v898 = vld [vmem:[#allocation6 + $0x38] sm:$0xff]
    %v899 = vld [vmem:[#allocation6 + $0x40] sm:$0xff]
    %v900 = vld [vmem:[#allocation6 + $0x48] sm:$0xff]
    %v901 = vld [vmem:[#allocation6 + $0x50] sm:$0xff]
    %v902 = vld [vmem:[#allocation6 + $0x58] sm:$0xff]
    %v903 = vld [vmem:[#allocation6 + $0x60] sm:$0xff]
    %v904 = vld [vmem:[#allocation6 + $0x68] sm:$0xff]
    %v905 = vld [vmem:[#allocation6 + $0x70] sm:$0xff]
    %v906 = vld [vmem:[#allocation6 + $0x78] sm:$0xff]
    %v907 = vld [vmem:[#allocation6 + $0x80] sm:$0xff]
    %v908 = vld [vmem:[#allocation6 + $0x88] sm:$0xff]
    %v909 = vld [vmem:[#allocation6 + $0x90] sm:$0xff]
    %v910 = vld [vmem:[#allocation6 + $0x98] sm:$0xff]
    %v911 = vld [vmem:[#allocation6 + $0xa0] sm:$0xff]
    %v912 = vld [vmem:[#allocation6 + $0xa8] sm:$0xff]
    %v913 = vld [vmem:[#allocation6 + $0xb0] sm:$0xff]
    %v914 = vld [vmem:[#allocation6 + $0xb8] sm:$0xff]
    %v915 = vld [vmem:[#allocation6 + $0xc0] sm:$0xff]
    %v916 = vld [vmem:[#allocation6 + $0xc8] sm:$0xff]
    %v917 = vld [vmem:[#allocation6 + $0xd0] sm:$0xff]
    %v918 = vld [vmem:[#allocation6 + $0xd8] sm:$0xff]
    %v919 = vld [vmem:[#allocation6 + $0xe0] sm:$0xff]
    %v920 = vld [vmem:[#allocation6 + $0xe8] sm:$0xff]
    %v921 = vld [vmem:[#allocation6 + $0xf0] sm:$0xff]
    %v922 = vld [vmem:[#allocation6 + $0xf8] sm:$0xff]
    %v923 = vld [vmem:[%s11] sm:$0xf]
    %v925 = vperm.slane %v923, 0
    %v926 = vperm.slane %v923, 1
    %v927 = vperm.slane %v923, 2
    %v928 = vperm.slane %v923, 3
    %v965 = vunpack.c.l.b16 %v891
    %v966 = vunpack.c.h.b16 %v891
    %v967 = vunpack.c.l.b16 %v892
    %v968 = vunpack.c.h.b16 %v892
    %v969 = vunpack.c.l.b16 %v893
    %v970 = vunpack.c.h.b16 %v893
    %v971 = vunpack.c.l.b16 %v894
    %v972 = vunpack.c.h.b16 %v894
    %v973 = vunpack.c.l.b16 %v895
    %v974 = vunpack.c.h.b16 %v895
    %v975 = vunpack.c.l.b16 %v896
    %v976 = vunpack.c.h.b16 %v896
    %v977 = vunpack.c.l.b16 %v897
    %v978 = vunpack.c.h.b16 %v897
    %v979 = vunpack.c.l.b16 %v898
    %v980 = vunpack.c.h.b16 %v898
    %v981 = vunpack.c.l.b16 %v899
    %v982 = vunpack.c.h.b16 %v899
    %v983 = vunpack.c.l.b16 %v900
    %v984 = vunpack.c.h.b16 %v900
    %v985 = vunpack.c.l.b16 %v901
    %v986 = vunpack.c.h.b16 %v901
    %v987 = vunpack.c.l.b16 %v902
    %v988 = vunpack.c.h.b16 %v902
    %v989 = vunpack.c.l.b16 %v903
    %v990 = vunpack.c.h.b16 %v903
    %v991 = vunpack.c.l.b16 %v904
    %v992 = vunpack.c.h.b16 %v904
    %v993 = vunpack.c.l.b16 %v905
    %v994 = vunpack.c.h.b16 %v905
    %v995 = vunpack.c.l.b16 %v906
    %v996 = vunpack.c.h.b16 %v906
    %v997 = vunpack.c.l.b16 %v907
    %v998 = vunpack.c.h.b16 %v907
    %v999 = vunpack.c.l.b16 %v908
    %v1000 = vunpack.c.h.b16 %v908
    %v1001 = vunpack.c.l.b16 %v909
    %v1002 = vunpack.c.h.b16 %v909
    %v1003 = vunpack.c.l.b16 %v910
    %v1004 = vunpack.c.h.b16 %v910
    %v1005 = vunpack.c.l.b16 %v911
    %v1006 = vunpack.c.h.b16 %v911
    %v1007 = vunpack.c.l.b16 %v912
    %v1008 = vunpack.c.h.b16 %v912
    %v1009 = vunpack.c.l.b16 %v913
    %v1010 = vunpack.c.h.b16 %v913
    %v1011 = vunpack.c.l.b16 %v914
    %v1012 = vunpack.c.h.b16 %v914
    %v1013 = vunpack.c.l.b16 %v915
    %v1014 = vunpack.c.h.b16 %v915
    %v1015 = vunpack.c.l.b16 %v916
    %v1016 = vunpack.c.h.b16 %v916
    %v1017 = vunpack.c.l.b16 %v917
    %v1018 = vunpack.c.h.b16 %v917
    %v1019 = vunpack.c.l.b16 %v918
    %v1020 = vunpack.c.h.b16 %v918
    %v1021 = vunpack.c.l.b16 %v919
    %v1022 = vunpack.c.h.b16 %v919
    %v1023 = vunpack.c.l.b16 %v920
    %v1024 = vunpack.c.h.b16 %v920
    %v1025 = vunpack.c.l.b16 %v921
    %v1026 = vunpack.c.h.b16 %v921
    %v1027 = vunpack.c.l.b16 %v922
    %v1028 = vunpack.c.h.b16 %v922
    %v1029 = vpack.c.b16 %v969, %v965
    %v1030 = vpack.c.b16 %v970, %v966
    %v1031 = vpack.c.b16 %v971, %v967
    %v1032 = vpack.c.b16 %v972, %v968
    %v1033 = vpack.c.b16 %v977, %v973
    %v1034 = vpack.c.b16 %v978, %v974
    %v1035 = vpack.c.b16 %v979, %v975
    %v1036 = vpack.c.b16 %v980, %v976
    %v1037 = vpack.c.b16 %v985, %v981
    %v1038 = vpack.c.b16 %v986, %v982
    %v1039 = vpack.c.b16 %v987, %v983
    %v1040 = vpack.c.b16 %v988, %v984
    %v1041 = vpack.c.b16 %v993, %v989
    %v1042 = vpack.c.b16 %v994, %v990
    %v1043 = vpack.c.b16 %v995, %v991
    %v1044 = vpack.c.b16 %v996, %v992
    %v1045 = vpack.c.b16 %v1001, %v997
    %v1046 = vpack.c.b16 %v1002, %v998
    %v1047 = vpack.c.b16 %v1003, %v999
    %v1048 = vpack.c.b16 %v1004, %v1000
    %v1049 = vpack.c.b16 %v1009, %v1005
    %v1050 = vpack.c.b16 %v1010, %v1006
    %v1051 = vpack.c.b16 %v1011, %v1007
    %v1052 = vpack.c.b16 %v1012, %v1008
    %v1053 = vpack.c.b16 %v1017, %v1013
    %v1054 = vpack.c.b16 %v1018, %v1014
    %v1055 = vpack.c.b16 %v1019, %v1015
    %v1056 = vpack.c.b16 %v1020, %v1016
    %v1057 = vpack.c.b16 %v1025, %v1021
    %v1058 = vpack.c.b16 %v1026, %v1022
    %v1059 = vpack.c.b16 %v1027, %v1023
    %v1060 = vpack.c.b16 %v1028, %v1024
    %1093 = vmatpush.bf16.msra.mxu0 %v1057
    %1094 = vmatpush.bf16.msra.mxu0 %v1053
    %1095 = vmatpush.bf16.msra.mxu0 %v1049
    %1096 = vmatpush.bf16.msra.mxu0 %v1045
    %1097 = vmatpush.bf16.msra.mxu0 %v1041
    %1098 = vmatpush.bf16.msra.mxu0 %v1037
    %1099 = vmatpush.bf16.msra.mxu0 %v1033
    %1100 = vmatpush.bf16.msra.mxu0 %v1029
    %1101 = vmatmul.bf16.gmra.mxu0 %v890
    %v1102 = vpop.f32.mrf.mxu0
    %v1103 = vadd.f32 %v925, %v1102
    %v1104 = vpop.f32.mrf.mxu0
    %v1105 = vadd.f32 %v925, %v1104
    %1106 = vdwg.mxu0
    %1107 = vmatpush.bf16.msra.mxu0 %v1058
    %1108 = vmatpush.bf16.msra.mxu0 %v1054
    %1109 = vmatpush.bf16.msra.mxu0 %v1050
    %1110 = vmatpush.bf16.msra.mxu0 %v1046
    %1111 = vmatpush.bf16.msra.mxu0 %v1042
    %1112 = vmatpush.bf16.msra.mxu0 %v1038
    %1113 = vmatpush.bf16.msra.mxu0 %v1034
    %1114 = vmatpush.bf16.msra.mxu0 %v1030
    %1115 = vmatmul.bf16.gmra.mxu0 %v890
    %v1116 = vpop.f32.mrf.mxu0
    %v1117 = vadd.f32 %v926, %v1116
    %v1118 = vpop.f32.mrf.mxu0
    %v1119 = vadd.f32 %v926, %v1118
    %1120 = vdwg.mxu0
    %1121 = vmatpush.bf16.msra.mxu0 %v1059
    %1122 = vmatpush.bf16.msra.mxu0 %v1055
    %1123 = vmatpush.bf16.msra.mxu0 %v1051
    %1124 = vmatpush.bf16.msra.mxu0 %v1047
    %1125 = vmatpush.bf16.msra.mxu0 %v1043
    %1126 = vmatpush.bf16.msra.mxu0 %v1039
    %1127 = vmatpush.bf16.msra.mxu0 %v1035
    %1128 = vmatpush.bf16.msra.mxu0 %v1031
    %1129 = vmatmul.bf16.gmra.mxu0 %v890
    %v1130 = vpop.f32.mrf.mxu0
    %v1131 = vadd.f32 %v927, %v1130
    %v1132 = vpop.f32.mrf.mxu0
    %v1133 = vadd.f32 %v927, %v1132
    %1134 = vdwg.mxu0
    %1135 = vmatpush.bf16.msra.mxu0 %v1060
    %1136 = vmatpush.bf16.msra.mxu0 %v1056
    %1137 = vmatpush.bf16.msra.mxu0 %v1052
    %1138 = vmatpush.bf16.msra.mxu0 %v1048
    %1139 = vmatpush.bf16.msra.mxu0 %v1044
    %1140 = vmatpush.bf16.msra.mxu0 %v1040
    %1141 = vmatpush.bf16.msra.mxu0 %v1036
    %1142 = vmatpush.bf16.msra.mxu0 %v1032
    %1143 = vmatmul.bf16.gmra.mxu0 %v890
    %v1144 = vpop.f32.mrf.mxu0
    %v1145 = vadd.f32 %v928, %v1144
    %v1146 = vpop.f32.mrf.mxu0
    %v1147 = vadd.f32 %v928, %v1146
    %1148 = vdwg.mxu0
    %v1149 = vmul.f32 %v1103, 0.5
    %v1150 = vmul.f32 %v1117, 0.5
    %v1151 = vmul.f32 %v1131, 0.5
    %v1152 = vmul.f32 %v1145, 0.5
    %v1153 = vmul.f32 %v1105, 0.5
    %v1154 = vmul.f32 %v1119, 0.5
    %v1155 = vmul.f32 %v1133, 0.5
    %v1156 = vmul.f32 %v1147, 0.5
    %v1157 = vmul.f32 %v1103, 0.044715
    %v1158 = vmul.f32 %v1117, 0.044715
    %v1159 = vmul.f32 %v1131, 0.044715
    %v1160 = vmul.f32 %v1145, 0.044715
    %v1161 = vmul.f32 %v1105, 0.044715
    %v1162 = vmul.f32 %v1119, 0.044715
    %v1163 = vmul.f32 %v1133, 0.044715
    %v1164 = vmul.f32 %v1147, 0.044715
    %v1165 = vmul.f32 %v1157, %v1103
    %v1166 = vmul.f32 %v1158, %v1117
    %v1167 = vmul.f32 %v1159, %v1131
    %v1168 = vmul.f32 %v1160, %v1145
    %v1169 = vmul.f32 %v1161, %v1105
    %v1170 = vmul.f32 %v1162, %v1119
    %v1171 = vmul.f32 %v1163, %v1133
    %v1172 = vmul.f32 %v1164, %v1147
    %v1173 = vmul.f32 %v1165, %v1103
    %v1174 = vmul.f32 %v1166, %v1117
    %v1175 = vmul.f32 %v1167, %v1131
    %v1176 = vmul.f32 %v1168, %v1145
    %v1177 = vmul.f32 %v1169, %v1105
    %v1178 = vmul.f32 %v1170, %v1119
    %v1179 = vmul.f32 %v1171, %v1133
    %v1180 = vmul.f32 %v1172, %v1147
    %v1181 = vadd.f32 %v1103, %v1173
    %v1182 = vadd.f32 %v1117, %v1174
    %v1183 = vadd.f32 %v1131, %v1175
    %v1184 = vadd.f32 %v1145, %v1176
    %v1185 = vadd.f32 %v1105, %v1177
    %v1186 = vadd.f32 %v1119, %v1178
    %v1187 = vadd.f32 %v1133, %v1179
    %v1188 = vadd.f32 %v1147, %v1180
    %v1189 = vmul.f32 %v1181, 0.7978846
    %v1190 = vmul.f32 %v1182, 0.7978846
    %v1191 = vmul.f32 %v1183, 0.7978846
    %v1192 = vmul.f32 %v1184, 0.7978846
    %v1193 = vmul.f32 %v1185, 0.7978846
    %v1194 = vmul.f32 %v1186, 0.7978846
    %v1195 = vmul.f32 %v1187, 0.7978846
    %v1196 = vmul.f32 %v1188, 0.7978846
    %v1197 = vtanh.pop %v1189
    %v1198 = vtanh.pop %v1190
    %v1199 = vtanh.pop %v1191
    %v1200 = vtanh.pop %v1192
    %v1201 = vtanh.pop %v1193
    %v1202 = vtanh.pop %v1194
    %v1203 = vtanh.pop %v1195
    %v1204 = vtanh.pop %v1196
    %v1205 = vadd.f32 %v1197, 1.0
    %v1206 = vadd.f32 %v1198, 1.0
    %v1207 = vadd.f32 %v1199, 1.0
    %v1208 = vadd.f32 %v1200, 1.0
    %v1209 = vadd.f32 %v1201, 1.0
    %v1210 = vadd.f32 %v1202, 1.0
    %v1211 = vadd.f32 %v1203, 1.0
    %v1212 = vadd.f32 %v1204, 1.0
    %v1213 = vmul.f32 %v1149, %v1205
    %v1214 = vmul.f32 %v1150, %v1206
    %v1215 = vmul.f32 %v1151, %v1207
    %v1216 = vmul.f32 %v1152, %v1208
    %v1217 = vmul.f32 %v1153, %v1209
    %v1218 = vmul.f32 %v1154, %v1210
    %v1219 = vmul.f32 %v1155, %v1211
    %v1220 = vmul.f32 %v1156, %v1212
    %v1221 = vpack.c.bf16 %v1217, %v1213
    %v1222 = vpack.c.bf16 %v1218, %v1214
    %v1223 = vpack.c.bf16 %v1219, %v1215
    %v1224 = vpack.c.bf16 %v1220, %v1216
    %v1225 = vld [vmem:[#allocation8] sm:$0xf]
    %v1226 = vld [vmem:[#allocation8 + $0x4] sm:$0xf]
    %v1227 = vld [vmem:[#allocation8 + $0x8] sm:$0xf]
    %v1228 = vld [vmem:[#allocation8 + $0xc] sm:$0xf]
    %v1229 = vld [vmem:[#allocation8 + $0x10] sm:$0xf]
    %v1230 = vld [vmem:[#allocation8 + $0x14] sm:$0xf]
    %v1231 = vld [vmem:[#allocation8 + $0x18] sm:$0xf]
    %v1232 = vld [vmem:[#allocation8 + $0x1c] sm:$0xf]
    %v1233 = vld [vmem:[#allocation8 + $0x20] sm:$0xf]
    %v1234 = vld [vmem:[#allocation8 + $0x24] sm:$0xf]
    %v1235 = vld [vmem:[#allocation8 + $0x28] sm:$0xf]
    %v1236 = vld [vmem:[#allocation8 + $0x2c] sm:$0xf]
    %v1237 = vld [vmem:[#allocation8 + $0x30] sm:$0xf]
    %v1238 = vld [vmem:[#allocation8 + $0x34] sm:$0xf]
    %v1239 = vld [vmem:[#allocation8 + $0x38] sm:$0xf]
    %v1240 = vld [vmem:[#allocation8 + $0x3c] sm:$0xf]
    %v1241 = vld [vmem:[#allocation8 + $0x40] sm:$0xf]
    %v1242 = vld [vmem:[#allocation8 + $0x44] sm:$0xf]
    %v1243 = vld [vmem:[#allocation8 + $0x48] sm:$0xf]
    %v1244 = vld [vmem:[#allocation8 + $0x4c] sm:$0xf]
    %v1245 = vld [vmem:[#allocation8 + $0x50] sm:$0xf]
    %v1246 = vld [vmem:[#allocation8 + $0x54] sm:$0xf]
    %v1247 = vld [vmem:[#allocation8 + $0x58] sm:$0xf]
    %v1248 = vld [vmem:[#allocation8 + $0x5c] sm:$0xf]
    %v1249 = vld [vmem:[#allocation8 + $0x60] sm:$0xf]
    %v1250 = vld [vmem:[#allocation8 + $0x64] sm:$0xf]
    %v1251 = vld [vmem:[#allocation8 + $0x68] sm:$0xf]
    %v1252 = vld [vmem:[#allocation8 + $0x6c] sm:$0xf]
    %v1253 = vld [vmem:[#allocation8 + $0x70] sm:$0xf]
    %v1254 = vld [vmem:[#allocation8 + $0x74] sm:$0xf]
    %v1255 = vld [vmem:[#allocation8 + $0x78] sm:$0xf]
    %v1256 = vld [vmem:[#allocation8 + $0x7c] sm:$0xf]
    %v1257 = vld [vmem:[#allocation8 + $0x80] sm:$0xf]
    %v1258 = vld [vmem:[#allocation8 + $0x84] sm:$0xf]
    %v1259 = vld [vmem:[#allocation8 + $0x88] sm:$0xf]
    %v1260 = vld [vmem:[#allocation8 + $0x8c] sm:$0xf]
    %v1261 = vld [vmem:[#allocation8 + $0x90] sm:$0xf]
    %v1262 = vld [vmem:[#allocation8 + $0x94] sm:$0xf]
    %v1263 = vld [vmem:[#allocation8 + $0x98] sm:$0xf]
    %v1264 = vld [vmem:[#allocation8 + $0x9c] sm:$0xf]
    %v1265 = vld [vmem:[#allocation8 + $0xa0] sm:$0xf]
    %v1266 = vld [vmem:[#allocation8 + $0xa4] sm:$0xf]
    %v1267 = vld [vmem:[#allocation8 + $0xa8] sm:$0xf]
    %v1268 = vld [vmem:[#allocation8 + $0xac] sm:$0xf]
    %v1269 = vld [vmem:[#allocation8 + $0xb0] sm:$0xf]
    %v1270 = vld [vmem:[#allocation8 + $0xb4] sm:$0xf]
    %v1271 = vld [vmem:[#allocation8 + $0xb8] sm:$0xf]
    %v1272 = vld [vmem:[#allocation8 + $0xbc] sm:$0xf]
    %v1273 = vld [vmem:[#allocation8 + $0xc0] sm:$0xf]
    %v1274 = vld [vmem:[#allocation8 + $0xc4] sm:$0xf]
    %v1275 = vld [vmem:[#allocation8 + $0xc8] sm:$0xf]
    %v1276 = vld [vmem:[#allocation8 + $0xcc] sm:$0xf]
    %v1277 = vld [vmem:[#allocation8 + $0xd0] sm:$0xf]
    %v1278 = vld [vmem:[#allocation8 + $0xd4] sm:$0xf]
    %v1279 = vld [vmem:[#allocation8 + $0xd8] sm:$0xf]
    %v1280 = vld [vmem:[#allocation8 + $0xdc] sm:$0xf]
    %v1281 = vld [vmem:[#allocation8 + $0xe0] sm:$0xf]
    %v1282 = vld [vmem:[#allocation8 + $0xe4] sm:$0xf]
    %v1283 = vld [vmem:[#allocation8 + $0xe8] sm:$0xf]
    %v1284 = vld [vmem:[#allocation8 + $0xec] sm:$0xf]
    %v1285 = vld [vmem:[#allocation8 + $0xf0] sm:$0xf]
    %v1286 = vld [vmem:[#allocation8 + $0xf4] sm:$0xf]
    %v1287 = vld [vmem:[#allocation8 + $0xf8] sm:$0xf]
    %v1288 = vld [vmem:[#allocation8 + $0xfc] sm:$0xf]
    %v1289 = vld [vmem:[%s13] sm:$0x1]
    %v1291 = vperm.slane %v1289, 0
    %v1357 = vunpack.c.l.b16 %v1225
    %v1358 = vunpack.c.l.b16 %v1226
    %v1359 = vunpack.c.l.b16 %v1227
    %v1360 = vunpack.c.l.b16 %v1228
    %v1361 = vunpack.c.l.b16 %v1229
    %v1362 = vunpack.c.l.b16 %v1230
    %v1363 = vunpack.c.l.b16 %v1231
    %v1364 = vunpack.c.l.b16 %v1232
    %v1365 = vunpack.c.l.b16 %v1233
    %v1366 = vunpack.c.l.b16 %v1234
    %v1367 = vunpack.c.l.b16 %v1235
    %v1368 = vunpack.c.l.b16 %v1236
    %v1369 = vunpack.c.l.b16 %v1237
    %v1370 = vunpack.c.l.b16 %v1238
    %v1371 = vunpack.c.l.b16 %v1239
    %v1372 = vunpack.c.l.b16 %v1240
    %v1373 = vunpack.c.l.b16 %v1241
    %v1374 = vunpack.c.l.b16 %v1242
    %v1375 = vunpack.c.l.b16 %v1243
    %v1376 = vunpack.c.l.b16 %v1244
    %v1377 = vunpack.c.l.b16 %v1245
    %v1378 = vunpack.c.l.b16 %v1246
    %v1379 = vunpack.c.l.b16 %v1247
    %v1380 = vunpack.c.l.b16 %v1248
    %v1381 = vunpack.c.l.b16 %v1249
    %v1382 = vunpack.c.l.b16 %v1250
    %v1383 = vunpack.c.l.b16 %v1251
    %v1384 = vunpack.c.l.b16 %v1252
    %v1385 = vunpack.c.l.b16 %v1253
    %v1386 = vunpack.c.l.b16 %v1254
    %v1387 = vunpack.c.l.b16 %v1255
    %v1388 = vunpack.c.l.b16 %v1256
    %v1389 = vunpack.c.l.b16 %v1257
    %v1390 = vunpack.c.l.b16 %v1258
    %v1391 = vunpack.c.l.b16 %v1259
    %v1392 = vunpack.c.l.b16 %v1260
    %v1393 = vunpack.c.l.b16 %v1261
    %v1394 = vunpack.c.l.b16 %v1262
    %v1395 = vunpack.c.l.b16 %v1263
    %v1396 = vunpack.c.l.b16 %v1264
    %v1397 = vunpack.c.l.b16 %v1265
    %v1398 = vunpack.c.l.b16 %v1266
    %v1399 = vunpack.c.l.b16 %v1267
    %v1400 = vunpack.c.l.b16 %v1268
    %v1401 = vunpack.c.l.b16 %v1269
    %v1402 = vunpack.c.l.b16 %v1270
    %v1403 = vunpack.c.l.b16 %v1271
    %v1404 = vunpack.c.l.b16 %v1272
    %v1405 = vunpack.c.l.b16 %v1273
    %v1406 = vunpack.c.l.b16 %v1274
    %v1407 = vunpack.c.l.b16 %v1275
    %v1408 = vunpack.c.l.b16 %v1276
    %v1409 = vunpack.c.l.b16 %v1277
    %v1410 = vunpack.c.l.b16 %v1278
    %v1411 = vunpack.c.l.b16 %v1279
    %v1412 = vunpack.c.l.b16 %v1280
    %v1413 = vunpack.c.l.b16 %v1281
    %v1414 = vunpack.c.l.b16 %v1282
    %v1415 = vunpack.c.l.b16 %v1283
    %v1416 = vunpack.c.l.b16 %v1284
    %v1417 = vunpack.c.l.b16 %v1285
    %v1418 = vunpack.c.l.b16 %v1286
    %v1419 = vunpack.c.l.b16 %v1287
    %v1420 = vunpack.c.l.b16 %v1288
    %v1421 = vpack.c.b16 %v1358, %v1357
    %v1422 = vpack.c.b16 %v1360, %v1359
    %v1423 = vpack.c.b16 %v1362, %v1361
    %v1424 = vpack.c.b16 %v1364, %v1363
    %v1425 = vpack.c.b16 %v1366, %v1365
    %v1426 = vpack.c.b16 %v1368, %v1367
    %v1427 = vpack.c.b16 %v1370, %v1369
    %v1428 = vpack.c.b16 %v1372, %v1371
    %v1429 = vpack.c.b16 %v1374, %v1373
    %v1430 = vpack.c.b16 %v1376, %v1375
    %v1431 = vpack.c.b16 %v1378, %v1377
    %v1432 = vpack.c.b16 %v1380, %v1379
    %v1433 = vpack.c.b16 %v1382, %v1381
    %v1434 = vpack.c.b16 %v1384, %v1383
    %v1435 = vpack.c.b16 %v1386, %v1385
    %v1436 = vpack.c.b16 %v1388, %v1387
    %v1437 = vpack.c.b16 %v1390, %v1389
    %v1438 = vpack.c.b16 %v1392, %v1391
    %v1439 = vpack.c.b16 %v1394, %v1393
    %v1440 = vpack.c.b16 %v1396, %v1395
    %v1441 = vpack.c.b16 %v1398, %v1397
    %v1442 = vpack.c.b16 %v1400, %v1399
    %v1443 = vpack.c.b16 %v1402, %v1401
    %v1444 = vpack.c.b16 %v1404, %v1403
    %v1445 = vpack.c.b16 %v1406, %v1405
    %v1446 = vpack.c.b16 %v1408, %v1407
    %v1447 = vpack.c.b16 %v1410, %v1409
    %v1448 = vpack.c.b16 %v1412, %v1411
    %v1449 = vpack.c.b16 %v1414, %v1413
    %v1450 = vpack.c.b16 %v1416, %v1415
    %v1451 = vpack.c.b16 %v1418, %v1417
    %v1452 = vpack.c.b16 %v1420, %v1419
    %1485 = vmatpush.bf16.msra.mxu0 %v1428
    %1486 = vmatpush.bf16.msra.mxu0 %v1427
    %1487 = vmatpush.bf16.msra.mxu0 %v1426
    %1488 = vmatpush.bf16.msra.mxu0 %v1425
    %1489 = vmatpush.bf16.msra.mxu0 %v1424
    %1490 = vmatpush.bf16.msra.mxu0 %v1423
    %1491 = vmatpush.bf16.msra.mxu0 %v1422
    %1492 = vmatpush.bf16.msra.mxu0 %v1421
    %1493 = vmatmul.bf16.gmra.mxu0 %v1221
    %v1494 = vpop.f32.mrf.mxu0
    %v1495 = vadd.f32 %v1291, %v1494
    %v1496 = vpop.f32.mrf.mxu0
    %v1497 = vadd.f32 %v1291, %v1496
    %1498 = vdwg.mxu0
    %1499 = vmatpush.bf16.msra.mxu0 %v1436
    %1500 = vmatpush.bf16.msra.mxu0 %v1435
    %1501 = vmatpush.bf16.msra.mxu0 %v1434
    %1502 = vmatpush.bf16.msra.mxu0 %v1433
    %1503 = vmatpush.bf16.msra.mxu0 %v1432
    %1504 = vmatpush.bf16.msra.mxu0 %v1431
    %1505 = vmatpush.bf16.msra.mxu0 %v1430
    %1506 = vmatpush.bf16.msra.mxu0 %v1429
    %1507 = vmatmul.bf16.gmra.mxu0 %v1222
    %v1508 = vpop.f32.mrf.mxu0
    %v1509 = vadd.f32 %v1495, %v1508
    %v1510 = vpop.f32.mrf.mxu0
    %v1511 = vadd.f32 %v1497, %v1510
    %1512 = vdwg.mxu0
    %1513 = vmatpush.bf16.msra.mxu0 %v1444
    %1514 = vmatpush.bf16.msra.mxu0 %v1443
    %1515 = vmatpush.bf16.msra.mxu0 %v1442
    %1516 = vmatpush.bf16.msra.mxu0 %v1441
    %1517 = vmatpush.bf16.msra.mxu0 %v1440
    %1518 = vmatpush.bf16.msra.mxu0 %v1439
    %1519 = vmatpush.bf16.msra.mxu0 %v1438
    %1520 = vmatpush.bf16.msra.mxu0 %v1437
    %1521 = vmatmul.bf16.gmra.mxu0 %v1223
    %v1522 = vpop.f32.mrf.mxu0
    %v1523 = vadd.f32 %v1509, %v1522
    %v1524 = vpop.f32.mrf.mxu0
    %v1525 = vadd.f32 %v1511, %v1524
    %1526 = vdwg.mxu0
    %1527 = vmatpush.bf16.msra.mxu0 %v1452
    %1528 = vmatpush.bf16.msra.mxu0 %v1451
    %1529 = vmatpush.bf16.msra.mxu0 %v1450
    %1530 = vmatpush.bf16.msra.mxu0 %v1449
    %1531 = vmatpush.bf16.msra.mxu0 %v1448
    %1532 = vmatpush.bf16.msra.mxu0 %v1447
    %1533 = vmatpush.bf16.msra.mxu0 %v1446
    %1534 = vmatpush.bf16.msra.mxu0 %v1445
    %1535 = vmatmul.bf16.gmra.mxu0 %v1224
    %v1536 = vpop.f32.mrf.mxu0
    %v1537 = vadd.f32 %v1523, %v1536
    %v1538 = vpop.f32.mrf.mxu0
    %v1539 = vadd.f32 %v1525, %v1538
    %1540 = vdwg.mxu0
    %v1541 = vadd.f32 %v1537, %v888
    %v1542 = vadd.f32 %v1539, %v889
    %v1543 = vld [vmem:[%s14] sm:$0x1]
    %v1544 = vld [vmem:[%s15] sm:$0x1]
    %1545 = vadd.xlane.f32.xlu0 %v1541
    %v1546 = vpop.xlane.xlu0 %1545
    %1547 = vadd.xlane.f32.xlu0 %v1542
    %v1548 = vpop.xlane.xlu0 %1547
    %v1549 = vmul.f32 %v1546, %v145
    %v1550 = vmul.f32 %v1548, %v145
    %v1551 = vsub.f32 %v1541, %v1549
    %v1552 = vsub.f32 %v1542, %v1550
    %v1553 = vmul.f32 %v1551, %v1551
    %v1554 = vmul.f32 %v1552, %v1552
    %1555 = vadd.xlane.f32.xlu0 %v1553
    %v1556 = vpop.xlane.xlu0 %1555
    %1557 = vadd.xlane.f32.xlu0 %v1554
    %v1558 = vpop.xlane.xlu0 %1557
    %v1559 = vmul.f32 %v1556, %v145
    %v1560 = vmul.f32 %v1558, %v145
    %v1561 = vadd.f32 %v1559, 1e-12
    %v1562 = vadd.f32 %v1560, 1e-12
    %v1563 = vrsqrt.pop %v1561
    %v1564 = vmul.f32 %v1563, %v1561
    %v1565 = vmul.f32 %v1564, %v1563
    %v1566 = vmul.f32 0.5, %v1565
    %v1567 = vsub.f32 1.5, %v1566
    %v1568 = vmul.f32 %v1563, %v1567
    %vm1569 = vweird.f32 %v1561
    %vm1570 = vweird.f32 %v1563
    %vm1571 = vmor %vm1569, %vm1570
    %v1572 = vsel %vm1571, %v1563, %v1568
    %v1573 = vrsqrt.pop %v1562
    %v1574 = vmul.f32 %v1573, %v1562
    %v1575 = vmul.f32 %v1574, %v1573
    %v1576 = vmul.f32 0.5, %v1575
    %v1577 = vsub.f32 1.5, %v1576
    %v1578 = vmul.f32 %v1573, %v1577
    %vm1579 = vweird.f32 %v1562
    %vm1580 = vweird.f32 %v1573
    %vm1581 = vmor %vm1579, %vm1580
    %v1582 = vsel %vm1581, %v1573, %v1578
    %v1583 = vmul.f32 %v1551, %v1572
    %v1584 = vmul.f32 %v1552, %v1582
    %v1586 = vperm.slane %v1543, 0
    %v1588 = vmul.f32 %v1583, %v1586
    %v1589 = vmul.f32 %v1584, %v1586
    %v1591 = vperm.slane %v1544, 0
    %v1593 = vadd.f32 %v1588, %v1591
    %v1594 = vadd.f32 %v1589, %v1591
    %v1595 = vpack.c.bf16 %v1594, %v1593
    %s1596 = scalar_lea.vmem [#allocation4], 192
    %v1597 = vld [vmem:[%s1596] sm:$0xff]
    %v1598 = vld [vmem:[%s1596 + $0x8] sm:$0xf]
    %v1599 = vld [vmem:[%s1596 + $0xc] sm:$0xff]
    %v1600 = vld [vmem:[%s1596 + $0x14] sm:$0xf]
    %v1601 = vld [vmem:[%s1596 + $0x18] sm:$0xff]
    %v1602 = vld [vmem:[%s1596 + $0x20] sm:$0xf]
    %v1603 = vld [vmem:[%s1596 + $0x24] sm:$0xff]
    %v1604 = vld [vmem:[%s1596 + $0x2c] sm:$0xf]
    %v1605 = vld [vmem:[%s1596 + $0x30] sm:$0xff]
    %v1606 = vld [vmem:[%s1596 + $0x38] sm:$0xf]
    %v1607 = vld [vmem:[%s1596 + $0x3c] sm:$0xff]
    %v1608 = vld [vmem:[%s1596 + $0x44] sm:$0xf]
    %v1609 = vld [vmem:[%s1596 + $0x48] sm:$0xff]
    %v1610 = vld [vmem:[%s1596 + $0x50] sm:$0xf]
    %v1611 = vld [vmem:[%s1596 + $0x54] sm:$0xff]
    %v1612 = vld [vmem:[%s1596 + $0x5c] sm:$0xf]
    %v1613 = vld [vmem:[%s1596 + $0x60] sm:$0xff]
    %v1614 = vld [vmem:[%s1596 + $0x68] sm:$0xf]
    %v1615 = vld [vmem:[%s1596 + $0x6c] sm:$0xff]
    %v1616 = vld [vmem:[%s1596 + $0x74] sm:$0xf]
    %v1617 = vld [vmem:[%s1596 + $0x78] sm:$0xff]
    %v1618 = vld [vmem:[%s1596 + $0x80] sm:$0xf]
    %v1619 = vld [vmem:[%s1596 + $0x84] sm:$0xff]
    %v1620 = vld [vmem:[%s1596 + $0x8c] sm:$0xf]
    %v1621 = vld [vmem:[%s1596 + $0x90] sm:$0xff]
    %v1622 = vld [vmem:[%s1596 + $0x98] sm:$0xf]
    %v1623 = vld [vmem:[%s1596 + $0x9c] sm:$0xff]
    %v1624 = vld [vmem:[%s1596 + $0xa4] sm:$0xf]
    %v1625 = vld [vmem:[%s1596 + $0xa8] sm:$0xff]
    %v1626 = vld [vmem:[%s1596 + $0xb0] sm:$0xf]
    %v1627 = vld [vmem:[%s1596 + $0xb4] sm:$0xff]
    %v1628 = vld [vmem:[%s1596 + $0xbc] sm:$0xf]
    %s1629 = scalar_lea.vmem %s5, 3
    %v1630 = vld [vmem:[%s1629] sm:$0x7]
    %v1632 = vperm.slane %v1630, 0
    %v1633 = vperm.slane %v1630, 1
    %v1634 = vperm.slane %v1630, 2
    %v1670 = vunpack.c.l.b16 %v1597
    %v1671 = vunpack.c.h.b16 %v1597
    %v1672 = vunpack.c.l.b16 %v1598
    %v1673 = vunpack.c.l.b16 %v1599
    %v1674 = vunpack.c.h.b16 %v1599
    %v1675 = vunpack.c.l.b16 %v1600
    %v1676 = vunpack.c.l.b16 %v1601
    %v1677 = vunpack.c.h.b16 %v1601
    %v1678 = vunpack.c.l.b16 %v1602
    %v1679 = vunpack.c.l.b16 %v1603
    %v1680 = vunpack.c.h.b16 %v1603
    %v1681 = vunpack.c.l.b16 %v1604
    %v1682 = vunpack.c.l.b16 %v1605
    %v1683 = vunpack.c.h.b16 %v1605
    %v1684 = vunpack.c.l.b16 %v1606
    %v1685 = vunpack.c.l.b16 %v1607
    %v1686 = vunpack.c.h.b16 %v1607
    %v1687 = vunpack.c.l.b16 %v1608
    %v1688 = vunpack.c.l.b16 %v1609
    %v1689 = vunpack.c.h.b16 %v1609
    %v1690 = vunpack.c.l.b16 %v1610
    %v1691 = vunpack.c.l.b16 %v1611
    %v1692 = vunpack.c.h.b16 %v1611
    %v1693 = vunpack.c.l.b16 %v1612
    %v1694 = vunpack.c.l.b16 %v1613
    %v1695 = vunpack.c.h.b16 %v1613
    %v1696 = vunpack.c.l.b16 %v1614
    %v1697 = vunpack.c.l.b16 %v1615
    %v1698 = vunpack.c.h.b16 %v1615
    %v1699 = vunpack.c.l.b16 %v1616
    %v1700 = vunpack.c.l.b16 %v1617
    %v1701 = vunpack.c.h.b16 %v1617
    %v1702 = vunpack.c.l.b16 %v1618
    %v1703 = vunpack.c.l.b16 %v1619
    %v1704 = vunpack.c.h.b16 %v1619
    %v1705 = vunpack.c.l.b16 %v1620
    %v1706 = vunpack.c.l.b16 %v1621
    %v1707 = vunpack.c.h.b16 %v1621
    %v1708 = vunpack.c.l.b16 %v1622
    %v1709 = vunpack.c.l.b16 %v1623
    %v1710 = vunpack.c.h.b16 %v1623
    %v1711 = vunpack.c.l.b16 %v1624
    %v1712 = vunpack.c.l.b16 %v1625
    %v1713 = vunpack.c.h.b16 %v1625
    %v1714 = vunpack.c.l.b16 %v1626
    %v1715 = vunpack.c.l.b16 %v1627
    %v1716 = vunpack.c.h.b16 %v1627
    %v1717 = vunpack.c.l.b16 %v1628
    %v1718 = vpack.c.b16 %v1673, %v1670
    %v1719 = vpack.c.b16 %v1674, %v1671
    %v1720 = vpack.c.b16 %v1675, %v1672
    %v1721 = vpack.c.b16 %v1679, %v1676
    %v1722 = vpack.c.b16 %v1680, %v1677
    %v1723 = vpack.c.b16 %v1681, %v1678
    %v1724 = vpack.c.b16 %v1685, %v1682
    %v1725 = vpack.c.b16 %v1686, %v1683
    %v1726 = vpack.c.b16 %v1687, %v1684
    %v1727 = vpack.c.b16 %v1691, %v1688
    %v1728 = vpack.c.b16 %v1692, %v1689
    %v1729 = vpack.c.b16 %v1693, %v1690
    %v1730 = vpack.c.b16 %v1697, %v1694
    %v1731 = vpack.c.b16 %v1698, %v1695
    %v1732 = vpack.c.b16 %v1699, %v1696
    %v1733 = vpack.c.b16 %v1703, %v1700
    %v1734 = vpack.c.b16 %v1704, %v1701
    %v1735 = vpack.c.b16 %v1705, %v1702
    %v1736 = vpack.c.b16 %v1709, %v1706
    %v1737 = vpack.c.b16 %v1710, %v1707
    %v1738 = vpack.c.b16 %v1711, %v1708
    %v1739 = vpack.c.b16 %v1715, %v1712
    %v1740 = vpack.c.b16 %v1716, %v1713
    %v1741 = vpack.c.b16 %v1717, %v1714
    %1766 = vmatpush.bf16.msra.mxu0 %v1739
    %1767 = vmatpush.bf16.msra.mxu0 %v1736
    %1768 = vmatpush.bf16.msra.mxu0 %v1733
    %1769 = vmatpush.bf16.msra.mxu0 %v1730
    %1770 = vmatpush.bf16.msra.mxu0 %v1727
    %1771 = vmatpush.bf16.msra.mxu0 %v1724
    %1772 = vmatpush.bf16.msra.mxu0 %v1721
    %1773 = vmatpush.bf16.msra.mxu0 %v1718
    %1774 = vmatmul.bf16.gmra.mxu0 %v1595
    %v1775 = vpop.f32.mrf.mxu0
    %v1776 = vadd.f32 %v1632, %v1775
    %v1777 = vpop.f32.mrf.mxu0
    %v1778 = vadd.f32 %v1632, %v1777
    %1779 = vdwg.mxu0
    %1780 = vmatpush.bf16.msra.mxu0 %v1740
    %1781 = vmatpush.bf16.msra.mxu0 %v1737
    %1782 = vmatpush.bf16.msra.mxu0 %v1734
    %1783 = vmatpush.bf16.msra.mxu0 %v1731
    %1784 = vmatpush.bf16.msra.mxu0 %v1728
    %1785 = vmatpush.bf16.msra.mxu0 %v1725
    %1786 = vmatpush.bf16.msra.mxu0 %v1722
    %1787 = vmatpush.bf16.msra.mxu0 %v1719
    %1788 = vmatmul.bf16.gmra.mxu0 %v1595
    %v1789 = vpop.f32.mrf.mxu0
    %v1790 = vadd.f32 %v1633, %v1789
    %v1791 = vpop.f32.mrf.mxu0
    %v1792 = vadd.f32 %v1633, %v1791
    %1793 = vdwg.mxu0
    %1794 = vmatpush.bf16.msra.mxu0 %v1741
    %1795 = vmatpush.bf16.msra.mxu0 %v1738
    %1796 = vmatpush.bf16.msra.mxu0 %v1735
    %1797 = vmatpush.bf16.msra.mxu0 %v1732
    %1798 = vmatpush.bf16.msra.mxu0 %v1729
    %1799 = vmatpush.bf16.msra.mxu0 %v1726
    %1800 = vmatpush.bf16.msra.mxu0 %v1723
    %1801 = vmatpush.bf16.msra.mxu0 %v1720
    %1802 = vmatmul.bf16.gmra.mxu0 %v1595
    %v1803 = vpop.f32.mrf.mxu0
    %v1804 = vadd.f32 %v1634, %v1803
    %v1805 = vpop.f32.mrf.mxu0
    %v1806 = vadd.f32 %v1634, %v1805
    %1807 = vdwg.mxu0
    %s1808 = scalar_lea.vmem %s6, 64
    %v1809 = vld [vmem:[%s1808] sm:$0xf]
    %v1810 = vld [vmem:[%s1808 + $0x4] sm:$0xf]
    %v1811 = vld [vmem:[%s1808 + $0x8] sm:$0xf]
    %v1812 = vld [vmem:[%s1808 + $0xc] sm:$0xf]
    %v1813 = vld [vmem:[%s1808 + $0x10] sm:$0xf]
    %v1814 = vld [vmem:[%s1808 + $0x14] sm:$0xf]
    %v1815 = vld [vmem:[%s1808 + $0x18] sm:$0xf]
    %v1816 = vld [vmem:[%s1808 + $0x1c] sm:$0xf]
    %v1817 = vld [vmem:[%s1808 + $0x20] sm:$0xf]
    %v1818 = vld [vmem:[%s1808 + $0x24] sm:$0xf]
    %v1819 = vld [vmem:[%s1808 + $0x28] sm:$0xf]
    %v1820 = vld [vmem:[%s1808 + $0x2c] sm:$0xf]
    %v1821 = vld [vmem:[%s1808 + $0x30] sm:$0xf]
    %v1822 = vld [vmem:[%s1808 + $0x34] sm:$0xf]
    %v1823 = vld [vmem:[%s1808 + $0x38] sm:$0xf]
    %v1824 = vld [vmem:[%s1808 + $0x3c] sm:$0xf]
    %v1825 = vpack.c.bf16 %v1776, %v1776
    %v1826 = vpack.c.bf16 %v1790, %v1790
    %v1828 = vsel %vm425, %v1825, 0
    %v1831 = vsel %vm425, %v1826, 0
    %1833 = vmatpush.bf16.xpose.msra.mxu0 0
    %1834 = vmatpush.bf16.xpose.msra.mxu0 0
    %1835 = vmatpush.bf16.xpose.msra.mxu0 0
    %1836 = vmatpush.bf16.xpose.msra.mxu0 0
    %1837 = vmatpush.bf16.xpose.msra.mxu0 0
    %1838 = vmatpush.bf16.xpose.msra.mxu0 0
    %1839 = vmatpush.bf16.xpose.msra.mxu0 0
    %1840 = vmatpush.bf16.xpose.msra.mxu0 %v1831
    %1841 = vmatmul.bf16.gmra.mxu0 %v1828
    %v1842 = vpop.f32.mrf.mxu0
    %v1843 = vadd.f32 0.0, %v1842
    %v1844 = vpop.f32.mrf.mxu0
    %1845 = vdwg.mxu0
    %v1846 = vmul.f32 %v1843, 0.125
    %v1847 = vadd.f32 %v1846, %v193
    %v1848 = vsel %vm447, %v1847, -inf
    %1849 = vmax.xlane.f32.xlu0 %v1848
    %v1850 = vpop.xlane.xlu0 %1849
    %v1851 = vsub.f32 %v1847, %v1850
    %v1852 = vmul.f32 %v1851, 1.442695
    %v1853 = vpow.pop %v1852
    %v1854 = vsel %vm447, %v1853, 0.0
    %1855 = vadd.xlane.f32.xlu0 %v1854
    %v1856 = vpop.xlane.xlu0 %1855
    %v1857 = vrcp.pop %v1856
    %v1858 = vmul.f32 %v1856, %v1857
    %v1859 = vsub.f32 1.0, %v1858
    %v1860 = vmul.f32 %v1857, %v1859
    %v1861 = vadd.f32 %v1857, %v1860
    %vm1862 = vweird.f32 %v1856
    %vm1863 = vweird.f32 %v1857
    %vm1864 = vmor %vm1862, %vm1863
    %v1865 = vsel %vm1864, %v1857, %v1861
    %v1866 = vand.u32 2147483647, %v1856
    %vm1867 = vcmp.eq.f32.partialorder %v1866, 8.507059e+37
    %v1868 = vand.u32 %v1856, 2147483648
    %v1869 = vor.u32 1.1754944e-38, %v1868
    %v1870 = vsel %vm1867, %v1869, %v1865
    %v1871 = vmul.f32 %v1853, %v1870
    %v1872 = vpack.c.bf16 %v1871, %v1871
    %v1873 = vpack.c.bf16 %v1804, %v1804
    %v1875 = vsel %vm447, %v1872, 0
    %v1878 = vsel %vm477, %v1873, 0
    %1880 = vmatpush.bf16.msra.mxu0 0
    %1881 = vmatpush.bf16.msra.mxu0 0
    %1882 = vmatpush.bf16.msra.mxu0 0
    %1883 = vmatpush.bf16.msra.mxu0 0
    %1884 = vmatpush.bf16.msra.mxu0 0
    %1885 = vmatpush.bf16.msra.mxu0 0
    %1886 = vmatpush.bf16.msra.mxu0 0
    %1887 = vmatpush.bf16.msra.mxu0 %v1878
    %1888 = vmatmul.bf16.gmra.mxu0 %v1875
    %v1889 = vpop.f32.mrf.mxu0
    %v1890 = vadd.f32 0.0, %v1889
    %v1891 = vpop.f32.mrf.mxu0
    %1892 = vdwg.mxu0
    %v1893 = vpack.c.bf16 %v1890, %v1890
    %1895 = vrot.lane.b32.xlu0 %v1825, 64
    %v1896 = vpop.permute.xlu0 %1895
    %1898 = vrot.lane.b32.xlu0 %v1826, 64
    %v1899 = vpop.permute.xlu0 %1898
    %v1901 = vsel %vm425, %v1896, 0
    %v1904 = vsel %vm425, %v1899, 0
    %1906 = vmatpush.bf16.xpose.msra.mxu0 0
    %1907 = vmatpush.bf16.xpose.msra.mxu0 0
    %1908 = vmatpush.bf16.xpose.msra.mxu0 0
    %1909 = vmatpush.bf16.xpose.msra.mxu0 0
    %1910 = vmatpush.bf16.xpose.msra.mxu0 0
    %1911 = vmatpush.bf16.xpose.msra.mxu0 0
    %1912 = vmatpush.bf16.xpose.msra.mxu0 0
    %1913 = vmatpush.bf16.xpose.msra.mxu0 %v1904
    %1914 = vmatmul.bf16.gmra.mxu0 %v1901
    %v1915 = vpop.f32.mrf.mxu0
    %v1916 = vadd.f32 0.0, %v1915
    %v1917 = vpop.f32.mrf.mxu0
    %1918 = vdwg.mxu0
    %v1919 = vmul.f32 %v1916, 0.125
    %v1920 = vadd.f32 %v1919, %v193
    %v1921 = vsel %vm447, %v1920, -inf
    %1922 = vmax.xlane.f32.xlu0 %v1921
    %v1923 = vpop.xlane.xlu0 %1922
    %v1924 = vsub.f32 %v1920, %v1923
    %v1925 = vmul.f32 %v1924, 1.442695
    %v1926 = vpow.pop %v1925
    %v1927 = vsel %vm447, %v1926, 0.0
    %1928 = vadd.xlane.f32.xlu0 %v1927
    %v1929 = vpop.xlane.xlu0 %1928
    %v1930 = vrcp.pop %v1929
    %v1931 = vmul.f32 %v1929, %v1930
    %v1932 = vsub.f32 1.0, %v1931
    %v1933 = vmul.f32 %v1930, %v1932
    %v1934 = vadd.f32 %v1930, %v1933
    %vm1935 = vweird.f32 %v1929
    %vm1936 = vweird.f32 %v1930
    %vm1937 = vmor %vm1935, %vm1936
    %v1938 = vsel %vm1937, %v1930, %v1934
    %v1939 = vand.u32 2147483647, %v1929
    %vm1940 = vcmp.eq.f32.partialorder %v1939, 8.507059e+37
    %v1941 = vand.u32 %v1929, 2147483648
    %v1942 = vor.u32 1.1754944e-38, %v1941
    %v1943 = vsel %vm1940, %v1942, %v1938
    %v1944 = vmul.f32 %v1926, %v1943
    %v1945 = vpack.c.bf16 %v1944, %v1944
    %1947 = vrot.lane.b32.xlu0 %v1873, 64
    %v1948 = vpop.permute.xlu0 %1947
    %v1950 = vsel %vm447, %v1945, 0
    %v1953 = vsel %vm477, %v1948, 0
    %1955 = vmatpush.bf16.msra.mxu0 0
    %1956 = vmatpush.bf16.msra.mxu0 0
    %1957 = vmatpush.bf16.msra.mxu0 0
    %1958 = vmatpush.bf16.msra.mxu0 0
    %1959 = vmatpush.bf16.msra.mxu0 0
    %1960 = vmatpush.bf16.msra.mxu0 0
    %1961 = vmatpush.bf16.msra.mxu0 0
    %1962 = vmatpush.bf16.msra.mxu0 %v1953
    %1963 = vmatmul.bf16.gmra.mxu0 %v1950
    %v1964 = vpop.f32.mrf.mxu0
    %v1965 = vadd.f32 0.0, %v1964
    %v1966 = vpop.f32.mrf.mxu0
    %1967 = vdwg.mxu0
    %v1968 = vpack.c.bf16 %v1965, %v1965
    %v1977 = vunpack.c.l.b16 %v1817
    %v1978 = vunpack.c.l.b16 %v1818
    %v1979 = vunpack.c.l.b16 %v1819
    %v1980 = vunpack.c.l.b16 %v1820
    %v1981 = vunpack.c.l.b16 %v1821
    %v1982 = vunpack.c.l.b16 %v1822
    %v1983 = vunpack.c.l.b16 %v1823
    %v1984 = vunpack.c.l.b16 %v1824
    %v1985 = vpack.c.b16 %v1978, %v1977
    %v1986 = vpack.c.b16 %v1980, %v1979
    %v1987 = vpack.c.b16 %v1982, %v1981
    %v1988 = vpack.c.b16 %v1984, %v1983
    %v1994 = vsel %vm425, %v1968, 0
    %1996 = vmatpush.bf16.msra.mxu0 0
    %1997 = vmatpush.bf16.msra.mxu0 0
    %1998 = vmatpush.bf16.msra.mxu0 0
    %1999 = vmatpush.bf16.msra.mxu0 0
    %2000 = vmatpush.bf16.msra.mxu0 %v1988
    %2001 = vmatpush.bf16.msra.mxu0 %v1987
    %2002 = vmatpush.bf16.msra.mxu0 %v1986
    %2003 = vmatpush.bf16.msra.mxu0 %v1985
    %2004 = vmatmul.bf16.gmra.mxu0 %v1994
    %v2005 = vpop.f32.mrf.mxu0
    %v2006 = vadd.f32 0.0, %v2005
    %v2007 = vpop.f32.mrf.mxu0
    %2008 = vdwg.mxu0
    %v2017 = vunpack.c.l.b16 %v1809
    %v2018 = vunpack.c.l.b16 %v1810
    %v2019 = vunpack.c.l.b16 %v1811
    %v2020 = vunpack.c.l.b16 %v1812
    %v2021 = vunpack.c.l.b16 %v1813
    %v2022 = vunpack.c.l.b16 %v1814
    %v2023 = vunpack.c.l.b16 %v1815
    %v2024 = vunpack.c.l.b16 %v1816
    %v2025 = vpack.c.b16 %v2018, %v2017
    %v2026 = vpack.c.b16 %v2020, %v2019
    %v2027 = vpack.c.b16 %v2022, %v2021
    %v2028 = vpack.c.b16 %v2024, %v2023
    %v2034 = vsel %vm425, %v1893, 0
    %2036 = vmatpush.bf16.msra.mxu0 0
    %2037 = vmatpush.bf16.msra.mxu0 0
    %2038 = vmatpush.bf16.msra.mxu0 0
    %2039 = vmatpush.bf16.msra.mxu0 0
    %2040 = vmatpush.bf16.msra.mxu0 %v2028
    %2041 = vmatpush.bf16.msra.mxu0 %v2027
    %2042 = vmatpush.bf16.msra.mxu0 %v2026
    %2043 = vmatpush.bf16.msra.mxu0 %v2025
    %2044 = vmatmul.bf16.gmra.mxu0 %v2034
    %v2045 = vpop.f32.mrf.mxu0
    %v2046 = vadd.f32 %v2006, %v2045
    %v2047 = vpop.f32.mrf.mxu0
    %2048 = vdwg.mxu0
    %2049 = vst [vmem:[#allocation2] sm:$0xff] %v2046
    %v2050 = vpack.c.bf16 %v1778, %v1778
    %v2051 = vpack.c.bf16 %v1792, %v1792
    %v2053 = vsel %vm425, %v2050, 0
    %v2056 = vsel %vm425, %v2051, 0
    %2058 = vmatpush.bf16.xpose.msra.mxu0 0
    %2059 = vmatpush.bf16.xpose.msra.mxu0 0
    %2060 = vmatpush.bf16.xpose.msra.mxu0 0
    %2061 = vmatpush.bf16.xpose.msra.mxu0 0
    %2062 = vmatpush.bf16.xpose.msra.mxu0 0
    %2063 = vmatpush.bf16.xpose.msra.mxu0 0
    %2064 = vmatpush.bf16.xpose.msra.mxu0 0
    %2065 = vmatpush.bf16.xpose.msra.mxu0 %v2056
    %2066 = vmatmul.bf16.gmra.mxu0 %v2053
    %v2067 = vpop.f32.mrf.mxu0
    %v2068 = vadd.f32 0.0, %v2067
    %v2069 = vpop.f32.mrf.mxu0
    %2070 = vdwg.mxu0
    %v2071 = vmul.f32 %v2068, 0.125
    %v2072 = vadd.f32 %v2071, %v195
    %v2073 = vsel %vm447, %v2072, -inf
    %2074 = vmax.xlane.f32.xlu0 %v2073
    %v2075 = vpop.xlane.xlu0 %2074
    %v2076 = vsub.f32 %v2072, %v2075
    %v2077 = vmul.f32 %v2076, 1.442695
    %v2078 = vpow.pop %v2077
    %v2079 = vsel %vm447, %v2078, 0.0
    %2080 = vadd.xlane.f32.xlu0 %v2079
    %v2081 = vpop.xlane.xlu0 %2080
    %v2082 = vrcp.pop %v2081
    %v2083 = vmul.f32 %v2081, %v2082
    %v2084 = vsub.f32 1.0, %v2083
    %v2085 = vmul.f32 %v2082, %v2084
    %v2086 = vadd.f32 %v2082, %v2085
    %vm2087 = vweird.f32 %v2081
    %vm2088 = vweird.f32 %v2082
    %vm2089 = vmor %vm2087, %vm2088
    %v2090 = vsel %vm2089, %v2082, %v2086
    %v2091 = vand.u32 2147483647, %v2081
    %vm2092 = vcmp.eq.f32.partialorder %v2091, 8.507059e+37
    %v2093 = vand.u32 %v2081, 2147483648
    %v2094 = vor.u32 1.1754944e-38, %v2093
    %v2095 = vsel %vm2092, %v2094, %v2090
    %v2096 = vmul.f32 %v2078, %v2095
    %v2097 = vpack.c.bf16 %v2096, %v2096
    %v2098 = vpack.c.bf16 %v1806, %v1806
    %v2100 = vsel %vm447, %v2097, 0
    %v2103 = vsel %vm477, %v2098, 0
    %2105 = vmatpush.bf16.msra.mxu0 0
    %2106 = vmatpush.bf16.msra.mxu0 0
    %2107 = vmatpush.bf16.msra.mxu0 0
    %2108 = vmatpush.bf16.msra.mxu0 0
    %2109 = vmatpush.bf16.msra.mxu0 0
    %2110 = vmatpush.bf16.msra.mxu0 0
    %2111 = vmatpush.bf16.msra.mxu0 0
    %2112 = vmatpush.bf16.msra.mxu0 %v2103
    %2113 = vmatmul.bf16.gmra.mxu0 %v2100
    %v2114 = vpop.f32.mrf.mxu0
    %v2115 = vadd.f32 0.0, %v2114
    %v2116 = vpop.f32.mrf.mxu0
    %2117 = vdwg.mxu0
    %v2118 = vpack.c.bf16 %v2115, %v2115
    %2120 = vrot.lane.b32.xlu0 %v2050, 64
    %v2121 = vpop.permute.xlu0 %2120
    %2123 = vrot.lane.b32.xlu0 %v2051, 64
    %v2124 = vpop.permute.xlu0 %2123
    %v2126 = vsel %vm425, %v2121, 0
    %v2129 = vsel %vm425, %v2124, 0
    %2131 = vmatpush.bf16.xpose.msra.mxu0 0
    %2132 = vmatpush.bf16.xpose.msra.mxu0 0
    %2133 = vmatpush.bf16.xpose.msra.mxu0 0
    %2134 = vmatpush.bf16.xpose.msra.mxu0 0
    %2135 = vmatpush.bf16.xpose.msra.mxu0 0
    %2136 = vmatpush.bf16.xpose.msra.mxu0 0
    %2137 = vmatpush.bf16.xpose.msra.mxu0 0
    %2138 = vmatpush.bf16.xpose.msra.mxu0 %v2129
    %2139 = vmatmul.bf16.gmra.mxu0 %v2126
    %v2140 = vpop.f32.mrf.mxu0
    %v2141 = vadd.f32 0.0, %v2140
    %v2142 = vpop.f32.mrf.mxu0
    %2143 = vdwg.mxu0
    %v2144 = vmul.f32 %v2141, 0.125
    %v2145 = vadd.f32 %v2144, %v195
    %v2146 = vsel %vm447, %v2145, -inf
    %2147 = vmax.xlane.f32.xlu0 %v2146
    %v2148 = vpop.xlane.xlu0 %2147
    %v2149 = vsub.f32 %v2145, %v2148
    %v2150 = vmul.f32 %v2149, 1.442695
    %v2151 = vpow.pop %v2150
    %v2152 = vsel %vm447, %v2151, 0.0
    %2153 = vadd.xlane.f32.xlu0 %v2152
    %v2154 = vpop.xlane.xlu0 %2153
    %v2155 = vrcp.pop %v2154
    %v2156 = vmul.f32 %v2154, %v2155
    %v2157 = vsub.f32 1.0, %v2156
    %v2158 = vmul.f32 %v2155, %v2157
    %v2159 = vadd.f32 %v2155, %v2158
    %vm2160 = vweird.f32 %v2154
    %vm2161 = vweird.f32 %v2155
    %vm2162 = vmor %vm2160, %vm2161
    %v2163 = vsel %vm2162, %v2155, %v2159
    %v2164 = vand.u32 2147483647, %v2154
    %vm2165 = vcmp.eq.f32.partialorder %v2164, 8.507059e+37
    %v2166 = vand.u32 %v2154, 2147483648
    %v2167 = vor.u32 1.1754944e-38, %v2166
    %v2168 = vsel %vm2165, %v2167, %v2163
    %v2169 = vmul.f32 %v2151, %v2168
    %v2170 = vpack.c.bf16 %v2169, %v2169
    %2172 = vrot.lane.b32.xlu0 %v2098, 64
    %v2173 = vpop.permute.xlu0 %2172
    %v2175 = vsel %vm447, %v2170, 0
    %v2178 = vsel %vm477, %v2173, 0
    %2180 = vmatpush.bf16.msra.mxu0 0
    %2181 = vmatpush.bf16.msra.mxu0 0
    %2182 = vmatpush.bf16.msra.mxu0 0
    %2183 = vmatpush.bf16.msra.mxu0 0
    %2184 = vmatpush.bf16.msra.mxu0 0
    %2185 = vmatpush.bf16.msra.mxu0 0
    %2186 = vmatpush.bf16.msra.mxu0 0
    %2187 = vmatpush.bf16.msra.mxu0 %v2178
    %2188 = vmatmul.bf16.gmra.mxu0 %v2175
    %v2189 = vpop.f32.mrf.mxu0
    %v2190 = vadd.f32 0.0, %v2189
    %v2191 = vpop.f32.mrf.mxu0
    %2192 = vdwg.mxu0
    %v2193 = vpack.c.bf16 %v2190, %v2190
    %v2195 = vsel %vm425, %v2193, 0
    %2197 = vmatpush.bf16.msra.mxu0 0
    %2198 = vmatpush.bf16.msra.mxu0 0
    %2199 = vmatpush.bf16.msra.mxu0 0
    %2200 = vmatpush.bf16.msra.mxu0 0
    %2201 = vmatpush.bf16.msra.mxu0 %v1988
    %2202 = vmatpush.bf16.msra.mxu0 %v1987
    %2203 = vmatpush.bf16.msra.mxu0 %v1986
    %2204 = vmatpush.bf16.msra.mxu0 %v1985
    %2205 = vmatmul.bf16.gmra.mxu0 %v2195
    %v2206 = vpop.f32.mrf.mxu0
    %v2207 = vadd.f32 0.0, %v2206
    %v2208 = vpop.f32.mrf.mxu0
    %2209 = vdwg.mxu0
    %v2211 = vsel %vm425, %v2118, 0
    %2213 = vmatpush.bf16.msra.mxu0 0
    %2214 = vmatpush.bf16.msra.mxu0 0
    %2215 = vmatpush.bf16.msra.mxu0 0
    %2216 = vmatpush.bf16.msra.mxu0 0
    %2217 = vmatpush.bf16.msra.mxu0 %v2028
    %2218 = vmatpush.bf16.msra.mxu0 %v2027
    %2219 = vmatpush.bf16.msra.mxu0 %v2026
    %2220 = vmatpush.bf16.msra.mxu0 %v2025
    %2221 = vmatmul.bf16.gmra.mxu0 %v2211
    %v2222 = vpop.f32.mrf.mxu0
    %v2223 = vadd.f32 %v2207, %v2222
    %v2224 = vpop.f32.mrf.mxu0
    %2225 = vdwg.mxu0
    %2226 = vst [vmem:[#allocation2 + $0x8] sm:$0xff] %v2223
    %v2227 = vld [vmem:[#allocation2] sm:$0xff]
    %v2228 = vld [vmem:[#allocation2 + $0x8] sm:$0xff]
    %s2229 = scalar_lea.vmem %s7, 1
    %v2230 = vld [vmem:[%s2229] sm:$0x1]
    %v2232 = vperm.slane %v2230, 0
    %v2234 = vadd.f32 %v2227, %v2232
    %v2235 = vadd.f32 %v2228, %v2232
    %v2236 = vadd.f32 %v2234, %v1593
    %v2237 = vadd.f32 %v2235, %v1594
    %s2238 = scalar_lea.vmem %s8, 1
    %v2239 = vld [vmem:[%s2238] sm:$0x1]
    %s2240 = scalar_lea.vmem %s9, 1
    %v2241 = vld [vmem:[%s2240] sm:$0x1]
    %2242 = vadd.xlane.f32.xlu0 %v2236
    %v2243 = vpop.xlane.xlu0 %2242
    %2244 = vadd.xlane.f32.xlu0 %v2237
    %v2245 = vpop.xlane.xlu0 %2244
    %v2246 = vmul.f32 %v2243, %v145
    %v2247 = vmul.f32 %v2245, %v145
    %v2248 = vsub.f32 %v2236, %v2246
    %v2249 = vsub.f32 %v2237, %v2247
    %v2250 = vmul.f32 %v2248, %v2248
    %v2251 = vmul.f32 %v2249, %v2249
    %2252 = vadd.xlane.f32.xlu0 %v2250
    %v2253 = vpop.xlane.xlu0 %2252
    %2254 = vadd.xlane.f32.xlu0 %v2251
    %v2255 = vpop.xlane.xlu0 %2254
    %v2256 = vmul.f32 %v2253, %v145
    %v2257 = vmul.f32 %v2255, %v145
    %v2258 = vadd.f32 %v2256, 1e-12
    %v2259 = vadd.f32 %v2257, 1e-12
    %v2260 = vrsqrt.pop %v2258
    %v2261 = vmul.f32 %v2260, %v2258
    %v2262 = vmul.f32 %v2261, %v2260
    %v2263 = vmul.f32 0.5, %v2262
    %v2264 = vsub.f32 1.5, %v2263
    %v2265 = vmul.f32 %v2260, %v2264
    %vm2266 = vweird.f32 %v2258
    %vm2267 = vweird.f32 %v2260
    %vm2268 = vmor %vm2266, %vm2267
    %v2269 = vsel %vm2268, %v2260, %v2265
    %v2270 = vrsqrt.pop %v2259
    %v2271 = vmul.f32 %v2270, %v2259
    %v2272 = vmul.f32 %v2271, %v2270
    %v2273 = vmul.f32 0.5, %v2272
    %v2274 = vsub.f32 1.5, %v2273
    %v2275 = vmul.f32 %v2270, %v2274
    %vm2276 = vweird.f32 %v2259
    %vm2277 = vweird.f32 %v2270
    %vm2278 = vmor %vm2276, %vm2277
    %v2279 = vsel %vm2278, %v2270, %v2275
    %v2280 = vmul.f32 %v2248, %v2269
    %v2281 = vmul.f32 %v2249, %v2279
    %v2283 = vperm.slane %v2239, 0
    %v2285 = vmul.f32 %v2280, %v2283
    %v2286 = vmul.f32 %v2281, %v2283
    %v2288 = vperm.slane %v2241, 0
    %v2290 = vadd.f32 %v2285, %v2288
    %v2291 = vadd.f32 %v2286, %v2288
    %v2292 = vpack.c.bf16 %v2291, %v2290
    %s2293 = scalar_lea.vmem [#allocation6], 256
    %v2294 = vld [vmem:[%s2293] sm:$0xff]
    %v2295 = vld [vmem:[%s2293 + $0x8] sm:$0xff]
    %v2296 = vld [vmem:[%s2293 + $0x10] sm:$0xff]
    %v2297 = vld [vmem:[%s2293 + $0x18] sm:$0xff]
    %v2298 = vld [vmem:[%s2293 + $0x20] sm:$0xff]
    %v2299 = vld [vmem:[%s2293 + $0x28] sm:$0xff]
    %v2300 = vld [vmem:[%s2293 + $0x30] sm:$0xff]
    %v2301 = vld [vmem:[%s2293 + $0x38] sm:$0xff]
    %v2302 = vld [vmem:[%s2293 + $0x40] sm:$0xff]
    %v2303 = vld [vmem:[%s2293 + $0x48] sm:$0xff]
    %v2304 = vld [vmem:[%s2293 + $0x50] sm:$0xff]
    %v2305 = vld [vmem:[%s2293 + $0x58] sm:$0xff]
    %v2306 = vld [vmem:[%s2293 + $0x60] sm:$0xff]
    %v2307 = vld [vmem:[%s2293 + $0x68] sm:$0xff]
    %v2308 = vld [vmem:[%s2293 + $0x70] sm:$0xff]
    %v2309 = vld [vmem:[%s2293 + $0x78] sm:$0xff]
    %v2310 = vld [vmem:[%s2293 + $0x80] sm:$0xff]
    %v2311 = vld [vmem:[%s2293 + $0x88] sm:$0xff]
    %v2312 = vld [vmem:[%s2293 + $0x90] sm:$0xff]
    %v2313 = vld [vmem:[%s2293 + $0x98] sm:$0xff]
    %v2314 = vld [vmem:[%s2293 + $0xa0] sm:$0xff]
    %v2315 = vld [vmem:[%s2293 + $0xa8] sm:$0xff]
    %v2316 = vld [vmem:[%s2293 + $0xb0] sm:$0xff]
    %v2317 = vld [vmem:[%s2293 + $0xb8] sm:$0xff]
    %v2318 = vld [vmem:[%s2293 + $0xc0] sm:$0xff]
    %v2319 = vld [vmem:[%s2293 + $0xc8] sm:$0xff]
    %v2320 = vld [vmem:[%s2293 + $0xd0] sm:$0xff]
    %v2321 = vld [vmem:[%s2293 + $0xd8] sm:$0xff]
    %v2322 = vld [vmem:[%s2293 + $0xe0] sm:$0xff]
    %v2323 = vld [vmem:[%s2293 + $0xe8] sm:$0xff]
    %v2324 = vld [vmem:[%s2293 + $0xf0] sm:$0xff]
    %v2325 = vld [vmem:[%s2293 + $0xf8] sm:$0xff]
    %s2326 = scalar_lea.vmem %s11, 4
    %v2327 = vld [vmem:[%s2326] sm:$0xf]
    %v2329 = vperm.slane %v2327, 0
    %v2330 = vperm.slane %v2327, 1
    %v2331 = vperm.slane %v2327, 2
    %v2332 = vperm.slane %v2327, 3
    %v2369 = vunpack.c.l.b16 %v2294
    %v2370 = vunpack.c.h.b16 %v2294
    %v2371 = vunpack.c.l.b16 %v2295
    %v2372 = vunpack.c.h.b16 %v2295
    %v2373 = vunpack.c.l.b16 %v2296
    %v2374 = vunpack.c.h.b16 %v2296
    %v2375 = vunpack.c.l.b16 %v2297
    %v2376 = vunpack.c.h.b16 %v2297
    %v2377 = vunpack.c.l.b16 %v2298
    %v2378 = vunpack.c.h.b16 %v2298
    %v2379 = vunpack.c.l.b16 %v2299
    %v2380 = vunpack.c.h.b16 %v2299
    %v2381 = vunpack.c.l.b16 %v2300
    %v2382 = vunpack.c.h.b16 %v2300
    %v2383 = vunpack.c.l.b16 %v2301
    %v2384 = vunpack.c.h.b16 %v2301
    %v2385 = vunpack.c.l.b16 %v2302
    %v2386 = vunpack.c.h.b16 %v2302
    %v2387 = vunpack.c.l.b16 %v2303
    %v2388 = vunpack.c.h.b16 %v2303
    %v2389 = vunpack.c.l.b16 %v2304
    %v2390 = vunpack.c.h.b16 %v2304
    %v2391 = vunpack.c.l.b16 %v2305
    %v2392 = vunpack.c.h.b16 %v2305
    %v2393 = vunpack.c.l.b16 %v2306
    %v2394 = vunpack.c.h.b16 %v2306
    %v2395 = vunpack.c.l.b16 %v2307
    %v2396 = vunpack.c.h.b16 %v2307
    %v2397 = vunpack.c.l.b16 %v2308
    %v2398 = vunpack.c.h.b16 %v2308
    %v2399 = vunpack.c.l.b16 %v2309
    %v2400 = vunpack.c.h.b16 %v2309
    %v2401 = vunpack.c.l.b16 %v2310
    %v2402 = vunpack.c.h.b16 %v2310
    %v2403 = vunpack.c.l.b16 %v2311
    %v2404 = vunpack.c.h.b16 %v2311
    %v2405 = vunpack.c.l.b16 %v2312
    %v2406 = vunpack.c.h.b16 %v2312
    %v2407 = vunpack.c.l.b16 %v2313
    %v2408 = vunpack.c.h.b16 %v2313
    %v2409 = vunpack.c.l.b16 %v2314
    %v2410 = vunpack.c.h.b16 %v2314
    %v2411 = vunpack.c.l.b16 %v2315
    %v2412 = vunpack.c.h.b16 %v2315
    %v2413 = vunpack.c.l.b16 %v2316
    %v2414 = vunpack.c.h.b16 %v2316
    %v2415 = vunpack.c.l.b16 %v2317
    %v2416 = vunpack.c.h.b16 %v2317
    %v2417 = vunpack.c.l.b16 %v2318
    %v2418 = vunpack.c.h.b16 %v2318
    %v2419 = vunpack.c.l.b16 %v2319
    %v2420 = vunpack.c.h.b16 %v2319
    %v2421 = vunpack.c.l.b16 %v2320
    %v2422 = vunpack.c.h.b16 %v2320
    %v2423 = vunpack.c.l.b16 %v2321
    %v2424 = vunpack.c.h.b16 %v2321
    %v2425 = vunpack.c.l.b16 %v2322
    %v2426 = vunpack.c.h.b16 %v2322
    %v2427 = vunpack.c.l.b16 %v2323
    %v2428 = vunpack.c.h.b16 %v2323
    %v2429 = vunpack.c.l.b16 %v2324
    %v2430 = vunpack.c.h.b16 %v2324
    %v2431 = vunpack.c.l.b16 %v2325
    %v2432 = vunpack.c.h.b16 %v2325
    %v2433 = vpack.c.b16 %v2373, %v2369
    %v2434 = vpack.c.b16 %v2374, %v2370
    %v2435 = vpack.c.b16 %v2375, %v2371
    %v2436 = vpack.c.b16 %v2376, %v2372
    %v2437 = vpack.c.b16 %v2381, %v2377
    %v2438 = vpack.c.b16 %v2382, %v2378
    %v2439 = vpack.c.b16 %v2383, %v2379
    %v2440 = vpack.c.b16 %v2384, %v2380
    %v2441 = vpack.c.b16 %v2389, %v2385
    %v2442 = vpack.c.b16 %v2390, %v2386
    %v2443 = vpack.c.b16 %v2391, %v2387
    %v2444 = vpack.c.b16 %v2392, %v2388
    %v2445 = vpack.c.b16 %v2397, %v2393
    %v2446 = vpack.c.b16 %v2398, %v2394
    %v2447 = vpack.c.b16 %v2399, %v2395
    %v2448 = vpack.c.b16 %v2400, %v2396
    %v2449 = vpack.c.b16 %v2405, %v2401
    %v2450 = vpack.c.b16 %v2406, %v2402
    %v2451 = vpack.c.b16 %v2407, %v2403
    %v2452 = vpack.c.b16 %v2408, %v2404
    %v2453 = vpack.c.b16 %v2413, %v2409
    %v2454 = vpack.c.b16 %v2414, %v2410
    %v2455 = vpack.c.b16 %v2415, %v2411
    %v2456 = vpack.c.b16 %v2416, %v2412
    %v2457 = vpack.c.b16 %v2421, %v2417
    %v2458 = vpack.c.b16 %v2422, %v2418
    %v2459 = vpack.c.b16 %v2423, %v2419
    %v2460 = vpack.c.b16 %v2424, %v2420
    %v2461 = vpack.c.b16 %v2429, %v2425
    %v2462 = vpack.c.b16 %v2430, %v2426
    %v2463 = vpack.c.b16 %v2431, %v2427
    %v2464 = vpack.c.b16 %v2432, %v2428
    %2497 = vmatpush.bf16.msra.mxu0 %v2461
    %2498 = vmatpush.bf16.msra.mxu0 %v2457
    %2499 = vmatpush.bf16.msra.mxu0 %v2453
    %2500 = vmatpush.bf16.msra.mxu0 %v2449
    %2501 = vmatpush.bf16.msra.mxu0 %v2445
    %2502 = vmatpush.bf16.msra.mxu0 %v2441
    %2503 = vmatpush.bf16.msra.mxu0 %v2437
    %2504 = vmatpush.bf16.msra.mxu0 %v2433
    %2505 = vmatmul.bf16.gmra.mxu0 %v2292
    %v2506 = vpop.f32.mrf.mxu0
    %v2507 = vadd.f32 %v2329, %v2506
    %v2508 = vpop.f32.mrf.mxu0
    %v2509 = vadd.f32 %v2329, %v2508
    %2510 = vdwg.mxu0
    %2511 = vmatpush.bf16.msra.mxu0 %v2462
    %2512 = vmatpush.bf16.msra.mxu0 %v2458
    %2513 = vmatpush.bf16.msra.mxu0 %v2454
    %2514 = vmatpush.bf16.msra.mxu0 %v2450
    %2515 = vmatpush.bf16.msra.mxu0 %v2446
    %2516 = vmatpush.bf16.msra.mxu0 %v2442
    %2517 = vmatpush.bf16.msra.mxu0 %v2438
    %2518 = vmatpush.bf16.msra.mxu0 %v2434
    %2519 = vmatmul.bf16.gmra.mxu0 %v2292
    %v2520 = vpop.f32.mrf.mxu0
    %v2521 = vadd.f32 %v2330, %v2520
    %v2522 = vpop.f32.mrf.mxu0
    %v2523 = vadd.f32 %v2330, %v2522
    %2524 = vdwg.mxu0
    %2525 = vmatpush.bf16.msra.mxu0 %v2463
    %2526 = vmatpush.bf16.msra.mxu0 %v2459
    %2527 = vmatpush.bf16.msra.mxu0 %v2455
    %2528 = vmatpush.bf16.msra.mxu0 %v2451
    %2529 = vmatpush.bf16.msra.mxu0 %v2447
    %2530 = vmatpush.bf16.msra.mxu0 %v2443
    %2531 = vmatpush.bf16.msra.mxu0 %v2439
    %2532 = vmatpush.bf16.msra.mxu0 %v2435
    %2533 = vmatmul.bf16.gmra.mxu0 %v2292
    %v2534 = vpop.f32.mrf.mxu0
    %v2535 = vadd.f32 %v2331, %v2534
    %v2536 = vpop.f32.mrf.mxu0
    %v2537 = vadd.f32 %v2331, %v2536
    %2538 = vdwg.mxu0
    %2539 = vmatpush.bf16.msra.mxu0 %v2464
    %2540 = vmatpush.bf16.msra.mxu0 %v2460
    %2541 = vmatpush.bf16.msra.mxu0 %v2456
    %2542 = vmatpush.bf16.msra.mxu0 %v2452
    %2543 = vmatpush.bf16.msra.mxu0 %v2448
    %2544 = vmatpush.bf16.msra.mxu0 %v2444
    %2545 = vmatpush.bf16.msra.mxu0 %v2440
    %2546 = vmatpush.bf16.msra.mxu0 %v2436
    %2547 = vmatmul.bf16.gmra.mxu0 %v2292
    %v2548 = vpop.f32.mrf.mxu0
    %v2549 = vadd.f32 %v2332, %v2548
    %v2550 = vpop.f32.mrf.mxu0
    %v2551 = vadd.f32 %v2332, %v2550
    %2552 = vdwg.mxu0
    %v2553 = vmul.f32 %v2507, 0.5
    %v2554 = vmul.f32 %v2521, 0.5
    %v2555 = vmul.f32 %v2535, 0.5
    %v2556 = vmul.f32 %v2549, 0.5
    %v2557 = vmul.f32 %v2509, 0.5
    %v2558 = vmul.f32 %v2523, 0.5
    %v2559 = vmul.f32 %v2537, 0.5
    %v2560 = vmul.f32 %v2551, 0.5
    %v2561 = vmul.f32 %v2507, 0.044715
    %v2562 = vmul.f32 %v2521, 0.044715
    %v2563 = vmul.f32 %v2535, 0.044715
    %v2564 = vmul.f32 %v2549, 0.044715
    %v2565 = vmul.f32 %v2509, 0.044715
    %v2566 = vmul.f32 %v2523, 0.044715
    %v2567 = vmul.f32 %v2537, 0.044715
    %v2568 = vmul.f32 %v2551, 0.044715
    %v2569 = vmul.f32 %v2561, %v2507
    %v2570 = vmul.f32 %v2562, %v2521
    %v2571 = vmul.f32 %v2563, %v2535
    %v2572 = vmul.f32 %v2564, %v2549
    %v2573 = vmul.f32 %v2565, %v2509
    %v2574 = vmul.f32 %v2566, %v2523
    %v2575 = vmul.f32 %v2567, %v2537
    %v2576 = vmul.f32 %v2568, %v2551
    %v2577 = vmul.f32 %v2569, %v2507
    %v2578 = vmul.f32 %v2570, %v2521
    %v2579 = vmul.f32 %v2571, %v2535
    %v2580 = vmul.f32 %v2572, %v2549
    %v2581 = vmul.f32 %v2573, %v2509
    %v2582 = vmul.f32 %v2574, %v2523
    %v2583 = vmul.f32 %v2575, %v2537
    %v2584 = vmul.f32 %v2576, %v2551
    %v2585 = vadd.f32 %v2507, %v2577
    %v2586 = vadd.f32 %v2521, %v2578
    %v2587 = vadd.f32 %v2535, %v2579
    %v2588 = vadd.f32 %v2549, %v2580
    %v2589 = vadd.f32 %v2509, %v2581
    %v2590 = vadd.f32 %v2523, %v2582
    %v2591 = vadd.f32 %v2537, %v2583
    %v2592 = vadd.f32 %v2551, %v2584
    %v2593 = vmul.f32 %v2585, 0.7978846
    %v2594 = vmul.f32 %v2586, 0.7978846
    %v2595 = vmul.f32 %v2587, 0.7978846
    %v2596 = vmul.f32 %v2588, 0.7978846
    %v2597 = vmul.f32 %v2589, 0.7978846
    %v2598 = vmul.f32 %v2590, 0.7978846
    %v2599 = vmul.f32 %v2591, 0.7978846
    %v2600 = vmul.f32 %v2592, 0.7978846
    %v2601 = vtanh.pop %v2593
    %v2602 = vtanh.pop %v2594
    %v2603 = vtanh.pop %v2595
    %v2604 = vtanh.pop %v2596
    %v2605 = vtanh.pop %v2597
    %v2606 = vtanh.pop %v2598
    %v2607 = vtanh.pop %v2599
    %v2608 = vtanh.pop %v2600
    %v2609 = vadd.f32 %v2601, 1.0
    %v2610 = vadd.f32 %v2602, 1.0
    %v2611 = vadd.f32 %v2603, 1.0
    %v2612 = vadd.f32 %v2604, 1.0
    %v2613 = vadd.f32 %v2605, 1.0
    %v2614 = vadd.f32 %v2606, 1.0
    %v2615 = vadd.f32 %v2607, 1.0
    %v2616 = vadd.f32 %v2608, 1.0
    %v2617 = vmul.f32 %v2553, %v2609
    %v2618 = vmul.f32 %v2554, %v2610
    %v2619 = vmul.f32 %v2555, %v2611
    %v2620 = vmul.f32 %v2556, %v2612
    %v2621 = vmul.f32 %v2557, %v2613
    %v2622 = vmul.f32 %v2558, %v2614
    %v2623 = vmul.f32 %v2559, %v2615
    %v2624 = vmul.f32 %v2560, %v2616
    %v2625 = vpack.c.bf16 %v2621, %v2617
    %v2626 = vpack.c.bf16 %v2622, %v2618
    %v2627 = vpack.c.bf16 %v2623, %v2619
    %v2628 = vpack.c.bf16 %v2624, %v2620
    %s2629 = scalar_lea.vmem [#allocation8], 256
    %v2630 = vld [vmem:[%s2629] sm:$0xf]
    %v2631 = vld [vmem:[%s2629 + $0x4] sm:$0xf]
    %v2632 = vld [vmem:[%s2629 + $0x8] sm:$0xf]
    %v2633 = vld [vmem:[%s2629 + $0xc] sm:$0xf]
    %v2634 = vld [vmem:[%s2629 + $0x10] sm:$0xf]
    %v2635 = vld [vmem:[%s2629 + $0x14] sm:$0xf]
    %v2636 = vld [vmem:[%s2629 + $0x18] sm:$0xf]
    %v2637 = vld [vmem:[%s2629 + $0x1c] sm:$0xf]
    %v2638 = vld [vmem:[%s2629 + $0x20] sm:$0xf]
    %v2639 = vld [vmem:[%s2629 + $0x24] sm:$0xf]
    %v2640 = vld [vmem:[%s2629 + $0x28] sm:$0xf]
    %v2641 = vld [vmem:[%s2629 + $0x2c] sm:$0xf]
    %v2642 = vld [vmem:[%s2629 + $0x30] sm:$0xf]
    %v2643 = vld [vmem:[%s2629 + $0x34] sm:$0xf]
    %v2644 = vld [vmem:[%s2629 + $0x38] sm:$0xf]
    %v2645 = vld [vmem:[%s2629 + $0x3c] sm:$0xf]
    %v2646 = vld [vmem:[%s2629 + $0x40] sm:$0xf]
    %v2647 = vld [vmem:[%s2629 + $0x44] sm:$0xf]
    %v2648 = vld [vmem:[%s2629 + $0x48] sm:$0xf]
    %v2649 = vld [vmem:[%s2629 + $0x4c] sm:$0xf]
    %v2650 = vld [vmem:[%s2629 + $0x50] sm:$0xf]
    %v2651 = vld [vmem:[%s2629 + $0x54] sm:$0xf]
    %v2652 = vld [vmem:[%s2629 + $0x58] sm:$0xf]
    %v2653 = vld [vmem:[%s2629 + $0x5c] sm:$0xf]
    %v2654 = vld [vmem:[%s2629 + $0x60] sm:$0xf]
    %v2655 = vld [vmem:[%s2629 + $0x64] sm:$0xf]
    %v2656 = vld [vmem:[%s2629 + $0x68] sm:$0xf]
    %v2657 = vld [vmem:[%s2629 + $0x6c] sm:$0xf]
    %v2658 = vld [vmem:[%s2629 + $0x70] sm:$0xf]
    %v2659 = vld [vmem:[%s2629 + $0x74] sm:$0xf]
    %v2660 = vld [vmem:[%s2629 + $0x78] sm:$0xf]
    %v2661 = vld [vmem:[%s2629 + $0x7c] sm:$0xf]
    %v2662 = vld [vmem:[%s2629 + $0x80] sm:$0xf]
    %v2663 = vld [vmem:[%s2629 + $0x84] sm:$0xf]
    %v2664 = vld [vmem:[%s2629 + $0x88] sm:$0xf]
    %v2665 = vld [vmem:[%s2629 + $0x8c] sm:$0xf]
    %v2666 = vld [vmem:[%s2629 + $0x90] sm:$0xf]
    %v2667 = vld [vmem:[%s2629 + $0x94] sm:$0xf]
    %v2668 = vld [vmem:[%s2629 + $0x98] sm:$0xf]
    %v2669 = vld [vmem:[%s2629 + $0x9c] sm:$0xf]
    %v2670 = vld [vmem:[%s2629 + $0xa0] sm:$0xf]
    %v2671 = vld [vmem:[%s2629 + $0xa4] sm:$0xf]
    %v2672 = vld [vmem:[%s2629 + $0xa8] sm:$0xf]
    %v2673 = vld [vmem:[%s2629 + $0xac] sm:$0xf]
    %v2674 = vld [vmem:[%s2629 + $0xb0] sm:$0xf]
    %v2675 = vld [vmem:[%s2629 + $0xb4] sm:$0xf]
    %v2676 = vld [vmem:[%s2629 + $0xb8] sm:$0xf]
    %v2677 = vld [vmem:[%s2629 + $0xbc] sm:$0xf]
    %v2678 = vld [vmem:[%s2629 + $0xc0] sm:$0xf]
    %v2679 = vld [vmem:[%s2629 + $0xc4] sm:$0xf]
    %v2680 = vld [vmem:[%s2629 + $0xc8] sm:$0xf]
    %v2681 = vld [vmem:[%s2629 + $0xcc] sm:$0xf]
    %v2682 = vld [vmem:[%s2629 + $0xd0] sm:$0xf]
    %v2683 = vld [vmem:[%s2629 + $0xd4] sm:$0xf]
    %v2684 = vld [vmem:[%s2629 + $0xd8] sm:$0xf]
    %v2685 = vld [vmem:[%s2629 + $0xdc] sm:$0xf]
    %v2686 = vld [vmem:[%s2629 + $0xe0] sm:$0xf]
    %v2687 = vld [vmem:[%s2629 + $0xe4] sm:$0xf]
    %v2688 = vld [vmem:[%s2629 + $0xe8] sm:$0xf]
    %v2689 = vld [vmem:[%s2629 + $0xec] sm:$0xf]
    %v2690 = vld [vmem:[%s2629 + $0xf0] sm:$0xf]
    %v2691 = vld [vmem:[%s2629 + $0xf4] sm:$0xf]
    %v2692 = vld [vmem:[%s2629 + $0xf8] sm:$0xf]
    %v2693 = vld [vmem:[%s2629 + $0xfc] sm:$0xf]
    %s2694 = scalar_lea.vmem %s13, 1
    %v2695 = vld [vmem:[%s2694] sm:$0x1]
    %v2697 = vperm.slane %v2695, 0
    %v2763 = vunpack.c.l.b16 %v2630
    %v2764 = vunpack.c.l.b16 %v2631
    %v2765 = vunpack.c.l.b16 %v2632
    %v2766 = vunpack.c.l.b16 %v2633
    %v2767 = vunpack.c.l.b16 %v2634
    %v2768 = vunpack.c.l.b16 %v2635
    %v2769 = vunpack.c.l.b16 %v2636
    %v2770 = vunpack.c.l.b16 %v2637
    %v2771 = vunpack.c.l.b16 %v2638
    %v2772 = vunpack.c.l.b16 %v2639
    %v2773 = vunpack.c.l.b16 %v2640
    %v2774 = vunpack.c.l.b16 %v2641
    %v2775 = vunpack.c.l.b16 %v2642
    %v2776 = vunpack.c.l.b16 %v2643
    %v2777 = vunpack.c.l.b16 %v2644
    %v2778 = vunpack.c.l.b16 %v2645
    %v2779 = vunpack.c.l.b16 %v2646
    %v2780 = vunpack.c.l.b16 %v2647
    %v2781 = vunpack.c.l.b16 %v2648
    %v2782 = vunpack.c.l.b16 %v2649
    %v2783 = vunpack.c.l.b16 %v2650
    %v2784 = vunpack.c.l.b16 %v2651
    %v2785 = vunpack.c.l.b16 %v2652
    %v2786 = vunpack.c.l.b16 %v2653
    %v2787 = vunpack.c.l.b16 %v2654
    %v2788 = vunpack.c.l.b16 %v2655
    %v2789 = vunpack.c.l.b16 %v2656
    %v2790 = vunpack.c.l.b16 %v2657
    %v2791 = vunpack.c.l.b16 %v2658
    %v2792 = vunpack.c.l.b16 %v2659
    %v2793 = vunpack.c.l.b16 %v2660
    %v2794 = vunpack.c.l.b16 %v2661
    %v2795 = vunpack.c.l.b16 %v2662
    %v2796 = vunpack.c.l.b16 %v2663
    %v2797 = vunpack.c.l.b16 %v2664
    %v2798 = vunpack.c.l.b16 %v2665
    %v2799 = vunpack.c.l.b16 %v2666
    %v2800 = vunpack.c.l.b16 %v2667
    %v2801 = vunpack.c.l.b16 %v2668
    %v2802 = vunpack.c.l.b16 %v2669
    %v2803 = vunpack.c.l.b16 %v2670
    %v2804 = vunpack.c.l.b16 %v2671
    %v2805 = vunpack.c.l.b16 %v2672
    %v2806 = vunpack.c.l.b16 %v2673
    %v2807 = vunpack.c.l.b16 %v2674
    %v2808 = vunpack.c.l.b16 %v2675
    %v2809 = vunpack.c.l.b16 %v2676
    %v2810 = vunpack.c.l.b16 %v2677
    %v2811 = vunpack.c.l.b16 %v2678
    %v2812 = vunpack.c.l.b16 %v2679
    %v2813 = vunpack.c.l.b16 %v2680
    %v2814 = vunpack.c.l.b16 %v2681
    %v2815 = vunpack.c.l.b16 %v2682
    %v2816 = vunpack.c.l.b16 %v2683
    %v2817 = vunpack.c.l.b16 %v2684
    %v2818 = vunpack.c.l.b16 %v2685
    %v2819 = vunpack.c.l.b16 %v2686
    %v2820 = vunpack.c.l.b16 %v2687
    %v2821 = vunpack.c.l.b16 %v2688
    %v2822 = vunpack.c.l.b16 %v2689
    %v2823 = vunpack.c.l.b16 %v2690
    %v2824 = vunpack.c.l.b16 %v2691
    %v2825 = vunpack.c.l.b16 %v2692
    %v2826 = vunpack.c.l.b16 %v2693
    %v2827 = vpack.c.b16 %v2764, %v2763
    %v2828 = vpack.c.b16 %v2766, %v2765
    %v2829 = vpack.c.b16 %v2768, %v2767
    %v2830 = vpack.c.b16 %v2770, %v2769
    %v2831 = vpack.c.b16 %v2772, %v2771
    %v2832 = vpack.c.b16 %v2774, %v2773
    %v2833 = vpack.c.b16 %v2776, %v2775
    %v2834 = vpack.c.b16 %v2778, %v2777
    %v2835 = vpack.c.b16 %v2780, %v2779
    %v2836 = vpack.c.b16 %v2782, %v2781
    %v2837 = vpack.c.b16 %v2784, %v2783
    %v2838 = vpack.c.b16 %v2786, %v2785
    %v2839 = vpack.c.b16 %v2788, %v2787
    %v2840 = vpack.c.b16 %v2790, %v2789
    %v2841 = vpack.c.b16 %v2792, %v2791
    %v2842 = vpack.c.b16 %v2794, %v2793
    %v2843 = vpack.c.b16 %v2796, %v2795
    %v2844 = vpack.c.b16 %v2798, %v2797
    %v2845 = vpack.c.b16 %v2800, %v2799
    %v2846 = vpack.c.b16 %v2802, %v2801
    %v2847 = vpack.c.b16 %v2804, %v2803
    %v2848 = vpack.c.b16 %v2806, %v2805
    %v2849 = vpack.c.b16 %v2808, %v2807
    %v2850 = vpack.c.b16 %v2810, %v2809
    %v2851 = vpack.c.b16 %v2812, %v2811
    %v2852 = vpack.c.b16 %v2814, %v2813
    %v2853 = vpack.c.b16 %v2816, %v2815
    %v2854 = vpack.c.b16 %v2818, %v2817
    %v2855 = vpack.c.b16 %v2820, %v2819
    %v2856 = vpack.c.b16 %v2822, %v2821
    %v2857 = vpack.c.b16 %v2824, %v2823
    %v2858 = vpack.c.b16 %v2826, %v2825
    %2891 = vmatpush.bf16.msra.mxu0 %v2834
    %2892 = vmatpush.bf16.msra.mxu0 %v2833
    %2893 = vmatpush.bf16.msra.mxu0 %v2832
    %2894 = vmatpush.bf16.msra.mxu0 %v2831
    %2895 = vmatpush.bf16.msra.mxu0 %v2830
    %2896 = vmatpush.bf16.msra.mxu0 %v2829
    %2897 = vmatpush.bf16.msra.mxu0 %v2828
    %2898 = vmatpush.bf16.msra.mxu0 %v2827
    %2899 = vmatmul.bf16.gmra.mxu0 %v2625
    %v2900 = vpop.f32.mrf.mxu0
    %v2901 = vadd.f32 %v2697, %v2900
    %v2902 = vpop.f32.mrf.mxu0
    %v2903 = vadd.f32 %v2697, %v2902
    %2904 = vdwg.mxu0
    %2905 = vmatpush.bf16.msra.mxu0 %v2842
    %2906 = vmatpush.bf16.msra.mxu0 %v2841
    %2907 = vmatpush.bf16.msra.mxu0 %v2840
    %2908 = vmatpush.bf16.msra.mxu0 %v2839
    %2909 = vmatpush.bf16.msra.mxu0 %v2838
    %2910 = vmatpush.bf16.msra.mxu0 %v2837
    %2911 = vmatpush.bf16.msra.mxu0 %v2836
    %2912 = vmatpush.bf16.msra.mxu0 %v2835
    %2913 = vmatmul.bf16.gmra.mxu0 %v2626
    %v2914 = vpop.f32.mrf.mxu0
    %v2915 = vadd.f32 %v2901, %v2914
    %v2916 = vpop.f32.mrf.mxu0
    %v2917 = vadd.f32 %v2903, %v2916
    %2918 = vdwg.mxu0
    %2919 = vmatpush.bf16.msra.mxu0 %v2850
    %2920 = vmatpush.bf16.msra.mxu0 %v2849
    %2921 = vmatpush.bf16.msra.mxu0 %v2848
    %2922 = vmatpush.bf16.msra.mxu0 %v2847
    %2923 = vmatpush.bf16.msra.mxu0 %v2846
    %2924 = vmatpush.bf16.msra.mxu0 %v2845
    %2925 = vmatpush.bf16.msra.mxu0 %v2844
    %2926 = vmatpush.bf16.msra.mxu0 %v2843
    %2927 = vmatmul.bf16.gmra.mxu0 %v2627
    %v2928 = vpop.f32.mrf.mxu0
    %v2929 = vadd.f32 %v2915, %v2928
    %v2930 = vpop.f32.mrf.mxu0
    %v2931 = vadd.f32 %v2917, %v2930
    %2932 = vdwg.mxu0
    %2933 = vmatpush.bf16.msra.mxu0 %v2858
    %2934 = vmatpush.bf16.msra.mxu0 %v2857
    %2935 = vmatpush.bf16.msra.mxu0 %v2856
    %2936 = vmatpush.bf16.msra.mxu0 %v2855
    %2937 = vmatpush.bf16.msra.mxu0 %v2854
    %2938 = vmatpush.bf16.msra.mxu0 %v2853
    %2939 = vmatpush.bf16.msra.mxu0 %v2852
    %2940 = vmatpush.bf16.msra.mxu0 %v2851
    %2941 = vmatmul.bf16.gmra.mxu0 %v2628
    %v2942 = vpop.f32.mrf.mxu0
    %v2943 = vadd.f32 %v2929, %v2942
    %v2944 = vpop.f32.mrf.mxu0
    %v2945 = vadd.f32 %v2931, %v2944
    %2946 = vdwg.mxu0
    %v2947 = vadd.f32 %v2943, %v2290
    %v2948 = vadd.f32 %v2945, %v2291
    %s2949 = scalar_lea.vmem %s14, 1
    %v2950 = vld [vmem:[%s2949] sm:$0x1]
    %s2951 = scalar_lea.vmem %s15, 1
    %v2952 = vld [vmem:[%s2951] sm:$0x1]
    %2953 = vadd.xlane.f32.xlu0 %v2947
    %v2954 = vpop.xlane.xlu0 %2953
    %2955 = vadd.xlane.f32.xlu0 %v2948
    %v2956 = vpop.xlane.xlu0 %2955
    %v2957 = vmul.f32 %v2954, %v145
    %v2958 = vmul.f32 %v2956, %v145
    %v2959 = vsub.f32 %v2947, %v2957
    %v2960 = vsub.f32 %v2948, %v2958
    %v2961 = vmul.f32 %v2959, %v2959
    %v2962 = vmul.f32 %v2960, %v2960
    %2963 = vadd.xlane.f32.xlu0 %v2961
    %v2964 = vpop.xlane.xlu0 %2963
    %2965 = vadd.xlane.f32.xlu0 %v2962
    %v2966 = vpop.xlane.xlu0 %2965
    %v2967 = vmul.f32 %v2964, %v145
    %v2968 = vmul.f32 %v2966, %v145
    %v2969 = vadd.f32 %v2967, 1e-12
    %v2970 = vadd.f32 %v2968, 1e-12
    %v2971 = vrsqrt.pop %v2969
    %v2972 = vmul.f32 %v2971, %v2969
    %v2973 = vmul.f32 %v2972, %v2971
    %v2974 = vmul.f32 0.5, %v2973
    %v2975 = vsub.f32 1.5, %v2974
    %v2976 = vmul.f32 %v2971, %v2975
    %vm2977 = vweird.f32 %v2969
    %vm2978 = vweird.f32 %v2971
    %vm2979 = vmor %vm2977, %vm2978
    %v2980 = vsel %vm2979, %v2971, %v2976
    %v2981 = vrsqrt.pop %v2970
    %v2982 = vmul.f32 %v2981, %v2970
    %v2983 = vmul.f32 %v2982, %v2981
    %v2984 = vmul.f32 0.5, %v2983
    %v2985 = vsub.f32 1.5, %v2984
    %v2986 = vmul.f32 %v2981, %v2985
    %vm2987 = vweird.f32 %v2970
    %vm2988 = vweird.f32 %v2981
    %vm2989 = vmor %vm2987, %vm2988
    %v2990 = vsel %vm2989, %v2981, %v2986
    %v2991 = vmul.f32 %v2959, %v2980
    %v2992 = vmul.f32 %v2960, %v2990
    %v2994 = vperm.slane %v2950, 0
    %v2996 = vmul.f32 %v2991, %v2994
    %v2997 = vmul.f32 %v2992, %v2994
    %v2999 = vperm.slane %v2952, 0
    %v3001 = vadd.f32 %v2996, %v2999
    %v3002 = vadd.f32 %v2997, %v2999
    %v3004 = vrot.slane %v3002, 7
    %vm3006 = vcmask 1040384
    %v3007 = vsel %vm3006, %v3001, %v3004
    %v3008 = vpack.c.bf16 %v3007, %v3007
    %v3009 = vld [vmem:[#allocation9] sm:$0xf]
    %v3010 = vld [vmem:[#allocation9 + $0x4] sm:$0xf]
    %v3011 = vld [vmem:[#allocation9 + $0x8] sm:$0xf]
    %v3012 = vld [vmem:[#allocation9 + $0xc] sm:$0xf]
    %v3013 = vld [vmem:[#allocation9 + $0x10] sm:$0xf]
    %v3014 = vld [vmem:[#allocation9 + $0x14] sm:$0xf]
    %v3015 = vld [vmem:[#allocation9 + $0x18] sm:$0xf]
    %v3016 = vld [vmem:[#allocation9 + $0x1c] sm:$0xf]
    %v3017 = vld [vmem:[#allocation9 + $0x20] sm:$0xf]
    %v3018 = vld [vmem:[#allocation9 + $0x24] sm:$0xf]
    %v3019 = vld [vmem:[#allocation9 + $0x28] sm:$0xf]
    %v3020 = vld [vmem:[#allocation9 + $0x2c] sm:$0xf]
    %v3021 = vld [vmem:[#allocation9 + $0x30] sm:$0xf]
    %v3022 = vld [vmem:[#allocation9 + $0x34] sm:$0xf]
    %v3023 = vld [vmem:[#allocation9 + $0x38] sm:$0xf]
    %v3024 = vld [vmem:[#allocation9 + $0x3c] sm:$0xf]
    %v3025 = vld [vmem:[%s17] sm:$0x1]
    %v3027 = vperm.slane %v3025, 0
    %v3045 = vunpack.c.l.b16 %v3009
    %v3046 = vunpack.c.l.b16 %v3010
    %v3047 = vunpack.c.l.b16 %v3011
    %v3048 = vunpack.c.l.b16 %v3012
    %v3049 = vunpack.c.l.b16 %v3013
    %v3050 = vunpack.c.l.b16 %v3014
    %v3051 = vunpack.c.l.b16 %v3015
    %v3052 = vunpack.c.l.b16 %v3016
    %v3053 = vunpack.c.l.b16 %v3017
    %v3054 = vunpack.c.l.b16 %v3018
    %v3055 = vunpack.c.l.b16 %v3019
    %v3056 = vunpack.c.l.b16 %v3020
    %v3057 = vunpack.c.l.b16 %v3021
    %v3058 = vunpack.c.l.b16 %v3022
    %v3059 = vunpack.c.l.b16 %v3023
    %v3060 = vunpack.c.l.b16 %v3024
    %v3061 = vpack.c.b16 %v3046, %v3045
    %v3062 = vpack.c.b16 %v3048, %v3047
    %v3063 = vpack.c.b16 %v3050, %v3049
    %v3064 = vpack.c.b16 %v3052, %v3051
    %v3065 = vpack.c.b16 %v3054, %v3053
    %v3066 = vpack.c.b16 %v3056, %v3055
    %v3067 = vpack.c.b16 %v3058, %v3057
    %v3068 = vpack.c.b16 %v3060, %v3059
    %3077 = vmatpush.bf16.msra.mxu0 %v3068
    %3078 = vmatpush.bf16.msra.mxu0 %v3067
    %3079 = vmatpush.bf16.msra.mxu0 %v3066
    %3080 = vmatpush.bf16.msra.mxu0 %v3065
    %3081 = vmatpush.bf16.msra.mxu0 %v3064
    %3082 = vmatpush.bf16.msra.mxu0 %v3063
    %3083 = vmatpush.bf16.msra.mxu0 %v3062
    %3084 = vmatpush.bf16.msra.mxu0 %v3061
    %3085 = vmatmul.bf16.gmra.mxu0 %v3008
    %v3086 = vpop.f32.mrf.mxu0
    %v3087 = vadd.f32 %v3027, %v3086
    %v3088 = vpop.f32.mrf.mxu0
    %3089 = vdwg.mxu0
    %v3090 = vxor.u32 %v3087, 2147483648
    %v3091 = vmul.f32 %v3090, 1.442695
    %v3092 = vpow.pop %v3091
    %v3093 = vadd.f32 %v3092, 1.0
    %v3094 = vrcp.pop %v3093
    %v3095 = vmul.f32 %v3093, %v3094
    %v3096 = vsub.f32 1.0, %v3095
    %v3097 = vmul.f32 %v3094, %v3096
    %v3098 = vadd.f32 %v3094, %v3097
    %vm3099 = vweird.f32 %v3093
    %vm3100 = vweird.f32 %v3094
    %vm3101 = vmor %vm3099, %vm3100
    %v3102 = vsel %vm3101, %v3094, %v3098
    %v3103 = vand.u32 2147483647, %v3093
    %vm3104 = vcmp.eq.f32.partialorder %v3103, 8.507059e+37
    %v3105 = vand.u32 %v3093, 2147483648
    %v3106 = vor.u32 1.1754944e-38, %v3105
    %v3107 = vsel %vm3104, %v3106, %v3102
    %v3108 = vmul.f32 1.0, %v3107
    %v3109 = vmul.f32 %v3087, %v3108
    %v3110 = vpack.c.bf16 %v3109, %v3109
    %s3111 = scalar_lea.vmem [#allocation9], 64
    %v3112 = vld [vmem:[%s3111] sm:$0xf]
    %v3113 = vld [vmem:[%s3111 + $0x4] sm:$0xf]
    %v3114 = vld [vmem:[%s3111 + $0x8] sm:$0xf]
    %v3115 = vld [vmem:[%s3111 + $0xc] sm:$0xf]
    %v3116 = vld [vmem:[%s3111 + $0x10] sm:$0xf]
    %v3117 = vld [vmem:[%s3111 + $0x14] sm:$0xf]
    %v3118 = vld [vmem:[%s3111 + $0x18] sm:$0xf]
    %v3119 = vld [vmem:[%s3111 + $0x1c] sm:$0xf]
    %v3120 = vld [vmem:[%s3111 + $0x20] sm:$0xf]
    %v3121 = vld [vmem:[%s3111 + $0x24] sm:$0xf]
    %v3122 = vld [vmem:[%s3111 + $0x28] sm:$0xf]
    %v3123 = vld [vmem:[%s3111 + $0x2c] sm:$0xf]
    %v3124 = vld [vmem:[%s3111 + $0x30] sm:$0xf]
    %v3125 = vld [vmem:[%s3111 + $0x34] sm:$0xf]
    %v3126 = vld [vmem:[%s3111 + $0x38] sm:$0xf]
    %v3127 = vld [vmem:[%s3111 + $0x3c] sm:$0xf]
    %s3128 = scalar_lea.vmem %s17, 1
    %v3129 = vld [vmem:[%s3128] sm:$0x1]
    %v3131 = vperm.slane %v3129, 0
    %v3149 = vunpack.c.l.b16 %v3112
    %v3150 = vunpack.c.l.b16 %v3113
    %v3151 = vunpack.c.l.b16 %v3114
    %v3152 = vunpack.c.l.b16 %v3115
    %v3153 = vunpack.c.l.b16 %v3116
    %v3154 = vunpack.c.l.b16 %v3117
    %v3155 = vunpack.c.l.b16 %v3118
    %v3156 = vunpack.c.l.b16 %v3119
    %v3157 = vunpack.c.l.b16 %v3120
    %v3158 = vunpack.c.l.b16 %v3121
    %v3159 = vunpack.c.l.b16 %v3122
    %v3160 = vunpack.c.l.b16 %v3123
    %v3161 = vunpack.c.l.b16 %v3124
    %v3162 = vunpack.c.l.b16 %v3125
    %v3163 = vunpack.c.l.b16 %v3126
    %v3164 = vunpack.c.l.b16 %v3127
    %v3165 = vpack.c.b16 %v3150, %v3149
    %v3166 = vpack.c.b16 %v3152, %v3151
    %v3167 = vpack.c.b16 %v3154, %v3153
    %v3168 = vpack.c.b16 %v3156, %v3155
    %v3169 = vpack.c.b16 %v3158, %v3157
    %v3170 = vpack.c.b16 %v3160, %v3159
    %v3171 = vpack.c.b16 %v3162, %v3161
    %v3172 = vpack.c.b16 %v3164, %v3163
    %3181 = vmatpush.bf16.msra.mxu0 %v3172
    %3182 = vmatpush.bf16.msra.mxu0 %v3171
    %3183 = vmatpush.bf16.msra.mxu0 %v3170
    %3184 = vmatpush.bf16.msra.mxu0 %v3169
    %3185 = vmatpush.bf16.msra.mxu0 %v3168
    %3186 = vmatpush.bf16.msra.mxu0 %v3167
    %3187 = vmatpush.bf16.msra.mxu0 %v3166
    %3188 = vmatpush.bf16.msra.mxu0 %v3165
    %3189 = vmatmul.bf16.gmra.mxu0 %v3110
    %v3190 = vpop.f32.mrf.mxu0
    %v3191 = vadd.f32 %v3131, %v3190
    %v3192 = vpop.f32.mrf.mxu0
    %3193 = vdwg.mxu0
    %v3194 = vxor.u32 %v3191, 2147483648
    %v3195 = vmul.f32 %v3194, 1.442695
    %v3196 = vpow.pop %v3195
    %v3197 = vadd.f32 %v3196, 1.0
    %v3198 = vrcp.pop %v3197
    %v3199 = vmul.f32 %v3197, %v3198
    %v3200 = vsub.f32 1.0, %v3199
    %v3201 = vmul.f32 %v3198, %v3200
    %v3202 = vadd.f32 %v3198, %v3201
    %vm3203 = vweird.f32 %v3197
    %vm3204 = vweird.f32 %v3198
    %vm3205 = vmor %vm3203, %vm3204
    %v3206 = vsel %vm3205, %v3198, %v3202
    %v3207 = vand.u32 2147483647, %v3197
    %vm3208 = vcmp.eq.f32.partialorder %v3207, 8.507059e+37
    %v3209 = vand.u32 %v3197, 2147483648
    %v3210 = vor.u32 1.1754944e-38, %v3209
    %v3211 = vsel %vm3208, %v3210, %v3206
    %v3212 = vmul.f32 1.0, %v3211
    %v3213 = vmul.f32 %v3191, %v3212
    %v3214 = vld [vmem:[%s18] sm:$0x1]
    %v3216 = vperm.slane %v3214, 0
    %v3218 = vmul.f32 %v3213, %v3216
    %vm3219 = vcmask 1041408
    %v3220 = vsel %vm3219, %v3218, 0.0
    %3221 = vadd.xlane.f32.xlu0 %v3220
    %v3222 = vpop.xlane.xlu0 %3221
    %v3223 = vld [vmem:[#allocation3] sm:$0x1]
    %v3225 = vperm.slane %v3223, 0
    %v3227 = vadd.f32 %v3222, %v3225
    %vm3228 = vcmask 1024
    %3229 = vst.msk [vmem:[%s20] sm:$0x3] %vm3228, %v3227
    // Predicated region
    $region98: #{cloud_forward.1} parent=1 // pred_check
      _
    $region99: #{cloud_forward.1} parent=1 // pred_check_branch
      %3231 = sbr.rel (0) target = $region101
    $region100: #{cloud_forward.1} parent=1 // pred_region
      _
    $region101: #{cloud_forward.1} parent=1 // pred_fallthru
      _
    // Predicated region
    $region102: #{cloud_forward.1} parent=1 // pred_check
      _
    $region103: #{cloud_forward.1} parent=1 // pred_check_branch
      %3233 = sbr.rel (0) target = $region105
    $region104: #{cloud_forward.1} parent=1 // pred_region
      _
    $region105: #{cloud_forward.1} parent=1 // pred_fallthru
      _
    %3234 = vsyncpa [#allocation5], 1
    %3235 = vsyncpa [#allocation7], 1
    %3236 = vsyncpa [#allocation10], 1

</llo_original>
